<compile_context>
chip_gen: v6e
topology: v6e:2x2x1
jax: 0.10.0
libtpu: 0.0.40
codegen_flags: <defaults>
</compile_context>

<pallas_src>
import functools
import math

import jax
import jax.numpy as jnp
from jax import lax
from jax.experimental import pallas as pl
from jax.experimental.pallas import tpu as pltpu


def encoder_layer_kernel(
    x_ref,        # (1, T, D)  full input sequence for this batch element
    kmask_ref,    # (1, 1, T)  key-validity mask (1.0 = attend, 0.0 = masked)
    wq_ref, wk_ref, wv_ref, wo_ref,          # (D, D) each, compute_dtype
    w1_ref,       # (n_chunks, D, chunk)     fc1 weight, chunked over d_ff
    b1_ref,       # (n_chunks, 1, chunk)     fc1 bias   (f32)
    w2_ref,       # (n_chunks, chunk, D)     fc2 weight, chunked over d_ff
    b2_ref,       # (1, D)                   fc2 bias   (f32)
    g1_ref, be1_ref, g2_ref, be2_ref,        # (1, D) LayerNorm params (f32)
    o_ref,        # (1, q_tile, D) output tile
    k_scratch, v_scratch,                    # (T, D) compute_dtype, persist over q tiles
    *, num_heads: int, eps: float, q_tile: int, compute_dtype,
):
    qi = pl.program_id(1)
    T = x_ref.shape[1]
    D = x_ref.shape[2]
    head_dim = D // num_heads
    scale = 1.0 / math.sqrt(head_dim)

    # ---- K / V projections for the whole sequence: once per batch element. ------
    # q-tile axis is sequential ("arbitrary"), so qi == 0 runs first on this core
    # and the VMEM scratch persists for the remaining query tiles.
    @pl.when(qi == 0)
    def _():
        x_all = x_ref[0].astype(compute_dtype)                          # (T, D)
        k_scratch[...] = jnp.dot(
            x_all, wk_ref[...].astype(compute_dtype),
            preferred_element_type=jnp.float32).astype(compute_dtype)
        v_scratch[...] = jnp.dot(
            x_all, wv_ref[...].astype(compute_dtype),
            preferred_element_type=jnp.float32).astype(compute_dtype)

    # ---- Query tile --------------------------------------------------------------
    q_start = pl.multiple_of(qi * q_tile, q_tile)
    xq = x_ref[0, pl.ds(q_start, q_tile), :]                            # (q_tile, D)
    xq_f32 = xq.astype(jnp.float32)

    # Fold 1/sqrt(head_dim) into Q (cheaper than scaling every (q_tile, T) score tile).
    q = jnp.dot(xq.astype(compute_dtype), wq_ref[...].astype(compute_dtype),
                preferred_element_type=jnp.float32)
    q = (q * scale).astype(compute_dtype)                               # (q_tile, D)

    k = k_scratch[...]                                                  # (T, D)
    v = v_scratch[...]

    # Additive key mask: 0 where allowed, -1e30 where masked. Finite, so a fully
    # masked query row degrades to a uniform distribution instead of NaN.
    kmask = kmask_ref[0]                                                # (1, T)
    bias = jnp.where(kmask > 0.0, 0.0, -1e30).astype(jnp.float32)       # (1, T)

    wo = wo_ref[...].astype(compute_dtype)                              # (D, D)

    # ---- Multi-head attention ----------------------------------------------------
    # Scores via dot_general contracting the last dims (no XLU transpose); each head's
    # contribution goes straight through its Wo slice into a (q_tile, D) accumulator.
    attn_acc = jnp.zeros((q_tile, D), jnp.float32)
    contract_last = (((1,), (1,)), ((), ()))
    for h in range(num_heads):                                          # small, static
        lo = h * head_dim
        hi = lo + head_dim
        qh = q[:, lo:hi]                                                # (q_tile, hd)
        kh = k[:, lo:hi]                                                # (T, hd)
        vh = v[:, lo:hi]                                                # (T, hd)

        s = lax.dot_general(qh, kh, contract_last,
                            preferred_element_type=jnp.float32)         # (q_tile, T)
        s = s + bias
        m = jnp.max(s, axis=-1, keepdims=True)
        e = jnp.exp(s - m)
        denom = jnp.sum(e, axis=-1, keepdims=True)
        p = e * pl.reciprocal(denom, approx=True)                       # EUP, frees VALU
        ctx_h = jnp.dot(p.astype(compute_dtype), vh,
                        preferred_element_type=jnp.float32)             # (q_tile, hd)
        attn_acc = attn_acc + jnp.dot(
            ctx_h.astype(compute_dtype), wo[lo:hi, :],
            preferred_element_type=jnp.float32)                         # (q_tile, D)

    # ---- Add & Norm 1 (f32) --------------------------------------------------------
    y = xq_f32 + attn_acc
    mu = jnp.mean(y, axis=-1, keepdims=True)
    yc = y - mu
    var = jnp.mean(yc * yc, axis=-1, keepdims=True)
    y = yc * lax.rsqrt(var + eps)
    y = y * g1_ref[...] + be1_ref[...]                                  # (q_tile, D)
    y_c = y.astype(compute_dtype)

    # ---- Position-wise FFN, chunked over d_ff --------------------------------------
    n_chunks = w1_ref.shape[0]

    def ffn_body(c, acc):
        w1c = w1_ref[c].astype(compute_dtype)                           # (D, chunk)
        b1c = b1_ref[c]                                                 # (1, chunk)
        h1 = jnp.dot(y_c, w1c, preferred_element_type=jnp.float32) + b1c
        h1 = jnp.maximum(h1, 0.0).astype(compute_dtype)                 # ReLU
        w2c = w2_ref[c].astype(compute_dtype)                           # (chunk, D)
        return acc + jnp.dot(h1, w2c, preferred_element_type=jnp.float32)

    ff = lax.fori_loop(0, n_chunks, ffn_body,
                       jnp.zeros((q_tile, D), jnp.float32), unroll=True)
    ff = ff + b2_ref[...]                                               # (q_tile, D)

    # ---- Add & Norm 2 (f32) ---------------------------------------------------------
    z = y + ff
    mu2 = jnp.mean(z, axis=-1, keepdims=True)
    zc = z - mu2
    var2 = jnp.mean(zc * zc, axis=-1, keepdims=True)
    z = zc * lax.rsqrt(var2 + eps)
    z = z * g2_ref[...] + be2_ref[...]

    o_ref[0] = z.astype(o_ref.dtype)


def encoder_layer(
    x, key_mask, params, *, num_heads: int, eps: float = 1e-5,
    q_tile=None, ffn_chunk=None, compute_dtype=jnp.float32,
    vmem_limit_bytes: int = 48 * 1024 * 1024,
):
    """Fused Transformer encoder layer.

    x:        (B, T, D) activations.
    key_mask: (B, T) key-validity vector (1.0 = attend, 0.0 = masked) — standard
              src padding mask broadcast over heads / query positions.
    """
    B, T, D = x.shape
    d_ff = params["w1"].shape[1]
    assert D % num_heads == 0

    # Tile sizes: 256-multiples feed the v6e/v7x 256x256 MXU; use 128 on v5e.
    if q_tile is None:
        q_tile = min(T, 256)
    if ffn_chunk is None:
        ffn_chunk = min(d_ff, 512)
    assert T % q_tile == 0, "T must be a multiple of q_tile"
    assert q_tile == T or q_tile % 8 == 0, "q_tile must be a multiple of 8"
    assert d_ff % ffn_chunk == 0, "d_ff must be a multiple of ffn_chunk"

    cd = compute_dtype
    # Matmul operands in compute_dtype (bf16 halves weight HBM / VMEM traffic);
    # biases / LayerNorm params and all softmax / LN math stay in f32.
    wq, wk, wv, wo = (params[n].astype(cd) for n in ("wq", "wk", "wv", "wo"))
    n_chunks = d_ff // ffn_chunk
    w1r = params["w1"].astype(cd).reshape(D, n_chunks, ffn_chunk).transpose(1, 0, 2)
    w2r = params["w2"].astype(cd).reshape(n_chunks, ffn_chunk, D)
    b1r = params["b1"].astype(jnp.float32).reshape(n_chunks, 1, ffn_chunk)
    b2 = params["b2"].astype(jnp.float32)
    g1, be1 = params["g1"].astype(jnp.float32), params["be1"].astype(jnp.float32)
    g2, be2 = params["g2"].astype(jnp.float32), params["be2"].astype(jnp.float32)
    kmask3 = key_mask.astype(jnp.float32).reshape(B, 1, T)

    num_q_tiles = T // q_tile

    def const_spec(shape):
        # Constant index map: block is fetched once and kept resident.
        return pl.BlockSpec(shape, lambda b, qi: (0,) * len(shape))

    kernel = functools.partial(
        encoder_layer_kernel, num_heads=num_heads, eps=eps,
        q_tile=q_tile, compute_dtype=cd)

    itemsize = jnp.dtype(cd).itemsize
    cost = pl.CostEstimate(
        flops=int(B * (8 * T * D * D + 4 * T * T * D + 4 * T * D * d_ff)),
        transcendentals=int(B * num_heads * T * T),
        bytes_accessed=int((4 * D * D + 2 * D * d_ff) * itemsize
                           + 2 * B * T * D * 4 + B * T * 4),
    )

    return pl.pallas_call(
        kernel,
        out_shape=jax.ShapeDtypeStruct((B, T, D), x.dtype),
        grid_spec=pltpu.PrefetchScalarGridSpec(
            num_scalar_prefetch=0,
            grid=(B, num_q_tiles),
            in_specs=[
                pl.BlockSpec((1, T, D), lambda b, qi: (b, 0, 0)),   # x (full sequence)
                pl.BlockSpec((1, 1, T), lambda b, qi: (b, 0, 0)),   # key mask
                const_spec((D, D)),                    # Wq
                const_spec((D, D)),                    # Wk
                const_spec((D, D)),                    # Wv
                const_spec((D, D)),                    # Wo
                const_spec((n_chunks, D, ffn_chunk)),  # W1 (chunked)
                const_spec((n_chunks, 1, ffn_chunk)),  # b1 (chunked)
                const_spec((n_chunks, ffn_chunk, D)),  # W2 (chunked)
                const_spec((1, D)),                    # b2
                const_spec((1, D)),                    # gamma1
                const_spec((1, D)),                    # beta1
                const_spec((1, D)),                    # gamma2
                const_spec((1, D)),                    # beta2
            ],
            out_specs=pl.BlockSpec((1, q_tile, D), lambda b, qi: (b, qi, 0)),
            scratch_shapes=[
                pltpu.VMEM((T, D), cd),   # K for current batch element
                pltpu.VMEM((T, D), cd),   # V for current batch element
            ],
        ),
        compiler_params=pltpu.CompilerParams(
            # Batch axis over TensorCores; query-tile axis must stay sequential so the
            # K/V scratch written at qi == 0 can be reused by later q tiles.
            dimension_semantics=("parallel", "arbitrary"),
            vmem_limit_bytes=vmem_limit_bytes,
        ),
        cost_estimate=cost,
    )(x, kmask3, wq, wk, wv, wo, w1r, b1r, w2r, b2, g1, be1, g2, be2)


def reference_encoder_layer(x, key_mask, params, *, num_heads, eps=1e-5,
                            compute_dtype=jnp.float32):
    """Pure-JAX reference mirroring the PyTorch forward (eval mode), with the same
    compute-dtype casts and f32 accumulation as the kernel."""
    B, T, D = x.shape
    hd = D // num_heads
    scale = 1.0 / math.sqrt(hd)
    cd = compute_dtype
    f32 = jnp.float32

    wq, wk, wv, wo = (params[n].astype(cd) for n in ("wq", "wk", "wv", "wo"))
    w1, w2 = params["w1"].astype(cd), params["w2"].astype(cd)

    xc = x.astype(cd)
    q = (jnp.einsum("btd,de->bte", xc, wq, preferred_element_type=f32) * scale).astype(cd)
    k = jnp.einsum("btd,de->bte", xc, wk, preferred_element_type=f32).astype(cd)
    v = jnp.einsum("btd,de->bte", xc, wv, preferred_element_type=f32).astype(cd)

    qh = q.reshape(B, T, num_heads, hd)
    kh = k.reshape(B, T, num_heads, hd)
    vh = v.reshape(B, T, num_heads, hd)

    s = jnp.einsum("bqhd,bkhd->bhqk", qh, kh, preferred_element_type=f32)
    bias = jnp.where(key_mask > 0.0, 0.0, -1e30).astype(f32)[:, None, None, :]
    s = s + bias
    p = jax.nn.softmax(s, axis=-1)
    ctx = jnp.einsum("bhqk,bkhd->bqhd", p.astype(cd), vh,
                     preferred_element_type=f32).reshape(B, T, D)
    attn_out = jnp.einsum("btd,de->bte", ctx.astype(cd), wo, preferred_element_type=f32)

    def ln(t, g, b):
        mu = jnp.mean(t, axis=-1, keepdims=True)
        tc = t - mu
        var = jnp.mean(tc * tc, axis=-1, keepdims=True)
        return tc * lax.rsqrt(var + eps) * g + b

    y = ln(x.astype(f32) + attn_out, params["g1"], params["be1"])
    h1 = jnp.einsum("btd,df->btf", y.astype(cd), w1,
                    preferred_element_type=f32) + params["b1"]
    h1 = jnp.maximum(h1, 0.0).astype(cd)
    ff = jnp.einsum("btf,fd->btd", h1, w2, preferred_element_type=f32) + params["b2"]
    return ln(y + ff, params["g2"], params["be2"])


if __name__ == "__main__":
    # Small but TPU-friendly shapes: D a multiple of 128 (lane-dense output tiles),
    # T a multiple of the query tile, multiple q tiles + multiple d_ff chunks exercised.
    B, T, D, H, DFF = 2, 128, 128, 4, 256
    TQ, FCHUNK = 64, 128

    key = jax.random.PRNGKey(0)
    ks = jax.random.split(key, 9)

    def init(k, shape, fan_in):
        bound = 1.0 / math.sqrt(fan_in)
        return jax.random.uniform(k, shape, jnp.float32, -bound, bound)

    params = {
        "wq": init(ks[0], (D, D), D),
        "wk": init(ks[1], (D, D), D),
        "wv": init(ks[2], (D, D), D),
        "wo": init(ks[3], (D, D), D),
        "w1": init(ks[4], (D, DFF), D),
        "b1": init(ks[5], (1, DFF), D),
        "w2": init(ks[6], (DFF, D), DFF),
        "b2": init(ks[7], (1, D), DFF),
        "g1": jnp.ones((1, D), jnp.float32),
        "be1": jnp.zeros((1, D), jnp.float32),
        "g2": jnp.ones((1, D), jnp.float32),
        "be2": jnp.zeros((1, D), jnp.float32),
    }

    x = jax.random.normal(ks[8], (B, T, D), jnp.float32)

    # Key-padding mask: 1 = attend. Batch 1 masks out the last 32 key positions.
    key_mask = jnp.ones((B, T), jnp.float32)
    key_mask = key_mask.at[1, T - 32:].set(0.0)

    # --- f32 compute path ---------------------------------------------------------
    out = encoder_layer(x, key_mask, params, num_heads=H,
                        q_tile=TQ, ffn_chunk=FCHUNK, compute_dtype=jnp.float32)
    out = jax.block_until_ready(out)
    ref = reference_encoder_layer(x, key_mask, params, num_heads=H,
                                  compute_dtype=jnp.float32)
    assert out.shape == (B, T, D)
    assert bool(jnp.all(jnp.isfinite(out)))
    assert jnp.allclose(out, ref, atol=1e-2, rtol=1e-2), "f32 mismatch vs JAX reference"

    # --- bf16 compute path (weights / matmul inputs bf16, f32 accumulation) --------
    out_bf16 = encoder_layer(x, key_mask, params, num_heads=H,
                             q_tile=TQ, ffn_chunk=FCHUNK, compute_dtype=jnp.bfloat16)
    out_bf16 = jax.block_until_ready(out_bf16)
    ref_bf16 = reference_encoder_layer(x, key_mask, params, num_heads=H,
                                       compute_dtype=jnp.bfloat16)
    assert bool(jnp.all(jnp.isfinite(out_bf16)))
    assert jnp.allclose(out_bf16, ref_bf16, atol=3e-2, rtol=3e-2), \
        "bf16 mismatch vs JAX reference"

    print("KERNEL_OK")
</pallas_src>

<mosaic_0001>
module attributes {stable_mosaic.version = 11 : i64} {
  func.func @encoder_layer_kernel(%arg0: i32, %arg1: i32, %arg2: memref<1x128x128xf32, #tpu.memory_space<vmem>>, %arg3: memref<1x1x128xf32, #tpu.memory_space<vmem>>, %arg4: memref<128x128xf32, #tpu.memory_space<vmem>>, %arg5: memref<128x128xf32, #tpu.memory_space<vmem>>, %arg6: memref<128x128xf32, #tpu.memory_space<vmem>>, %arg7: memref<128x128xf32, #tpu.memory_space<vmem>>, %arg8: memref<2x128x128xf32, #tpu.memory_space<vmem>>, %arg9: memref<2x1x128xf32, #tpu.memory_space<vmem>>, %arg10: memref<2x128x128xf32, #tpu.memory_space<vmem>>, %arg11: memref<1x128xf32, #tpu.memory_space<vmem>>, %arg12: memref<1x128xf32, #tpu.memory_space<vmem>>, %arg13: memref<1x128xf32, #tpu.memory_space<vmem>>, %arg14: memref<1x128xf32, #tpu.memory_space<vmem>>, %arg15: memref<1x128xf32, #tpu.memory_space<vmem>>, %arg16: memref<1x64x128xf32, #tpu.memory_space<vmem>>, %arg17: memref<128x128xf32, #tpu.memory_space<vmem>>, %arg18: memref<128x128xf32, #tpu.memory_space<vmem>>) attributes {dimension_semantics = [#tpu.dimension_semantics<parallel>, #tpu.dimension_semantics<arbitrary>], iteration_bounds = array<i64: 2, 2>, scalar_prefetch = 0 : i64, scratch_operands = 2 : i64, tpu.core_type = #tpu.core_type<tc>, window_params = [{transform_indices = @transform_0, window_bounds = array<i64: 1, 128, 128>}, {transform_indices = @transform_1, window_bounds = array<i64: 1, 1, 128>}, {pipeline_mode = #tpu.pipeline_mode<synchronous>, transform_indices = @transform_2, window_bounds = array<i64: 128, 128>}, {pipeline_mode = #tpu.pipeline_mode<synchronous>, transform_indices = @transform_3, window_bounds = array<i64: 128, 128>}, {pipeline_mode = #tpu.pipeline_mode<synchronous>, transform_indices = @transform_4, window_bounds = array<i64: 128, 128>}, {pipeline_mode = #tpu.pipeline_mode<synchronous>, transform_indices = @transform_5, window_bounds = array<i64: 128, 128>}, {pipeline_mode = #tpu.pipeline_mode<synchronous>, transform_indices = @transform_6, window_bounds = array<i64: 2, 128, 128>}, {pipeline_mode = #tpu.pipeline_mode<synchronous>, transform_indices = @transform_7, window_bounds = array<i64: 2, 1, 128>}, {pipeline_mode = #tpu.pipeline_mode<synchronous>, transform_indices = @transform_8, window_bounds = array<i64: 2, 128, 128>}, {pipeline_mode = #tpu.pipeline_mode<synchronous>, transform_indices = @transform_9, window_bounds = array<i64: 1, 128>}, {pipeline_mode = #tpu.pipeline_mode<synchronous>, transform_indices = @transform_10, window_bounds = array<i64: 1, 128>}, {pipeline_mode = #tpu.pipeline_mode<synchronous>, transform_indices = @transform_11, window_bounds = array<i64: 1, 128>}, {pipeline_mode = #tpu.pipeline_mode<synchronous>, transform_indices = @transform_12, window_bounds = array<i64: 1, 128>}, {pipeline_mode = #tpu.pipeline_mode<synchronous>, transform_indices = @transform_13, window_bounds = array<i64: 1, 128>}, {transform_indices = @transform_14, window_bounds = array<i64: 1, 64, 128>}]} {
    %c0_i32 = arith.constant 0 : i32
    %0 = arith.cmpi eq, %arg1, %c0_i32 : i32
    %1 = arith.extui %0 : i1 to i32
    %c0_i32_0 = arith.constant 0 : i32
    %2 = arith.cmpi ne, %1, %c0_i32_0 : i32
    scf.if %2 {
      %c0_81 = arith.constant 0 : index
      %c0_82 = arith.constant 0 : index
      %c0_83 = arith.constant 0 : index
      %188 = vector.load %arg2[%c0_81, %c0_82, %c0_83] : memref<1x128x128xf32, #tpu.memory_space<vmem>>, vector<1x128x128xf32>
      %189 = vector.shape_cast %188 : vector<1x128x128xf32> to vector<128x128xf32>
      %c0_84 = arith.constant 0 : index
      %c0_85 = arith.constant 0 : index
      %190 = vector.load %arg5[%c0_84, %c0_85] : memref<128x128xf32, #tpu.memory_space<vmem>>, vector<128x128xf32>
      %cst_86 = arith.constant dense<0.000000e+00> : vector<128x128xf32>
      %191 = tpu.matmul %189, %190, %cst_86 {dimension_numbers = #tpu.dot_dimension_numbers<[1], [0], [0], [1], [0, 0, 1, 1], [], []>} : vector<128x128xf32>, vector<128x128xf32>, vector<128x128xf32> -> vector<128x128xf32>
      %c0_87 = arith.constant 0 : index
      %c0_88 = arith.constant 0 : index
      %192 = vector.load %arg17[%c0_87, %c0_88] : memref<128x128xf32, #tpu.memory_space<vmem>>, vector<128x128xf32>
      tpu.vector_store %arg17[%c0_87, %c0_88], %191 {strides = array<i32>} : memref<128x128xf32, #tpu.memory_space<vmem>>, vector<128x128xf32>,
      %c0_89 = arith.constant 0 : index
      %c0_90 = arith.constant 0 : index
      %193 = vector.load %arg6[%c0_89, %c0_90] : memref<128x128xf32, #tpu.memory_space<vmem>>, vector<128x128xf32>
      %cst_91 = arith.constant dense<0.000000e+00> : vector<128x128xf32>
      %194 = tpu.matmul %189, %193, %cst_91 {dimension_numbers = #tpu.dot_dimension_numbers<[1], [0], [0], [1], [0, 0, 1, 1], [], []>} : vector<128x128xf32>, vector<128x128xf32>, vector<128x128xf32> -> vector<128x128xf32>
      %c0_92 = arith.constant 0 : index
      %c0_93 = arith.constant 0 : index
      %195 = vector.load %arg18[%c0_92, %c0_93] : memref<128x128xf32, #tpu.memory_space<vmem>>, vector<128x128xf32>
      tpu.vector_store %arg18[%c0_92, %c0_93], %194 {strides = array<i32>} : memref<128x128xf32, #tpu.memory_space<vmem>>, vector<128x128xf32>,
    } else {
    }
    %c64_i32 = arith.constant 64 : i32
    %3 = arith.muli %arg1, %c64_i32 : i32
    %4 = tpu.assume_multiple %3, 64 : i32
    %c0 = arith.constant 0 : index
    %5 = arith.index_cast %4 : i32 to index
    %c0_1 = arith.constant 0 : index
    %6 = vector.load %arg2[%c0, %5, %c0_1] : memref<1x128x128xf32, #tpu.memory_space<vmem>>, vector<1x64x128xf32>
    %7 = vector.shape_cast %6 : vector<1x64x128xf32> to vector<64x128xf32>
    %c0_2 = arith.constant 0 : index
    %c0_3 = arith.constant 0 : index
    %8 = vector.load %arg4[%c0_2, %c0_3] : memref<128x128xf32, #tpu.memory_space<vmem>>, vector<128x128xf32>
    %cst = arith.constant dense<0.000000e+00> : vector<64x128xf32>
    %9 = tpu.matmul %7, %8, %cst {dimension_numbers = #tpu.dot_dimension_numbers<[1], [0], [0], [1], [0, 0, 1, 1], [], []>} : vector<64x128xf32>, vector<128x128xf32>, vector<64x128xf32> -> vector<64x128xf32>
    %cst_4 = arith.constant 0.176776692 : f32
    %10 = vector.broadcast %cst_4 : f32 to vector<64x128xf32>
    %11 = arith.mulf %9, %10 : vector<64x128xf32>
    %c0_5 = arith.constant 0 : index
    %c0_6 = arith.constant 0 : index
    %12 = vector.load %arg17[%c0_5, %c0_6] : memref<128x128xf32, #tpu.memory_space<vmem>>, vector<128x128xf32>
    %c0_7 = arith.constant 0 : index
    %c0_8 = arith.constant 0 : index
    %13 = vector.load %arg18[%c0_7, %c0_8] : memref<128x128xf32, #tpu.memory_space<vmem>>, vector<128x128xf32>
    %c0_9 = arith.constant 0 : index
    %c0_10 = arith.constant 0 : index
    %c0_11 = arith.constant 0 : index
    %14 = vector.load %arg3[%c0_9, %c0_10, %c0_11] : memref<1x1x128xf32, #tpu.memory_space<vmem>>, vector<1x1x128xf32>
    %15 = vector.shape_cast %14 : vector<1x1x128xf32> to vector<1x128xf32>
    %cst_12 = arith.constant 0.000000e+00 : f32
    %16 = vector.broadcast %cst_12 : f32 to vector<1x128xf32>
    %17 = arith.cmpf ogt, %15, %16 : vector<1x128xf32>
    %cst_13 = arith.constant 0.000000e+00 : f32
    %cst_14 = arith.constant -1.000000e+30 : f32
    %18 = vector.broadcast %cst_13 : f32 to vector<1x128xf32>
    %19 = vector.broadcast %cst_14 : f32 to vector<1x128xf32>
    %20 = arith.select %17, %18, %19 : vector<1x128xi1>, vector<1x128xf32>
    %c0_15 = arith.constant 0 : index
    %c0_16 = arith.constant 0 : index
    %21 = vector.load %arg7[%c0_15, %c0_16] : memref<128x128xf32, #tpu.memory_space<vmem>>, vector<128x128xf32>
    %cst_17 = arith.constant 0.000000e+00 : f32
    %22 = vector.broadcast %cst_17 : f32 to vector<64x128xf32>
    %23 = vector.extract_strided_slice %11 {offsets = [0, 0], sizes = [64, 32], strides = [1, 1]} : vector<64x128xf32> to vector<64x32xf32>
    %24 = vector.extract_strided_slice %12 {offsets = [0, 0], sizes = [128, 32], strides = [1, 1]} : vector<128x128xf32> to vector<128x32xf32>
    %25 = vector.extract_strided_slice %13 {offsets = [0, 0], sizes = [128, 32], strides = [1, 1]} : vector<128x128xf32> to vector<128x32xf32>
    %cst_18 = arith.constant dense<0.000000e+00> : vector<64x128xf32>
    %26 = tpu.matmul %23, %24, %cst_18 {dimension_numbers = #tpu.dot_dimension_numbers<[1], [1], [0], [0], [0, 0, 1, 0], [], []>} : vector<64x32xf32>, vector<128x32xf32>, vector<64x128xf32> -> vector<64x128xf32>
    %27 = vector.broadcast %20 : vector<1x128xf32> to vector<64x128xf32>
    %28 = arith.addf %26, %27 : vector<64x128xf32>
    %cst_19 = arith.constant dense<0xFF800000> : vector<64xf32>
    %29 = vector.multi_reduction <maximumf>, %28, %cst_19 [1] : vector<64x128xf32> to vector<64xf32>
    %30 = vector.shape_cast %29 : vector<64xf32> to vector<64x1xf32>
    %31 = vector.broadcast %30 : vector<64x1xf32> to vector<64x128xf32>
    %32 = arith.subf %28, %31 : vector<64x128xf32>
    %33 = math.exp %32 : vector<64x128xf32>
    %cst_20 = arith.constant dense<0.000000e+00> : vector<64xf32>
    %34 = vector.multi_reduction <add>, %33, %cst_20 [1] : vector<64x128xf32> to vector<64xf32>
    %35 = vector.shape_cast %34 : vector<64xf32> to vector<64x1xf32>
    %36 = tpu.reciprocal %35 {approx = true} : vector<64x1xf32> -> vector<64x1xf32>
    %37 = vector.broadcast %36 : vector<64x1xf32> to vector<64x128xf32>
    %38 = arith.mulf %33, %37 : vector<64x128xf32>
    %cst_21 = arith.constant dense<0.000000e+00> : vector<64x32xf32>
    %39 = tpu.matmul %38, %25, %cst_21 {dimension_numbers = #tpu.dot_dimension_numbers<[1], [0], [0], [1], [0, 0, 1, 1], [], []>} : vector<64x128xf32>, vector<128x32xf32>, vector<64x32xf32> -> vector<64x32xf32>
    %40 = vector.extract_strided_slice %21 {offsets = [0, 0], sizes = [32, 128], strides = [1, 1]} : vector<128x128xf32> to vector<32x128xf32>
    %cst_22 = arith.constant dense<0.000000e+00> : vector<64x128xf32>
    %41 = tpu.matmul %39, %40, %cst_22 {dimension_numbers = #tpu.dot_dimension_numbers<[1], [0], [0], [1], [0, 0, 1, 1], [], []>} : vector<64x32xf32>, vector<32x128xf32>, vector<64x128xf32> -> vector<64x128xf32>
    %42 = arith.addf %22, %41 : vector<64x128xf32>
    %43 = vector.extract_strided_slice %11 {offsets = [0, 32], sizes = [64, 32], strides = [1, 1]} : vector<64x128xf32> to vector<64x32xf32>
    %44 = vector.extract_strided_slice %12 {offsets = [0, 32], sizes = [128, 32], strides = [1, 1]} : vector<128x128xf32> to vector<128x32xf32>
    %45 = vector.extract_strided_slice %13 {offsets = [0, 32], sizes = [128, 32], strides = [1, 1]} : vector<128x128xf32> to vector<128x32xf32>
    %cst_23 = arith.constant dense<0.000000e+00> : vector<64x128xf32>
    %46 = tpu.matmul %43, %44, %cst_23 {dimension_numbers = #tpu.dot_dimension_numbers<[1], [1], [0], [0], [0, 0, 1, 0], [], []>} : vector<64x32xf32>, vector<128x32xf32>, vector<64x128xf32> -> vector<64x128xf32>
    %47 = vector.broadcast %20 : vector<1x128xf32> to vector<64x128xf32>
    %48 = arith.addf %46, %47 : vector<64x128xf32>
    %cst_24 = arith.constant dense<0xFF800000> : vector<64xf32>
    %49 = vector.multi_reduction <maximumf>, %48, %cst_24 [1] : vector<64x128xf32> to vector<64xf32>
    %50 = vector.shape_cast %49 : vector<64xf32> to vector<64x1xf32>
    %51 = vector.broadcast %50 : vector<64x1xf32> to vector<64x128xf32>
    %52 = arith.subf %48, %51 : vector<64x128xf32>
    %53 = math.exp %52 : vector<64x128xf32>
    %cst_25 = arith.constant dense<0.000000e+00> : vector<64xf32>
    %54 = vector.multi_reduction <add>, %53, %cst_25 [1] : vector<64x128xf32> to vector<64xf32>
    %55 = vector.shape_cast %54 : vector<64xf32> to vector<64x1xf32>
    %56 = tpu.reciprocal %55 {approx = true} : vector<64x1xf32> -> vector<64x1xf32>
    %57 = vector.broadcast %56 : vector<64x1xf32> to vector<64x128xf32>
    %58 = arith.mulf %53, %57 : vector<64x128xf32>
    %cst_26 = arith.constant dense<0.000000e+00> : vector<64x32xf32>
    %59 = tpu.matmul %58, %45, %cst_26 {dimension_numbers = #tpu.dot_dimension_numbers<[1], [0], [0], [1], [0, 0, 1, 1], [], []>} : vector<64x128xf32>, vector<128x32xf32>, vector<64x32xf32> -> vector<64x32xf32>
    %60 = vector.extract_strided_slice %21 {offsets = [32, 0], sizes = [32, 128], strides = [1, 1]} : vector<128x128xf32> to vector<32x128xf32>
    %cst_27 = arith.constant dense<0.000000e+00> : vector<64x128xf32>
    %61 = tpu.matmul %59, %60, %cst_27 {dimension_numbers = #tpu.dot_dimension_numbers<[1], [0], [0], [1], [0, 0, 1, 1], [], []>} : vector<64x32xf32>, vector<32x128xf32>, vector<64x128xf32> -> vector<64x128xf32>
    %62 = arith.addf %42, %61 : vector<64x128xf32>
    %63 = vector.extract_strided_slice %11 {offsets = [0, 64], sizes = [64, 32], strides = [1, 1]} : vector<64x128xf32> to vector<64x32xf32>
    %64 = vector.extract_strided_slice %12 {offsets = [0, 64], sizes = [128, 32], strides = [1, 1]} : vector<128x128xf32> to vector<128x32xf32>
    %65 = vector.extract_strided_slice %13 {offsets = [0, 64], sizes = [128, 32], strides = [1, 1]} : vector<128x128xf32> to vector<128x32xf32>
    %cst_28 = arith.constant dense<0.000000e+00> : vector<64x128xf32>
    %66 = tpu.matmul %63, %64, %cst_28 {dimension_numbers = #tpu.dot_dimension_numbers<[1], [1], [0], [0], [0, 0, 1, 0], [], []>} : vector<64x32xf32>, vector<128x32xf32>, vector<64x128xf32> -> vector<64x128xf32>
    %67 = vector.broadcast %20 : vector<1x128xf32> to vector<64x128xf32>
    %68 = arith.addf %66, %67 : vector<64x128xf32>
    %cst_29 = arith.constant dense<0xFF800000> : vector<64xf32>
    %69 = vector.multi_reduction <maximumf>, %68, %cst_29 [1] : vector<64x128xf32> to vector<64xf32>
    %70 = vector.shape_cast %69 : vector<64xf32> to vector<64x1xf32>
    %71 = vector.broadcast %70 : vector<64x1xf32> to vector<64x128xf32>
    %72 = arith.subf %68, %71 : vector<64x128xf32>
    %73 = math.exp %72 : vector<64x128xf32>
    %cst_30 = arith.constant dense<0.000000e+00> : vector<64xf32>
    %74 = vector.multi_reduction <add>, %73, %cst_30 [1] : vector<64x128xf32> to vector<64xf32>
    %75 = vector.shape_cast %74 : vector<64xf32> to vector<64x1xf32>
    %76 = tpu.reciprocal %75 {approx = true} : vector<64x1xf32> -> vector<64x1xf32>
    %77 = vector.broadcast %76 : vector<64x1xf32> to vector<64x128xf32>
    %78 = arith.mulf %73, %77 : vector<64x128xf32>
    %cst_31 = arith.constant dense<0.000000e+00> : vector<64x32xf32>
    %79 = tpu.matmul %78, %65, %cst_31 {dimension_numbers = #tpu.dot_dimension_numbers<[1], [0], [0], [1], [0, 0, 1, 1], [], []>} : vector<64x128xf32>, vector<128x32xf32>, vector<64x32xf32> -> vector<64x32xf32>
    %80 = vector.extract_strided_slice %21 {offsets = [64, 0], sizes = [32, 128], strides = [1, 1]} : vector<128x128xf32> to vector<32x128xf32>
    %cst_32 = arith.constant dense<0.000000e+00> : vector<64x128xf32>
    %81 = tpu.matmul %79, %80, %cst_32 {dimension_numbers = #tpu.dot_dimension_numbers<[1], [0], [0], [1], [0, 0, 1, 1], [], []>} : vector<64x32xf32>, vector<32x128xf32>, vector<64x128xf32> -> vector<64x128xf32>
    %82 = arith.addf %62, %81 : vector<64x128xf32>
    %83 = vector.extract_strided_slice %11 {offsets = [0, 96], sizes = [64, 32], strides = [1, 1]} : vector<64x128xf32> to vector<64x32xf32>
    %84 = vector.extract_strided_slice %12 {offsets = [0, 96], sizes = [128, 32], strides = [1, 1]} : vector<128x128xf32> to vector<128x32xf32>
    %85 = vector.extract_strided_slice %13 {offsets = [0, 96], sizes = [128, 32], strides = [1, 1]} : vector<128x128xf32> to vector<128x32xf32>
    %cst_33 = arith.constant dense<0.000000e+00> : vector<64x128xf32>
    %86 = tpu.matmul %83, %84, %cst_33 {dimension_numbers = #tpu.dot_dimension_numbers<[1], [1], [0], [0], [0, 0, 1, 0], [], []>} : vector<64x32xf32>, vector<128x32xf32>, vector<64x128xf32> -> vector<64x128xf32>
    %87 = vector.broadcast %20 : vector<1x128xf32> to vector<64x128xf32>
    %88 = arith.addf %86, %87 : vector<64x128xf32>
    %cst_34 = arith.constant dense<0xFF800000> : vector<64xf32>
    %89 = vector.multi_reduction <maximumf>, %88, %cst_34 [1] : vector<64x128xf32> to vector<64xf32>
    %90 = vector.shape_cast %89 : vector<64xf32> to vector<64x1xf32>
    %91 = vector.broadcast %90 : vector<64x1xf32> to vector<64x128xf32>
    %92 = arith.subf %88, %91 : vector<64x128xf32>
    %93 = math.exp %92 : vector<64x128xf32>
    %cst_35 = arith.constant dense<0.000000e+00> : vector<64xf32>
    %94 = vector.multi_reduction <add>, %93, %cst_35 [1] : vector<64x128xf32> to vector<64xf32>
    %95 = vector.shape_cast %94 : vector<64xf32> to vector<64x1xf32>
    %96 = tpu.reciprocal %95 {approx = true} : vector<64x1xf32> -> vector<64x1xf32>
    %97 = vector.broadcast %96 : vector<64x1xf32> to vector<64x128xf32>
    %98 = arith.mulf %93, %97 : vector<64x128xf32>
    %cst_36 = arith.constant dense<0.000000e+00> : vector<64x32xf32>
    %99 = tpu.matmul %98, %85, %cst_36 {dimension_numbers = #tpu.dot_dimension_numbers<[1], [0], [0], [1], [0, 0, 1, 1], [], []>} : vector<64x128xf32>, vector<128x32xf32>, vector<64x32xf32> -> vector<64x32xf32>
    %100 = vector.extract_strided_slice %21 {offsets = [96, 0], sizes = [32, 128], strides = [1, 1]} : vector<128x128xf32> to vector<32x128xf32>
    %cst_37 = arith.constant dense<0.000000e+00> : vector<64x128xf32>
    %101 = tpu.matmul %99, %100, %cst_37 {dimension_numbers = #tpu.dot_dimension_numbers<[1], [0], [0], [1], [0, 0, 1, 1], [], []>} : vector<64x32xf32>, vector<32x128xf32>, vector<64x128xf32> -> vector<64x128xf32>
    %102 = arith.addf %82, %101 : vector<64x128xf32>
    %103 = arith.addf %7, %102 : vector<64x128xf32>
    %cst_38 = arith.constant dense<0.000000e+00> : vector<64xf32>
    %104 = vector.multi_reduction <add>, %103, %cst_38 [1] : vector<64x128xf32> to vector<64xf32>
    %105 = vector.shape_cast %104 : vector<64xf32> to vector<64x1xf32>
    %cst_39 = arith.constant 1.280000e+02 : f32
    %106 = vector.broadcast %cst_39 : f32 to vector<64x1xf32>
    %107 = arith.divf %105, %106 : vector<64x1xf32>
    %108 = vector.broadcast %107 : vector<64x1xf32> to vector<64x128xf32>
    %109 = arith.subf %103, %108 : vector<64x128xf32>
    %110 = arith.mulf %109, %109 : vector<64x128xf32>
    %cst_40 = arith.constant dense<0.000000e+00> : vector<64xf32>
    %111 = vector.multi_reduction <add>, %110, %cst_40 [1] : vector<64x128xf32> to vector<64xf32>
    %112 = vector.shape_cast %111 : vector<64xf32> to vector<64x1xf32>
    %cst_41 = arith.constant 1.280000e+02 : f32
    %113 = vector.broadcast %cst_41 : f32 to vector<64x1xf32>
    %114 = arith.divf %112, %113 : vector<64x1xf32>
    %cst_42 = arith.constant 9.99999974E-6 : f32
    %115 = vector.broadcast %cst_42 : f32 to vector<64x1xf32>
    %116 = arith.addf %114, %115 : vector<64x1xf32>
    %117 = math.rsqrt %116 : vector<64x1xf32>
    %118 = vector.broadcast %117 : vector<64x1xf32> to vector<64x128xf32>
    %119 = arith.mulf %109, %118 : vector<64x128xf32>
    %c0_43 = arith.constant 0 : index
    %c0_44 = arith.constant 0 : index
    %120 = vector.load %arg12[%c0_43, %c0_44] : memref<1x128xf32, #tpu.memory_space<vmem>>, vector<1x128xf32>
    %121 = vector.broadcast %120 : vector<1x128xf32> to vector<64x128xf32>
    %122 = arith.mulf %119, %121 : vector<64x128xf32>
    %c0_45 = arith.constant 0 : index
    %c0_46 = arith.constant 0 : index
    %123 = vector.load %arg13[%c0_45, %c0_46] : memref<1x128xf32, #tpu.memory_space<vmem>>, vector<1x128xf32>
    %124 = vector.broadcast %123 : vector<1x128xf32> to vector<64x128xf32>
    %125 = arith.addf %122, %124 : vector<64x128xf32>
    %cst_47 = arith.constant 0.000000e+00 : f32
    %126 = vector.broadcast %cst_47 : f32 to vector<64x128xf32>
    %c0_i32_48 = arith.constant 0 : i32
    %127 = arith.index_cast %c0_i32_48 : i32 to index
    %c0_49 = arith.constant 0 : index
    %c0_50 = arith.constant 0 : index
    %128 = vector.load %arg8[%127, %c0_49, %c0_50] : memref<2x128x128xf32, #tpu.memory_space<vmem>>, vector<1x128x128xf32>
    %129 = vector.shape_cast %128 : vector<1x128x128xf32> to vector<128x128xf32>
    %130 = arith.index_cast %c0_i32_48 : i32 to index
    %c0_51 = arith.constant 0 : index
    %c0_52 = arith.constant 0 : index
    %131 = vector.load %arg9[%130, %c0_51, %c0_52] : memref<2x1x128xf32, #tpu.memory_space<vmem>>, vector<1x1x128xf32>
    %132 = vector.shape_cast %131 : vector<1x1x128xf32> to vector<1x128xf32>
    %cst_53 = arith.constant dense<0.000000e+00> : vector<64x128xf32>
    %133 = tpu.matmul %125, %129, %cst_53 {dimension_numbers = #tpu.dot_dimension_numbers<[1], [0], [0], [1], [0, 0, 1, 1], [], []>} : vector<64x128xf32>, vector<128x128xf32>, vector<64x128xf32> -> vector<64x128xf32>
    %134 = vector.broadcast %132 : vector<1x128xf32> to vector<64x128xf32>
    %135 = arith.addf %133, %134 : vector<64x128xf32>
    %cst_54 = arith.constant 0.000000e+00 : f32
    %136 = vector.broadcast %cst_54 : f32 to vector<64x128xf32>
    %137 = arith.maximumf %135, %136 : vector<64x128xf32>
    %138 = arith.index_cast %c0_i32_48 : i32 to index
    %c0_55 = arith.constant 0 : index
    %c0_56 = arith.constant 0 : index
    %139 = vector.load %arg10[%138, %c0_55, %c0_56] : memref<2x128x128xf32, #tpu.memory_space<vmem>>, vector<1x128x128xf32>
    %140 = vector.shape_cast %139 : vector<1x128x128xf32> to vector<128x128xf32>
    %cst_57 = arith.constant dense<0.000000e+00> : vector<64x128xf32>
    %141 = tpu.matmul %137, %140, %cst_57 {dimension_numbers = #tpu.dot_dimension_numbers<[1], [0], [0], [1], [0, 0, 1, 1], [], []>} : vector<64x128xf32>, vector<128x128xf32>, vector<64x128xf32> -> vector<64x128xf32>
    %142 = arith.addf %126, %141 : vector<64x128xf32>
    %c1_i32 = arith.constant 1 : i32
    %143 = arith.index_cast %c1_i32 : i32 to index
    %c0_58 = arith.constant 0 : index
    %c0_59 = arith.constant 0 : index
    %144 = vector.load %arg8[%143, %c0_58, %c0_59] : memref<2x128x128xf32, #tpu.memory_space<vmem>>, vector<1x128x128xf32>
    %145 = vector.shape_cast %144 : vector<1x128x128xf32> to vector<128x128xf32>
    %146 = arith.index_cast %c1_i32 : i32 to index
    %c0_60 = arith.constant 0 : index
    %c0_61 = arith.constant 0 : index
    %147 = vector.load %arg9[%146, %c0_60, %c0_61] : memref<2x1x128xf32, #tpu.memory_space<vmem>>, vector<1x1x128xf32>
    %148 = vector.shape_cast %147 : vector<1x1x128xf32> to vector<1x128xf32>
    %cst_62 = arith.constant dense<0.000000e+00> : vector<64x128xf32>
    %149 = tpu.matmul %125, %145, %cst_62 {dimension_numbers = #tpu.dot_dimension_numbers<[1], [0], [0], [1], [0, 0, 1, 1], [], []>} : vector<64x128xf32>, vector<128x128xf32>, vector<64x128xf32> -> vector<64x128xf32>
    %150 = vector.broadcast %148 : vector<1x128xf32> to vector<64x128xf32>
    %151 = arith.addf %149, %150 : vector<64x128xf32>
    %cst_63 = arith.constant 0.000000e+00 : f32
    %152 = vector.broadcast %cst_63 : f32 to vector<64x128xf32>
    %153 = arith.maximumf %151, %152 : vector<64x128xf32>
    %154 = arith.index_cast %c1_i32 : i32 to index
    %c0_64 = arith.constant 0 : index
    %c0_65 = arith.constant 0 : index
    %155 = vector.load %arg10[%154, %c0_64, %c0_65] : memref<2x128x128xf32, #tpu.memory_space<vmem>>, vector<1x128x128xf32>
    %156 = vector.shape_cast %155 : vector<1x128x128xf32> to vector<128x128xf32>
    %cst_66 = arith.constant dense<0.000000e+00> : vector<64x128xf32>
    %157 = tpu.matmul %153, %156, %cst_66 {dimension_numbers = #tpu.dot_dimension_numbers<[1], [0], [0], [1], [0, 0, 1, 1], [], []>} : vector<64x128xf32>, vector<128x128xf32>, vector<64x128xf32> -> vector<64x128xf32>
    %158 = arith.addf %142, %157 : vector<64x128xf32>
    %c2_i32 = arith.constant 2 : i32
    %c0_67 = arith.constant 0 : index
    %c0_68 = arith.constant 0 : index
    %159 = vector.load %arg11[%c0_67, %c0_68] : memref<1x128xf32, #tpu.memory_space<vmem>>, vector<1x128xf32>
    %160 = vector.broadcast %159 : vector<1x128xf32> to vector<64x128xf32>
    %161 = arith.addf %158, %160 : vector<64x128xf32>
    %162 = arith.addf %125, %161 : vector<64x128xf32>
    %cst_69 = arith.constant dense<0.000000e+00> : vector<64xf32>
    %163 = vector.multi_reduction <add>, %162, %cst_69 [1] : vector<64x128xf32> to vector<64xf32>
    %164 = vector.shape_cast %163 : vector<64xf32> to vector<64x1xf32>
    %cst_70 = arith.constant 1.280000e+02 : f32
    %165 = vector.broadcast %cst_70 : f32 to vector<64x1xf32>
    %166 = arith.divf %164, %165 : vector<64x1xf32>
    %167 = vector.broadcast %166 : vector<64x1xf32> to vector<64x128xf32>
    %168 = arith.subf %162, %167 : vector<64x128xf32>
    %169 = arith.mulf %168, %168 : vector<64x128xf32>
    %cst_71 = arith.constant dense<0.000000e+00> : vector<64xf32>
    %170 = vector.multi_reduction <add>, %169, %cst_71 [1] : vector<64x128xf32> to vector<64xf32>
    %171 = vector.shape_cast %170 : vector<64xf32> to vector<64x1xf32>
    %cst_72 = arith.constant 1.280000e+02 : f32
    %172 = vector.broadcast %cst_72 : f32 to vector<64x1xf32>
    %173 = arith.divf %171, %172 : vector<64x1xf32>
    %cst_73 = arith.constant 9.99999974E-6 : f32
    %174 = vector.broadcast %cst_73 : f32 to vector<64x1xf32>
    %175 = arith.addf %173, %174 : vector<64x1xf32>
    %176 = math.rsqrt %175 : vector<64x1xf32>
    %177 = vector.broadcast %176 : vector<64x1xf32> to vector<64x128xf32>
    %178 = arith.mulf %168, %177 : vector<64x128xf32>
    %c0_74 = arith.constant 0 : index
    %c0_75 = arith.constant 0 : index
    %179 = vector.load %arg14[%c0_74, %c0_75] : memref<1x128xf32, #tpu.memory_space<vmem>>, vector<1x128xf32>
    %180 = vector.broadcast %179 : vector<1x128xf32> to vector<64x128xf32>
    %181 = arith.mulf %178, %180 : vector<64x128xf32>
    %c0_76 = arith.constant 0 : index
    %c0_77 = arith.constant 0 : index
    %182 = vector.load %arg15[%c0_76, %c0_77] : memref<1x128xf32, #tpu.memory_space<vmem>>, vector<1x128xf32>
    %183 = vector.broadcast %182 : vector<1x128xf32> to vector<64x128xf32>
    %184 = arith.addf %181, %183 : vector<64x128xf32>
    %c0_78 = arith.constant 0 : index
    %c0_79 = arith.constant 0 : index
    %c0_80 = arith.constant 0 : index
    %185 = vector.load %arg16[%c0_78, %c0_79, %c0_80] : memref<1x64x128xf32, #tpu.memory_space<vmem>>, vector<1x64x128xf32>
    %186 = vector.shape_cast %185 : vector<1x64x128xf32> to vector<64x128xf32>
    %187 = vector.shape_cast %184 : vector<64x128xf32> to vector<1x64x128xf32>
    tpu.vector_store %arg16[%c0_78, %c0_79, %c0_80], %187 {strides = array<i32>} : memref<1x64x128xf32, #tpu.memory_space<vmem>>, vector<1x64x128xf32>,
    return
  }
  func.func @transform_0(%arg0: i32, %arg1: i32) -> (i32, i32, i32) {
    %c0_i32 = arith.constant 0 : i32
    %c0_i32_0 = arith.constant 0 : i32
    %c0_i32_1 = arith.constant 0 : i32
    return %arg0, %c0_i32, %c0_i32_0 : i32, i32, i32
  }
  func.func @transform_1(%arg0: i32, %arg1: i32) -> (i32, i32, i32) {
    %c0_i32 = arith.constant 0 : i32
    %c0_i32_0 = arith.constant 0 : i32
    %c0_i32_1 = arith.constant 0 : i32
    return %arg0, %c0_i32, %c0_i32_0 : i32, i32, i32
  }
  func.func @transform_2(%arg0: i32, %arg1: i32) -> (i32, i32) {
    %c0_i32 = arith.constant 0 : i32
    %c0_i32_0 = arith.constant 0 : i32
    %c0_i32_1 = arith.constant 0 : i32
    return %c0_i32, %c0_i32_0 : i32, i32
  }
  func.func @transform_3(%arg0: i32, %arg1: i32) -> (i32, i32) {
    %c0_i32 = arith.constant 0 : i32
    %c0_i32_0 = arith.constant 0 : i32
    %c0_i32_1 = arith.constant 0 : i32
    return %c0_i32, %c0_i32_0 : i32, i32
  }
  func.func @transform_4(%arg0: i32, %arg1: i32) -> (i32, i32) {
    %c0_i32 = arith.constant 0 : i32
    %c0_i32_0 = arith.constant 0 : i32
    %c0_i32_1 = arith.constant 0 : i32
    return %c0_i32, %c0_i32_0 : i32, i32
  }
  func.func @transform_5(%arg0: i32, %arg1: i32) -> (i32, i32) {
    %c0_i32 = arith.constant 0 : i32
    %c0_i32_0 = arith.constant 0 : i32
    %c0_i32_1 = arith.constant 0 : i32
    return %c0_i32, %c0_i32_0 : i32, i32
  }
  func.func @transform_6(%arg0: i32, %arg1: i32) -> (i32, i32, i32) {
    %c0_i32 = arith.constant 0 : i32
    %c0_i32_0 = arith.constant 0 : i32
    %c0_i32_1 = arith.constant 0 : i32
    %c0_i32_2 = arith.constant 0 : i32
    return %c0_i32, %c0_i32_0, %c0_i32_1 : i32, i32, i32
  }
  func.func @transform_7(%arg0: i32, %arg1: i32) -> (i32, i32, i32) {
    %c0_i32 = arith.constant 0 : i32
    %c0_i32_0 = arith.constant 0 : i32
    %c0_i32_1 = arith.constant 0 : i32
    %c0_i32_2 = arith.constant 0 : i32
    return %c0_i32, %c0_i32_0, %c0_i32_1 : i32, i32, i32
  }
  func.func @transform_8(%arg0: i32, %arg1: i32) -> (i32, i32, i32) {
    %c0_i32 = arith.constant 0 : i32
    %c0_i32_0 = arith.constant 0 : i32
    %c0_i32_1 = arith.constant 0 : i32
    %c0_i32_2 = arith.constant 0 : i32
    return %c0_i32, %c0_i32_0, %c0_i32_1 : i32, i32, i32
  }
  func.func @transform_9(%arg0: i32, %arg1: i32) -> (i32, i32) {
    %c0_i32 = arith.constant 0 : i32
    %c0_i32_0 = arith.constant 0 : i32
    %c0_i32_1 = arith.constant 0 : i32
    return %c0_i32, %c0_i32_0 : i32, i32
  }
  func.func @transform_10(%arg0: i32, %arg1: i32) -> (i32, i32) {
    %c0_i32 = arith.constant 0 : i32
    %c0_i32_0 = arith.constant 0 : i32
    %c0_i32_1 = arith.constant 0 : i32
    return %c0_i32, %c0_i32_0 : i32, i32
  }
  func.func @transform_11(%arg0: i32, %arg1: i32) -> (i32, i32) {
    %c0_i32 = arith.constant 0 : i32
    %c0_i32_0 = arith.constant 0 : i32
    %c0_i32_1 = arith.constant 0 : i32
    return %c0_i32, %c0_i32_0 : i32, i32
  }
  func.func @transform_12(%arg0: i32, %arg1: i32) -> (i32, i32) {
    %c0_i32 = arith.constant 0 : i32
    %c0_i32_0 = arith.constant 0 : i32
    %c0_i32_1 = arith.constant 0 : i32
    return %c0_i32, %c0_i32_0 : i32, i32
  }
  func.func @transform_13(%arg0: i32, %arg1: i32) -> (i32, i32) {
    %c0_i32 = arith.constant 0 : i32
    %c0_i32_0 = arith.constant 0 : i32
    %c0_i32_1 = arith.constant 0 : i32
    return %c0_i32, %c0_i32_0 : i32, i32
  }
  func.func @transform_14(%arg0: i32, %arg1: i32) -> (i32, i32, i32) {
    %c0_i32 = arith.constant 0 : i32
    %c0_i32_0 = arith.constant 0 : i32
    return %arg0, %arg1, %c0_i32 : i32, i32, i32
  }
}

</mosaic_0001>

<llo_original>
// kernel: tpu_custom_call.1
$region0: #{tpu_custom_call.1}
  #allocation0 [shape = 'u32[]', space=smem, size = 0x4, offset = 0x4, fixed_abs, tag = 'smem constant byte address 0x4 - core index']
  #allocation1 [shape = 'u32[144,128]{1,0:T(1,128)}', space=vmem, size = 0x12000, scoped, tag = 'internal scratch']
  #allocation2 [shape = 'f32[128,128]{1,0:T(8,128)}', space=vmem, size = 0x10000, scoped, tag = 'scratch operand']
  #allocation3 [shape = 'f32[128,128]{1,0:T(8,128)}', space=vmem, size = 0x10000, scoped, tag = 'scratch operand']
  %s0 = inlined_call_operand.hbm [shape: f32[2,128,128], index: 0, kind: input, shape index: {}]
  %s1 = inlined_call_operand.hbm [shape: f32[2,1,128], index: 1, kind: input, shape index: {}]
  %s2 = inlined_call_operand.hbm [shape: f32[128,128], index: 2, kind: input, shape index: {}]
  %s3 = inlined_call_operand.hbm [shape: f32[128,128], index: 3, kind: input, shape index: {}]
  %s4 = inlined_call_operand.hbm [shape: f32[128,128], index: 4, kind: input, shape index: {}]
  %s5 = inlined_call_operand.hbm [shape: f32[128,128], index: 5, kind: input, shape index: {}]
  %s6 = inlined_call_operand.hbm [shape: f32[2,128,128], index: 6, kind: input, shape index: {}]
  %s7 = inlined_call_operand.vmem [shape: f32[2,1,128], index: 7, kind: input, shape index: {}]
  %s8 = inlined_call_operand.hbm [shape: f32[2,128,128], index: 8, kind: input, shape index: {}]
  %s9 = inlined_call_operand.vmem [shape: f32[1,128], index: 9, kind: input, shape index: {}]
  %s10 = inlined_call_operand.vmem [shape: f32[1,128], index: 10, kind: input, shape index: {}]
  %s11 = inlined_call_operand.vmem [shape: f32[1,128], index: 11, kind: input, shape index: {}]
  %s12 = inlined_call_operand.vmem [shape: f32[1,128], index: 12, kind: input, shape index: {}]
  %s13 = inlined_call_operand.vmem [shape: f32[1,128], index: 13, kind: input, shape index: {}]
  %s14 = inlined_call_operand.hbm [shape: f32[2,128,128], index: 14, kind: output, shape index: {}]
  %s15 = sld [smem:[#allocation0]]
  $region125: #{tpu_custom_call.1} parent=0
    _
  %s17 = ssub.s32 1, %s15
  %s18 = scalar_select 0, %s17, %s15
  $region1: #{tpu_custom_call.1} parent=0
    #allocation4 [shape = 'u8[131072]{0}', space=vmem, size = 0x20000, scoped, tag = 'input window, operand 0']
    #allocation5 [shape = 's32[2]{0}', space=sflag, size = 0x8, scoped, tag = 'scoped memory for tpu_custom_call.1']
    #allocation6 [shape = 's32[2]{0}', space=sflag, size = 0x8, scoped, tag = 'scoped memory for tpu_custom_call.1']
    #allocation7 [shape = 'u8[1024]{0}', space=vmem, size = 0x400, scoped, tag = 'input window, operand 1']
    #allocation8 [shape = 's32[2]{0}', space=sflag, size = 0x8, scoped, tag = 'scoped memory for tpu_custom_call.1']
    #allocation9 [shape = 'u8[65536]{0}', space=vmem, size = 0x10000, scoped, tag = 'input window, operand 2, single buffered']
    #allocation10 [shape = 'u8[65536]{0}', space=vmem, size = 0x10000, scoped, tag = 'input window, operand 3, single buffered']
    #allocation11 [shape = 's32[1]{0}', space=sflag, size = 0x4, scoped, tag = 'scoped memory for tpu_custom_call.1']
    #allocation12 [shape = 'u8[65536]{0}', space=vmem, size = 0x10000, scoped, tag = 'input window, operand 4, single buffered']
    #allocation13 [shape = 'u8[65536]{0}', space=vmem, size = 0x10000, scoped, tag = 'input window, operand 5, single buffered']
    #allocation14 [shape = 's32[1]{0}', space=sflag, size = 0x4, scoped, tag = 'scoped memory for tpu_custom_call.1']
    #allocation15 [shape = 'u8[131072]{0}', space=vmem, size = 0x20000, scoped, tag = 'input window, operand 6, single buffered']
    #allocation16 [shape = 'u8[131072]{0}', space=vmem, size = 0x20000, scoped, tag = 'input window, operand 8, single buffered']
    #allocation17 [shape = 's32[1]{0}', space=sflag, size = 0x4, scoped, tag = 'scoped memory for tpu_custom_call.1']
    #allocation18 [shape = 'u8[65536]{0}', space=vmem, size = 0x10000, scoped, tag = 'output window, operand 0']
    %19 = vsyncpa [#allocation5], 0
    %s20 = scalar_lea.sflag [#allocation5], 1
    %21 = vsyncpa %s20, 0
    %22 = vsyncpa [#allocation8], 0
    %s23 = scalar_lea.sflag [#allocation8], 1
    %24 = vsyncpa %s23, 0
    %25 = vsyncpa [#allocation11], 0
    %26 = vsyncpa [#allocation14], 0
    %27 = vsyncpa [#allocation17], 0
    %28 = vsyncpa [#allocation6], 0
    %s29 = scalar_lea.sflag [#allocation6], 1
    %30 = vsyncpa %s29, 0
    loop: start=0, step=1, limit=6
    $region2: #{tpu_custom_call.1} parent=1 // loop_pre_header
      _
    $region3: #{tpu_custom_call.1} parent=1 // loop_header
      %s32 = sphi 0, %s36
      %p33 = scmp.ge.s32.totalorder %s32, 6
      %s39 = sphi 0, %s51
      %s40 = sphi 0, %s47
      %s41 = sphi 0, %s39
      %s42 = sphi 0, %s40
      %s43 = sphi 0, %s41
      %s44 = sphi 0, %s42
      %s54 = sphi 0, %s56
      %s57 = sphi 0, %s54
      %s58 = sphi 0, %s57
      %s74 = sphi 0, %s58
      %s80 = sphi 0, %s82
      %s83 = sphi 0, %s80
      %s84 = sphi 0, %s83
      %s100 = sphi 0, %s84
      %s104 = sphi 0, %s104
      %s106 = sphi 0, %s104
      %s107 = sphi 0, %s106
      %s121 = sphi 0, %s107
      %s125 = sphi 0, %s125
      %s127 = sphi 0, %s125
      %s128 = sphi 0, %s127
      %s142 = sphi 0, %s128
      %s146 = sphi 0, %s146
      %s148 = sphi 0, %s146
      %s149 = sphi 0, %s148
      %s163 = sphi 0, %s149
      %s167 = sphi 0, %s167
      %s169 = sphi 0, %s167
      %s170 = sphi 0, %s169
      %s184 = sphi 0, %s170
      %s188 = sphi 0, %s188
      %s190 = sphi 0, %s188
      %s191 = sphi 0, %s190
      %s205 = sphi 0, %s191
      %s209 = sphi 0, %s209
      %s211 = sphi 0, %s209
      %s212 = sphi 0, %s211
      %s226 = sphi 0, %s212
      %s230 = sphi 0, %s230
      %s232 = sphi 0, %s230
      %s233 = sphi 0, %s232
      %s247 = sphi 0, %s233
      %s251 = sphi 0, %s251
      %s253 = sphi 0, %s251
      %s254 = sphi 0, %s253
      %s268 = sphi 0, %s254
      %s272 = sphi 0, %s272
      %s274 = sphi 0, %s272
      %s275 = sphi 0, %s274
      %s289 = sphi 0, %s275
      %s293 = sphi 0, %s293
      %s295 = sphi 0, %s293
      %s296 = sphi 0, %s295
      %s310 = sphi 0, %s296
      %s314 = sphi 0, %s314
      %s316 = sphi 0, %s314
      %s317 = sphi 0, %s316
      %s331 = sphi 0, %s317
      %s335 = sphi 0, %s335
      %s337 = sphi 0, %s335
      %s338 = sphi 0, %s337
      %s352 = sphi 0, %s338
      %s360 = sphi 0, %s362
      %s363 = sphi 0, %s360
      %s364 = sphi 0, %s363
      %s380 = sphi 0, %s364
    $region4: #{tpu_custom_call.1} parent=1 // loop_header_branch
      %35 = sbr.rel (%p33) target = $region8
    $region5: #{tpu_custom_call.1} parent=1 // loop_body
      %s37 = ssub.s32 %s32, 1
      %s38 = ssub.s32 %s32, 2
      %s45 = sadd.s32 1, %s40
      %p46 = scmp.ge.s32.totalorder %s45, 2
      %s47 = scalar_select %p46, 0, %s45
      %s48 = sadd.s32 1, %s39
      %s49 = scalar_select %p46, %s48, %s39
      %p50 = scmp.ge.s32.totalorder %s49, 2
      %s51 = scalar_select %p50, 0, %s49
      %s52 = ssub.s32 %s39, %s51
      %p53 = scmp.eq.s32.totalorder %s52, 0
      %s55 = sadd.s32 %s54, 1
      %s56 = scalar_select %p53, %s54, %s55
      %p59 = pneg %p53
      %p60 = scmp.eq.s32.totalorder %s32, 3
      %p61 = por %p59, %p60
      %p62 = scmp.ne.s32.totalorder %s54, %s57
      %p63 = scmp.eq.s32.totalorder %s32, 0
      %p64 = por %p62, %p63
      %p65 = scmp.ne.s32.totalorder %s54, %s57
      %p66 = scmp.eq.s32.totalorder %s37, 3
      %p67 = por %p65, %p66
      %p68 = scmp.ne.s32.totalorder %s57, %s58
      %p69 = scmp.eq.s32.totalorder %s37, 0
      %p70 = por %p68, %p69
      %p71 = scmp.ne.s32.totalorder %s57, %s58
      %p72 = scmp.eq.s32.totalorder %s38, 3
      %p73 = por %p71, %p72
      %p75 = scmp.ne.s32.totalorder %s58, %s74
      %p76 = scmp.eq.s32.totalorder %s38, 0
      %p77 = por %p75, %p76
      %s78 = ssub.s32 %s39, %s51
      %p79 = scmp.eq.s32.totalorder %s78, 0
      %s81 = sadd.s32 %s80, 1
      %s82 = scalar_select %p79, %s80, %s81
      %p85 = pneg %p79
      %p86 = scmp.eq.s32.totalorder %s32, 3
      %p87 = por %p85, %p86
      %p88 = scmp.ne.s32.totalorder %s80, %s83
      %p89 = scmp.eq.s32.totalorder %s32, 0
      %p90 = por %p88, %p89
      %p91 = scmp.ne.s32.totalorder %s80, %s83
      %p92 = scmp.eq.s32.totalorder %s37, 3
      %p93 = por %p91, %p92
      %p94 = scmp.ne.s32.totalorder %s83, %s84
      %p95 = scmp.eq.s32.totalorder %s37, 0
      %p96 = por %p94, %p95
      %p97 = scmp.ne.s32.totalorder %s83, %s84
      %p98 = scmp.eq.s32.totalorder %s38, 3
      %p99 = por %p97, %p98
      %p101 = scmp.ne.s32.totalorder %s84, %s100
      %p102 = scmp.eq.s32.totalorder %s38, 0
      %p103 = por %p101, %p102
      %s105 = sadd.s32 %s104, 1
      %p108 = scmp.eq.s32.totalorder %s32, 3
      %p109 = scmp.ne.s32.totalorder %s104, %s106
      %p110 = scmp.eq.s32.totalorder %s32, 0
      %p111 = por %p109, %p110
      %p112 = scmp.ne.s32.totalorder %s104, %s106
      %p113 = scmp.eq.s32.totalorder %s37, 3
      %p114 = por %p112, %p113
      %p115 = scmp.ne.s32.totalorder %s106, %s107
      %p116 = scmp.eq.s32.totalorder %s37, 0
      %p117 = por %p115, %p116
      %p118 = scmp.ne.s32.totalorder %s106, %s107
      %p119 = scmp.eq.s32.totalorder %s38, 3
      %p120 = por %p118, %p119
      %p122 = scmp.ne.s32.totalorder %s107, %s121
      %p123 = scmp.eq.s32.totalorder %s38, 0
      %p124 = por %p122, %p123
      %s126 = sadd.s32 %s125, 1
      %p129 = scmp.eq.s32.totalorder %s32, 3
      %p130 = scmp.ne.s32.totalorder %s125, %s127
      %p131 = scmp.eq.s32.totalorder %s32, 0
      %p132 = por %p130, %p131
      %p133 = scmp.ne.s32.totalorder %s125, %s127
      %p134 = scmp.eq.s32.totalorder %s37, 3
      %p135 = por %p133, %p134
      %p136 = scmp.ne.s32.totalorder %s127, %s128
      %p137 = scmp.eq.s32.totalorder %s37, 0
      %p138 = por %p136, %p137
      %p139 = scmp.ne.s32.totalorder %s127, %s128
      %p140 = scmp.eq.s32.totalorder %s38, 3
      %p141 = por %p139, %p140
      %p143 = scmp.ne.s32.totalorder %s128, %s142
      %p144 = scmp.eq.s32.totalorder %s38, 0
      %p145 = por %p143, %p144
      %s147 = sadd.s32 %s146, 1
      %p150 = scmp.eq.s32.totalorder %s32, 3
      %p151 = scmp.ne.s32.totalorder %s146, %s148
      %p152 = scmp.eq.s32.totalorder %s32, 0
      %p153 = por %p151, %p152
      %p154 = scmp.ne.s32.totalorder %s146, %s148
      %p155 = scmp.eq.s32.totalorder %s37, 3
      %p156 = por %p154, %p155
      %p157 = scmp.ne.s32.totalorder %s148, %s149
      %p158 = scmp.eq.s32.totalorder %s37, 0
      %p159 = por %p157, %p158
      %p160 = scmp.ne.s32.totalorder %s148, %s149
      %p161 = scmp.eq.s32.totalorder %s38, 3
      %p162 = por %p160, %p161
      %p164 = scmp.ne.s32.totalorder %s149, %s163
      %p165 = scmp.eq.s32.totalorder %s38, 0
      %p166 = por %p164, %p165
      %s168 = sadd.s32 %s167, 1
      %p171 = scmp.eq.s32.totalorder %s32, 3
      %p172 = scmp.ne.s32.totalorder %s167, %s169
      %p173 = scmp.eq.s32.totalorder %s32, 0
      %p174 = por %p172, %p173
      %p175 = scmp.ne.s32.totalorder %s167, %s169
      %p176 = scmp.eq.s32.totalorder %s37, 3
      %p177 = por %p175, %p176
      %p178 = scmp.ne.s32.totalorder %s169, %s170
      %p179 = scmp.eq.s32.totalorder %s37, 0
      %p180 = por %p178, %p179
      %p181 = scmp.ne.s32.totalorder %s169, %s170
      %p182 = scmp.eq.s32.totalorder %s38, 3
      %p183 = por %p181, %p182
      %p185 = scmp.ne.s32.totalorder %s170, %s184
      %p186 = scmp.eq.s32.totalorder %s38, 0
      %p187 = por %p185, %p186
      %s189 = sadd.s32 %s188, 1
      %p192 = scmp.eq.s32.totalorder %s32, 3
      %p193 = scmp.ne.s32.totalorder %s188, %s190
      %p194 = scmp.eq.s32.totalorder %s32, 0
      %p195 = por %p193, %p194
      %p196 = scmp.ne.s32.totalorder %s188, %s190
      %p197 = scmp.eq.s32.totalorder %s37, 3
      %p198 = por %p196, %p197
      %p199 = scmp.ne.s32.totalorder %s190, %s191
      %p200 = scmp.eq.s32.totalorder %s37, 0
      %p201 = por %p199, %p200
      %p202 = scmp.ne.s32.totalorder %s190, %s191
      %p203 = scmp.eq.s32.totalorder %s38, 3
      %p204 = por %p202, %p203
      %p206 = scmp.ne.s32.totalorder %s191, %s205
      %p207 = scmp.eq.s32.totalorder %s38, 0
      %p208 = por %p206, %p207
      %s210 = sadd.s32 %s209, 1
      %p213 = scmp.eq.s32.totalorder %s32, 3
      %p214 = scmp.ne.s32.totalorder %s209, %s211
      %p215 = scmp.eq.s32.totalorder %s32, 0
      %p216 = por %p214, %p215
      %p217 = scmp.ne.s32.totalorder %s209, %s211
      %p218 = scmp.eq.s32.totalorder %s37, 3
      %p219 = por %p217, %p218
      %p220 = scmp.ne.s32.totalorder %s211, %s212
      %p221 = scmp.eq.s32.totalorder %s37, 0
      %p222 = por %p220, %p221
      %p223 = scmp.ne.s32.totalorder %s211, %s212
      %p224 = scmp.eq.s32.totalorder %s38, 3
      %p225 = por %p223, %p224
      %p227 = scmp.ne.s32.totalorder %s212, %s226
      %p228 = scmp.eq.s32.totalorder %s38, 0
      %p229 = por %p227, %p228
      %s231 = sadd.s32 %s230, 1
      %p234 = scmp.eq.s32.totalorder %s32, 3
      %p235 = scmp.ne.s32.totalorder %s230, %s232
      %p236 = scmp.eq.s32.totalorder %s32, 0
      %p237 = por %p235, %p236
      %p238 = scmp.ne.s32.totalorder %s230, %s232
      %p239 = scmp.eq.s32.totalorder %s37, 3
      %p240 = por %p238, %p239
      %p241 = scmp.ne.s32.totalorder %s232, %s233
      %p242 = scmp.eq.s32.totalorder %s37, 0
      %p243 = por %p241, %p242
      %p244 = scmp.ne.s32.totalorder %s232, %s233
      %p245 = scmp.eq.s32.totalorder %s38, 3
      %p246 = por %p244, %p245
      %p248 = scmp.ne.s32.totalorder %s233, %s247
      %p249 = scmp.eq.s32.totalorder %s38, 0
      %p250 = por %p248, %p249
      %s252 = sadd.s32 %s251, 1
      %p255 = scmp.eq.s32.totalorder %s32, 3
      %p256 = scmp.ne.s32.totalorder %s251, %s253
      %p257 = scmp.eq.s32.totalorder %s32, 0
      %p258 = por %p256, %p257
      %p259 = scmp.ne.s32.totalorder %s251, %s253
      %p260 = scmp.eq.s32.totalorder %s37, 3
      %p261 = por %p259, %p260
      %p262 = scmp.ne.s32.totalorder %s253, %s254
      %p263 = scmp.eq.s32.totalorder %s37, 0
      %p264 = por %p262, %p263
      %p265 = scmp.ne.s32.totalorder %s253, %s254
      %p266 = scmp.eq.s32.totalorder %s38, 3
      %p267 = por %p265, %p266
      %p269 = scmp.ne.s32.totalorder %s254, %s268
      %p270 = scmp.eq.s32.totalorder %s38, 0
      %p271 = por %p269, %p270
      %s273 = sadd.s32 %s272, 1
      %p276 = scmp.eq.s32.totalorder %s32, 3
      %p277 = scmp.ne.s32.totalorder %s272, %s274
      %p278 = scmp.eq.s32.totalorder %s32, 0
      %p279 = por %p277, %p278
      %p280 = scmp.ne.s32.totalorder %s272, %s274
      %p281 = scmp.eq.s32.totalorder %s37, 3
      %p282 = por %p280, %p281
      %p283 = scmp.ne.s32.totalorder %s274, %s275
      %p284 = scmp.eq.s32.totalorder %s37, 0
      %p285 = por %p283, %p284
      %p286 = scmp.ne.s32.totalorder %s274, %s275
      %p287 = scmp.eq.s32.totalorder %s38, 3
      %p288 = por %p286, %p287
      %p290 = scmp.ne.s32.totalorder %s275, %s289
      %p291 = scmp.eq.s32.totalorder %s38, 0
      %p292 = por %p290, %p291
      %s294 = sadd.s32 %s293, 1
      %p297 = scmp.eq.s32.totalorder %s32, 3
      %p298 = scmp.ne.s32.totalorder %s293, %s295
      %p299 = scmp.eq.s32.totalorder %s32, 0
      %p300 = por %p298, %p299
      %p301 = scmp.ne.s32.totalorder %s293, %s295
      %p302 = scmp.eq.s32.totalorder %s37, 3
      %p303 = por %p301, %p302
      %p304 = scmp.ne.s32.totalorder %s295, %s296
      %p305 = scmp.eq.s32.totalorder %s37, 0
      %p306 = por %p304, %p305
      %p307 = scmp.ne.s32.totalorder %s295, %s296
      %p308 = scmp.eq.s32.totalorder %s38, 3
      %p309 = por %p307, %p308
      %p311 = scmp.ne.s32.totalorder %s296, %s310
      %p312 = scmp.eq.s32.totalorder %s38, 0
      %p313 = por %p311, %p312
      %s315 = sadd.s32 %s314, 1
      %p318 = scmp.eq.s32.totalorder %s32, 3
      %p319 = scmp.ne.s32.totalorder %s314, %s316
      %p320 = scmp.eq.s32.totalorder %s32, 0
      %p321 = por %p319, %p320
      %p322 = scmp.ne.s32.totalorder %s314, %s316
      %p323 = scmp.eq.s32.totalorder %s37, 3
      %p324 = por %p322, %p323
      %p325 = scmp.ne.s32.totalorder %s316, %s317
      %p326 = scmp.eq.s32.totalorder %s37, 0
      %p327 = por %p325, %p326
      %p328 = scmp.ne.s32.totalorder %s316, %s317
      %p329 = scmp.eq.s32.totalorder %s38, 3
      %p330 = por %p328, %p329
      %p332 = scmp.ne.s32.totalorder %s317, %s331
      %p333 = scmp.eq.s32.totalorder %s38, 0
      %p334 = por %p332, %p333
      %s336 = sadd.s32 %s335, 1
      %p339 = scmp.eq.s32.totalorder %s32, 3
      %p340 = scmp.ne.s32.totalorder %s335, %s337
      %p341 = scmp.eq.s32.totalorder %s32, 0
      %p342 = por %p340, %p341
      %p343 = scmp.ne.s32.totalorder %s335, %s337
      %p344 = scmp.eq.s32.totalorder %s37, 3
      %p345 = por %p343, %p344
      %p346 = scmp.ne.s32.totalorder %s337, %s338
      %p347 = scmp.eq.s32.totalorder %s37, 0
      %p348 = por %p346, %p347
      %p349 = scmp.ne.s32.totalorder %s337, %s338
      %p350 = scmp.eq.s32.totalorder %s38, 3
      %p351 = por %p349, %p350
      %p353 = scmp.ne.s32.totalorder %s338, %s352
      %p354 = scmp.eq.s32.totalorder %s38, 0
      %p355 = por %p353, %p354
      %s356 = ssub.s32 %s39, %s51
      %s357 = ssub.s32 %s40, %s47
      %s358 = sor.u32 %s356, %s357
      %p359 = scmp.eq.s32.totalorder %s358, 0
      %s361 = sadd.s32 %s360, 1
      %s362 = scalar_select %p359, %s360, %s361
      %p365 = pneg %p359
      %p366 = scmp.eq.s32.totalorder %s32, 3
      %p367 = por %p365, %p366
      %p368 = scmp.ne.s32.totalorder %s360, %s363
      %p369 = scmp.eq.s32.totalorder %s32, 0
      %p370 = por %p368, %p369
      %p371 = scmp.ne.s32.totalorder %s360, %s363
      %p372 = scmp.eq.s32.totalorder %s37, 3
      %p373 = por %p371, %p372
      %p374 = scmp.ne.s32.totalorder %s363, %s364
      %p375 = scmp.eq.s32.totalorder %s37, 0
      %p376 = por %p374, %p375
      %p377 = scmp.ne.s32.totalorder %s363, %s364
      %p378 = scmp.eq.s32.totalorder %s38, 3
      %p379 = por %p377, %p378
      %p381 = scmp.ne.s32.totalorder %s364, %s380
      %p382 = scmp.eq.s32.totalorder %s38, 0
      %p383 = por %p381, %p382
      %p384 = scmp.le.s32.totalorder 1, %s32
      %p385 = scmp.lt.s32.totalorder %s32, 5
      %p386 = pnand %p384, %p385
      %p387 = pneg %p386
      // Predicated region
      $region9: #{tpu_custom_call.1} parent=5 // pred_check
        _
      $region10: #{tpu_custom_call.1} parent=5 // pred_check_branch
        %389 = sbr.rel (%p386) target = $region12
      $region11: #{tpu_custom_call.1} parent=5 // pred_region
        %s390 = ssub.s32 %s32, 1
        // Predicated region
        $region13: #{tpu_custom_call.1} parent=11 // pred_check
          %p391 = pneg %p117
        $region14: #{tpu_custom_call.1} parent=11 // pred_check_branch
          %393 = sbr.rel (%p391) target = $region16
        $region15: #{tpu_custom_call.1} parent=11 // pred_region
          %s395 = ssub.s32 2048, 2048
          %396 = vsyncadd [#allocation8], %s395
          %s397 = sshll.u32 [#allocation9], 4
          %s398 = int_to_ptr.vmem [resolvable:$true] %s397
          %403 = dma.hbm_to_vmem [thread:$0]  %s2, 2048, %s398, [#allocation8], 128, 128, 8
        $region16: #{tpu_custom_call.1} parent=11 // pred_fallthru
          _
        // Predicated region
        $region17: #{tpu_custom_call.1} parent=11 // pred_check
          %p404 = pneg %p138
        $region18: #{tpu_custom_call.1} parent=11 // pred_check_branch
          %406 = sbr.rel (%p404) target = $region20
        $region19: #{tpu_custom_call.1} parent=11 // pred_region
          %s408 = ssub.s32 2048, 2048
          %409 = vsyncadd [#allocation11], %s408
          %s410 = sshll.u32 [#allocation10], 4
          %s411 = int_to_ptr.vmem [resolvable:$true] %s410
          %416 = dma.hbm_to_vmem [thread:$0]  %s3, 2048, %s411, [#allocation11], 128, 128, 8
        $region20: #{tpu_custom_call.1} parent=11 // pred_fallthru
          _
        // Predicated region
        $region21: #{tpu_custom_call.1} parent=11 // pred_check
          %p417 = pneg %p159
        $region22: #{tpu_custom_call.1} parent=11 // pred_check_branch
          %419 = sbr.rel (%p417) target = $region24
        $region23: #{tpu_custom_call.1} parent=11 // pred_region
          %s421 = ssub.s32 2048, 2048
          %422 = vsyncadd [#allocation11], %s421
          %s423 = sshll.u32 [#allocation12], 4
          %s424 = int_to_ptr.vmem [resolvable:$true] %s423
          %429 = dma.hbm_to_vmem [thread:$0]  %s4, 2048, %s424, [#allocation11], 128, 128, 8
        $region24: #{tpu_custom_call.1} parent=11 // pred_fallthru
          _
        // Predicated region
        $region25: #{tpu_custom_call.1} parent=11 // pred_check
          %p430 = pneg %p180
        $region26: #{tpu_custom_call.1} parent=11 // pred_check_branch
          %432 = sbr.rel (%p430) target = $region28
        $region27: #{tpu_custom_call.1} parent=11 // pred_region
          %s434 = ssub.s32 2048, 2048
          %435 = vsyncadd [#allocation14], %s434
          %s436 = sshll.u32 [#allocation13], 4
          %s437 = int_to_ptr.vmem [resolvable:$true] %s436
          %442 = dma.hbm_to_vmem [thread:$0]  %s5, 2048, %s437, [#allocation14], 128, 128, 8
        $region28: #{tpu_custom_call.1} parent=11 // pred_fallthru
          _
        // Predicated region
        $region29: #{tpu_custom_call.1} parent=11 // pred_check
          %p443 = pneg %p201
        $region30: #{tpu_custom_call.1} parent=11 // pred_check_branch
          %445 = sbr.rel (%p443) target = $region32
        $region31: #{tpu_custom_call.1} parent=11 // pred_region
          %s447 = ssub.s32 4096, 4096
          %448 = vsyncadd [#allocation14], %s447
          %s449 = sshll.u32 [#allocation15], 4
          %s450 = int_to_ptr.vmem [resolvable:$true] %s449
          %455 = dma.hbm_to_vmem [thread:$0]  %s6, 4096, %s450, [#allocation14], 128, 128, 8
        $region32: #{tpu_custom_call.1} parent=11 // pred_fallthru
          _
        // Predicated region
        $region33: #{tpu_custom_call.1} parent=11 // pred_check
          %p456 = pneg %p222
        $region34: #{tpu_custom_call.1} parent=11 // pred_check_branch
          %458 = sbr.rel (%p456) target = $region36
        $region35: #{tpu_custom_call.1} parent=11 // pred_region
          _
        $region36: #{tpu_custom_call.1} parent=11 // pred_fallthru
          _
        // Predicated region
        $region37: #{tpu_custom_call.1} parent=11 // pred_check
          %p459 = pneg %p243
        $region38: #{tpu_custom_call.1} parent=11 // pred_check_branch
          %461 = sbr.rel (%p459) target = $region40
        $region39: #{tpu_custom_call.1} parent=11 // pred_region
          %s463 = ssub.s32 4096, 4096
          %464 = vsyncadd [#allocation17], %s463
          %s465 = sshll.u32 [#allocation16], 4
          %s466 = int_to_ptr.vmem [resolvable:$true] %s465
          %471 = dma.hbm_to_vmem [thread:$0]  %s8, 4096, %s466, [#allocation17], 128, 128, 8
        $region40: #{tpu_custom_call.1} parent=11 // pred_fallthru
          _
        // Predicated region
        $region41: #{tpu_custom_call.1} parent=11 // pred_check
          %p472 = pneg %p264
        $region42: #{tpu_custom_call.1} parent=11 // pred_check_branch
          %474 = sbr.rel (%p472) target = $region44
        $region43: #{tpu_custom_call.1} parent=11 // pred_region
          _
        $region44: #{tpu_custom_call.1} parent=11 // pred_fallthru
          _
        // Predicated region
        $region45: #{tpu_custom_call.1} parent=11 // pred_check
          %p475 = pneg %p285
        $region46: #{tpu_custom_call.1} parent=11 // pred_check_branch
          %477 = sbr.rel (%p475) target = $region48
        $region47: #{tpu_custom_call.1} parent=11 // pred_region
          _
        $region48: #{tpu_custom_call.1} parent=11 // pred_fallthru
          _
        // Predicated region
        $region49: #{tpu_custom_call.1} parent=11 // pred_check
          %p478 = pneg %p306
        $region50: #{tpu_custom_call.1} parent=11 // pred_check_branch
          %480 = sbr.rel (%p478) target = $region52
        $region51: #{tpu_custom_call.1} parent=11 // pred_region
          _
        $region52: #{tpu_custom_call.1} parent=11 // pred_fallthru
          _
        // Predicated region
        $region53: #{tpu_custom_call.1} parent=11 // pred_check
          %p481 = pneg %p327
        $region54: #{tpu_custom_call.1} parent=11 // pred_check_branch
          %483 = sbr.rel (%p481) target = $region56
        $region55: #{tpu_custom_call.1} parent=11 // pred_region
          _
        $region56: #{tpu_custom_call.1} parent=11 // pred_fallthru
          _
        // Predicated region
        $region57: #{tpu_custom_call.1} parent=11 // pred_check
          %p484 = pneg %p348
        $region58: #{tpu_custom_call.1} parent=11 // pred_check_branch
          %486 = sbr.rel (%p484) target = $region60
        $region59: #{tpu_custom_call.1} parent=11 // pred_region
          _
        $region60: #{tpu_custom_call.1} parent=11 // pred_fallthru
          _
      $region12: #{tpu_custom_call.1} parent=5 // pred_fallthru
        _
      %p487 = scmp.lt.s32.totalorder %s32, 4
      // Predicated region
      $region61: #{tpu_custom_call.1} parent=5 // pred_check
        %p488 = pneg %p487
      $region62: #{tpu_custom_call.1} parent=5 // pred_check_branch
        %490 = sbr.rel (%p488) target = $region64
      $region63: #{tpu_custom_call.1} parent=5 // pred_region
        // Predicated region
        $region65: #{tpu_custom_call.1} parent=63 // pred_check
          %p491 = pneg %p64
        $region66: #{tpu_custom_call.1} parent=63 // pred_check_branch
          %493 = sbr.rel (%p491) target = $region68
        $region67: #{tpu_custom_call.1} parent=63 // pred_region
          %s494 = sand.u32 %s54, 1
          %s495 = scalar_lea.sflag [#allocation5], %s494
          %s496 = sand.u32 %s54, 1
          %s497 = smul.addr %s496, 128
          %s498 = scalar_lea.vmem [#allocation4], %s497
          %s500 = ssub.s32 2048, 2048
          %501 = vsyncadd %s495, %s500
          %s502 = smul.addr %s39, 16
          %s503 = smul.addr %s502, 128
          %s504 = scalar_lea.hbm %s0, %s503
          %s505 = sshll.u32 %s498, 4
          %s506 = int_to_ptr.vmem [resolvable:$true] %s505
          %511 = dma.hbm_to_vmem [thread:$0]  %s504, 2048, %s506, %s495, 128, 128, 8
        $region68: #{tpu_custom_call.1} parent=63 // pred_fallthru
          _
        // Predicated region
        $region69: #{tpu_custom_call.1} parent=63 // pred_check
          %p512 = pneg %p90
        $region70: #{tpu_custom_call.1} parent=63 // pred_check_branch
          %514 = sbr.rel (%p512) target = $region72
        $region71: #{tpu_custom_call.1} parent=63 // pred_region
          %s515 = sand.u32 %s32, 1
          %s516 = scalar_lea.sflag [#allocation8], %s515
          %s517 = sand.u32 %s80, 1
          %s518 = scalar_lea.vmem [#allocation7], %s517
          %s520 = ssub.s32 16, 16
          %521 = vsyncadd %s516, %s520
          %s522 = smul.addr %s39, 16
          %s523 = scalar_lea.hbm %s1, %s522
          %s525 = sshll.u32 %s518, 4
          %s526 = int_to_ptr.vmem [resolvable:$true] %s525
          %528 = dma.hbm_to_vmem [thread:$0]  %s523, 16, %s526, %s516
        $region72: #{tpu_custom_call.1} parent=63 // pred_fallthru
          _
      $region64: #{tpu_custom_call.1} parent=5 // pred_fallthru
        _
      %p529 = scmp.le.s32.totalorder 1, %s32
      %p530 = scmp.lt.s32.totalorder %s32, 5
      %p531 = pnand %p529, %p530
      %p532 = pneg %p531
      // Predicated region
      $region73: #{tpu_custom_call.1} parent=5 // pred_check
        _
      $region74: #{tpu_custom_call.1} parent=5 // pred_check_branch
        %534 = sbr.rel (%p531) target = $region76
      $region75: #{tpu_custom_call.1} parent=5 // pred_region
        %s535 = ssub.s32 %s32, 1
        %s536 = sand.u32 %s57, 1
        %s537 = scalar_lea.sflag [#allocation5], %s536
        %s538 = sand.u32 %s57, 1
        %s539 = smul.addr %s538, 128
        %s540 = scalar_lea.vmem [#allocation4], %s539
        // Predicated region
        $region77: #{tpu_custom_call.1} parent=75 // pred_check
          %p541 = pneg %p70
        $region78: #{tpu_custom_call.1} parent=75 // pred_check_branch
          %543 = sbr.rel (%p541) target = $region80
        $region79: #{tpu_custom_call.1} parent=75 // pred_region
          %544 = dma.done %s537, 2048
        $region80: #{tpu_custom_call.1} parent=75 // pred_fallthru
          _
        %s545 = sand.u32 %s37, 1
        %s546 = scalar_lea.sflag [#allocation8], %s545
        %s547 = sand.u32 %s83, 1
        %s548 = scalar_lea.vmem [#allocation7], %s547
        // Predicated region
        $region81: #{tpu_custom_call.1} parent=75 // pred_check
          %p549 = pneg %p96
        $region82: #{tpu_custom_call.1} parent=75 // pred_check_branch
          %551 = sbr.rel (%p549) target = $region84
        $region83: #{tpu_custom_call.1} parent=75 // pred_region
          %552 = dma.done %s546, 16
        $region84: #{tpu_custom_call.1} parent=75 // pred_fallthru
          _
        // Predicated region
        $region85: #{tpu_custom_call.1} parent=75 // pred_check
          %p553 = pneg %p117
        $region86: #{tpu_custom_call.1} parent=75 // pred_check_branch
          %555 = sbr.rel (%p553) target = $region88
        $region87: #{tpu_custom_call.1} parent=75 // pred_region
          %556 = dma.done [#allocation8], 2048
        $region88: #{tpu_custom_call.1} parent=75 // pred_fallthru
          _
        // Predicated region
        $region89: #{tpu_custom_call.1} parent=75 // pred_check
          %p557 = pneg %p138
        $region90: #{tpu_custom_call.1} parent=75 // pred_check_branch
          %559 = sbr.rel (%p557) target = $region92
        $region91: #{tpu_custom_call.1} parent=75 // pred_region
          %560 = dma.done [#allocation11], 2048
        $region92: #{tpu_custom_call.1} parent=75 // pred_fallthru
          _
        // Predicated region
        $region93: #{tpu_custom_call.1} parent=75 // pred_check
          %p561 = pneg %p159
        $region94: #{tpu_custom_call.1} parent=75 // pred_check_branch
          %563 = sbr.rel (%p561) target = $region96
        $region95: #{tpu_custom_call.1} parent=75 // pred_region
          %564 = dma.done [#allocation11], 2048
        $region96: #{tpu_custom_call.1} parent=75 // pred_fallthru
          _
        // Predicated region
        $region97: #{tpu_custom_call.1} parent=75 // pred_check
          %p565 = pneg %p180
        $region98: #{tpu_custom_call.1} parent=75 // pred_check_branch
          %567 = sbr.rel (%p565) target = $region100
        $region99: #{tpu_custom_call.1} parent=75 // pred_region
          %568 = dma.done [#allocation14], 2048
        $region100: #{tpu_custom_call.1} parent=75 // pred_fallthru
          _
        // Predicated region
        $region101: #{tpu_custom_call.1} parent=75 // pred_check
          %p569 = pneg %p201
        $region102: #{tpu_custom_call.1} parent=75 // pred_check_branch
          %571 = sbr.rel (%p569) target = $region104
        $region103: #{tpu_custom_call.1} parent=75 // pred_region
          %572 = dma.done [#allocation14], 4096
        $region104: #{tpu_custom_call.1} parent=75 // pred_fallthru
          _
        // Predicated region
        $region105: #{tpu_custom_call.1} parent=75 // pred_check
          %p573 = pneg %p243
        $region106: #{tpu_custom_call.1} parent=75 // pred_check_branch
          %575 = sbr.rel (%p573) target = $region108
        $region107: #{tpu_custom_call.1} parent=75 // pred_region
          %576 = dma.done [#allocation17], 4096
        $region108: #{tpu_custom_call.1} parent=75 // pred_fallthru
          _
        %s577 = sand.u32 %s57, 1
        %s578 = scalar_lea.sflag [#allocation5], %s577
        %s579 = sand.u32 %s57, 1
        %s580 = smul.addr %s579, 128
        %s581 = scalar_lea.vmem [#allocation4], %s580
        %p582 = pneg %p70
        %p583 = pneg %p67
        %s584 = sand.u32 %s37, 1
        %s585 = scalar_lea.sflag [#allocation8], %s584
        %s586 = sand.u32 %s83, 1
        %s587 = scalar_lea.vmem [#allocation7], %s586
        %p588 = pneg %p96
        %p589 = pneg %p93
        %p590 = pneg %p117
        %p591 = pneg %p114
        %p592 = pneg %p138
        %p593 = pneg %p135
        %p594 = pneg %p159
        %p595 = pneg %p156
        %p596 = pneg %p180
        %p597 = pneg %p177
        %p598 = pneg %p201
        %p599 = pneg %p198
        %p600 = pneg %p222
        %p601 = pneg %p219
        %p602 = pneg %p243
        %p603 = pneg %p240
        %p604 = pneg %p264
        %p605 = pneg %p261
        %p606 = pneg %p285
        %p607 = pneg %p282
        %p608 = pneg %p306
        %p609 = pneg %p303
        %p610 = pneg %p327
        %p611 = pneg %p324
        %p612 = pneg %p348
        %p613 = pneg %p345
        %p614 = pneg %p376
        %p615 = pneg %p373
        %s616 = sand.u32 %s363, 1
        %s617 = scalar_lea.sflag [#allocation6], %s616
        %s618 = sand.u32 %s363, 1
        %s619 = smul.addr %s618, 64
        %s620 = scalar_lea.vmem [#allocation18], %s619
        %s621 = smul.u32 8, %s42
        %p622 = scmp.eq.s32.totalorder %s42, 0
        // Predicated region
        $region109: #{tpu_custom_call.1} parent=75 // pred_check
          %p623 = pneg %p622
        $region110: #{tpu_custom_call.1} parent=75 // pred_check_branch
          %625 = sbr.rel (%p623) target = $region112
        $region111: #{tpu_custom_call.1} parent=75 // pred_region
          %v626 = vld [vmem:[%s540] sm:$0xff]
          %v627 = vld [vmem:[%s540 + $0x8] sm:$0xff]
          %v628 = vld [vmem:[%s540 + $0x10] sm:$0xff]
          %v629 = vld [vmem:[%s540 + $0x18] sm:$0xff]
          %v630 = vld [vmem:[%s540 + $0x20] sm:$0xff]
          %v631 = vld [vmem:[%s540 + $0x28] sm:$0xff]
          %v632 = vld [vmem:[%s540 + $0x30] sm:$0xff]
          %v633 = vld [vmem:[%s540 + $0x38] sm:$0xff]
          %v634 = vld [vmem:[%s540 + $0x40] sm:$0xff]
          %v635 = vld [vmem:[%s540 + $0x48] sm:$0xff]
          %v636 = vld [vmem:[%s540 + $0x50] sm:$0xff]
          %v637 = vld [vmem:[%s540 + $0x58] sm:$0xff]
          %v638 = vld [vmem:[%s540 + $0x60] sm:$0xff]
          %v639 = vld [vmem:[%s540 + $0x68] sm:$0xff]
          %v640 = vld [vmem:[%s540 + $0x70] sm:$0xff]
          %v641 = vld [vmem:[%s540 + $0x78] sm:$0xff]
          %v642 = vld [vmem:[#allocation10] sm:$0xff]
          %v643 = vld [vmem:[#allocation10 + $0x8] sm:$0xff]
          %v644 = vld [vmem:[#allocation10 + $0x10] sm:$0xff]
          %v645 = vld [vmem:[#allocation10 + $0x18] sm:$0xff]
          %v646 = vld [vmem:[#allocation10 + $0x20] sm:$0xff]
          %v647 = vld [vmem:[#allocation10 + $0x28] sm:$0xff]
          %v648 = vld [vmem:[#allocation10 + $0x30] sm:$0xff]
          %v649 = vld [vmem:[#allocation10 + $0x38] sm:$0xff]
          %v650 = vld [vmem:[#allocation10 + $0x40] sm:$0xff]
          %v651 = vld [vmem:[#allocation10 + $0x48] sm:$0xff]
          %v652 = vld [vmem:[#allocation10 + $0x50] sm:$0xff]
          %v653 = vld [vmem:[#allocation10 + $0x58] sm:$0xff]
          %v654 = vld [vmem:[#allocation10 + $0x60] sm:$0xff]
          %v655 = vld [vmem:[#allocation10 + $0x68] sm:$0xff]
          %v656 = vld [vmem:[#allocation10 + $0x70] sm:$0xff]
          %v657 = vld [vmem:[#allocation10 + $0x78] sm:$0xff]
          %658 = vmatprep.subr.mxu0 0.0
          %659 = vmatpush1.msra.mxu0 %v657
          %660 = vmatprep.subr.mxu0 0.0
          %661 = vmatpush1.msra.mxu0 %v656
          %662 = vmatprep.subr.mxu0 0.0
          %663 = vmatpush1.msra.mxu0 %v655
          %664 = vmatprep.subr.mxu0 0.0
          %665 = vmatpush1.msra.mxu0 %v654
          %666 = vmatprep.subr.mxu0 0.0
          %667 = vmatpush1.msra.mxu0 %v653
          %668 = vmatprep.subr.mxu0 0.0
          %669 = vmatpush1.msra.mxu0 %v652
          %670 = vmatprep.subr.mxu0 0.0
          %671 = vmatpush1.msra.mxu0 %v651
          %672 = vmatprep.subr.mxu0 0.0
          %673 = vmatpush1.msra.mxu0 %v650
          %674 = vmatprep.subr.mxu0 0.0
          %675 = vmatpush1.msra.mxu0 %v649
          %676 = vmatprep.subr.mxu0 0.0
          %677 = vmatpush1.msra.mxu0 %v648
          %678 = vmatprep.subr.mxu0 0.0
          %679 = vmatpush1.msra.mxu0 %v647
          %680 = vmatprep.subr.mxu0 0.0
          %681 = vmatpush1.msra.mxu0 %v646
          %682 = vmatprep.subr.mxu0 0.0
          %683 = vmatpush1.msra.mxu0 %v645
          %684 = vmatprep.subr.mxu0 0.0
          %685 = vmatpush1.msra.mxu0 %v644
          %686 = vmatprep.subr.mxu0 0.0
          %687 = vmatpush1.msra.mxu0 %v643
          %688 = vmatprep.subr.mxu0 0.0
          %689 = vmatpush1.msra.mxu0 %v642
          %690 = vmatprep.subr.mxu0 0.0
          %691 = vmatpush2.msra.mxu0 0.0
          %692 = vmatprep.subr.mxu0 0.0
          %693 = vmatpush2.msra.mxu0 0.0
          %694 = vmatprep.subr.mxu0 0.0
          %695 = vmatpush2.msra.mxu0 0.0
          %696 = vmatprep.subr.mxu0 0.0
          %697 = vmatpush2.msra.mxu0 0.0
          %698 = vmatprep.subr.mxu0 0.0
          %699 = vmatpush2.msra.mxu0 0.0
          %700 = vmatprep.subr.mxu0 0.0
          %701 = vmatpush2.msra.mxu0 0.0
          %702 = vmatprep.subr.mxu0 0.0
          %703 = vmatpush2.msra.mxu0 0.0
          %704 = vmatprep.subr.mxu0 0.0
          %705 = vmatpush2.msra.mxu0 0.0
          %706 = vmatprep.subr.mxu0 0.0
          %707 = vmatpush2.msra.mxu0 0.0
          %708 = vmatprep.subr.mxu0 0.0
          %709 = vmatpush2.msra.mxu0 0.0
          %710 = vmatprep.subr.mxu0 0.0
          %711 = vmatpush2.msra.mxu0 0.0
          %712 = vmatprep.subr.mxu0 0.0
          %713 = vmatpush2.msra.mxu0 0.0
          %714 = vmatprep.subr.mxu0 0.0
          %715 = vmatpush2.msra.mxu0 0.0
          %716 = vmatprep.subr.mxu0 0.0
          %717 = vmatpush2.msra.mxu0 0.0
          %718 = vmatprep.subr.mxu0 0.0
          %719 = vmatpush2.msra.mxu0 0.0
          %720 = vmatprep.subr.mxu0 0.0
          %721 = vmatpush2.msra.mxu0 0.0
          %722 = vmatprep.mubr.f32.mxu0 0.0
          %723 = vmatmul.mubr.f32.gmra.mxu0 %v626
          %v724 = vpop.f32.mrf.mxu0
          %v725 = vadd.f32 0.0, %v724
          %v726 = vpop.f32.mrf.mxu0
          %727 = vmatprep.mubr.f32.mxu0 0.0
          %728 = vmatmul.mubr.f32.gmra.mxu0 %v627
          %v729 = vpop.f32.mrf.mxu0
          %v730 = vadd.f32 0.0, %v729
          %v731 = vpop.f32.mrf.mxu0
          %732 = vmatprep.mubr.f32.mxu0 0.0
          %733 = vmatmul.mubr.f32.gmra.mxu0 %v628
          %v734 = vpop.f32.mrf.mxu0
          %v735 = vadd.f32 0.0, %v734
          %v736 = vpop.f32.mrf.mxu0
          %737 = vmatprep.mubr.f32.mxu0 0.0
          %738 = vmatmul.mubr.f32.gmra.mxu0 %v629
          %v739 = vpop.f32.mrf.mxu0
          %v740 = vadd.f32 0.0, %v739
          %v741 = vpop.f32.mrf.mxu0
          %742 = vmatprep.mubr.f32.mxu0 0.0
          %743 = vmatmul.mubr.f32.gmra.mxu0 %v630
          %v744 = vpop.f32.mrf.mxu0
          %v745 = vadd.f32 0.0, %v744
          %v746 = vpop.f32.mrf.mxu0
          %747 = vmatprep.mubr.f32.mxu0 0.0
          %748 = vmatmul.mubr.f32.gmra.mxu0 %v631
          %v749 = vpop.f32.mrf.mxu0
          %v750 = vadd.f32 0.0, %v749
          %v751 = vpop.f32.mrf.mxu0
          %752 = vmatprep.mubr.f32.mxu0 0.0
          %753 = vmatmul.mubr.f32.gmra.mxu0 %v632
          %v754 = vpop.f32.mrf.mxu0
          %v755 = vadd.f32 0.0, %v754
          %v756 = vpop.f32.mrf.mxu0
          %757 = vmatprep.mubr.f32.mxu0 0.0
          %758 = vmatmul.mubr.f32.gmra.mxu0 %v633
          %v759 = vpop.f32.mrf.mxu0
          %v760 = vadd.f32 0.0, %v759
          %v761 = vpop.f32.mrf.mxu0
          %762 = vmatprep.mubr.f32.mxu0 0.0
          %763 = vmatmul.mubr.f32.gmra.mxu0 %v634
          %v764 = vpop.f32.mrf.mxu0
          %v765 = vadd.f32 0.0, %v764
          %v766 = vpop.f32.mrf.mxu0
          %767 = vmatprep.mubr.f32.mxu0 0.0
          %768 = vmatmul.mubr.f32.gmra.mxu0 %v635
          %v769 = vpop.f32.mrf.mxu0
          %v770 = vadd.f32 0.0, %v769
          %v771 = vpop.f32.mrf.mxu0
          %772 = vmatprep.mubr.f32.mxu0 0.0
          %773 = vmatmul.mubr.f32.gmra.mxu0 %v636
          %v774 = vpop.f32.mrf.mxu0
          %v775 = vadd.f32 0.0, %v774
          %v776 = vpop.f32.mrf.mxu0
          %777 = vmatprep.mubr.f32.mxu0 0.0
          %778 = vmatmul.mubr.f32.gmra.mxu0 %v637
          %v779 = vpop.f32.mrf.mxu0
          %v780 = vadd.f32 0.0, %v779
          %v781 = vpop.f32.mrf.mxu0
          %782 = vmatprep.mubr.f32.mxu0 0.0
          %783 = vmatmul.mubr.f32.gmra.mxu0 %v638
          %v784 = vpop.f32.mrf.mxu0
          %v785 = vadd.f32 0.0, %v784
          %v786 = vpop.f32.mrf.mxu0
          %787 = vmatprep.mubr.f32.mxu0 0.0
          %788 = vmatmul.mubr.f32.gmra.mxu0 %v639
          %v789 = vpop.f32.mrf.mxu0
          %v790 = vadd.f32 0.0, %v789
          %v791 = vpop.f32.mrf.mxu0
          %792 = vmatprep.mubr.f32.mxu0 0.0
          %793 = vmatmul.mubr.f32.gmra.mxu0 %v640
          %v794 = vpop.f32.mrf.mxu0
          %v795 = vadd.f32 0.0, %v794
          %v796 = vpop.f32.mrf.mxu0
          %797 = vmatprep.mubr.f32.mxu0 0.0
          %798 = vmatmul.mubr.f32.gmra.mxu0 %v641
          %v799 = vpop.f32.mrf.mxu0
          %v800 = vadd.f32 0.0, %v799
          %v801 = vpop.f32.mrf.mxu0
          %802 = vdwg.mxu0
          %803 = vst [vmem:[#allocation2] sm:$0xff] %v725
          %804 = vst [vmem:[#allocation2 + $0x8] sm:$0xff] %v730
          %805 = vst [vmem:[#allocation2 + $0x10] sm:$0xff] %v735
          %806 = vst [vmem:[#allocation2 + $0x18] sm:$0xff] %v740
          %807 = vst [vmem:[#allocation2 + $0x20] sm:$0xff] %v745
          %808 = vst [vmem:[#allocation2 + $0x28] sm:$0xff] %v750
          %809 = vst [vmem:[#allocation2 + $0x30] sm:$0xff] %v755
          %810 = vst [vmem:[#allocation2 + $0x38] sm:$0xff] %v760
          %811 = vst [vmem:[#allocation2 + $0x40] sm:$0xff] %v765
          %812 = vst [vmem:[#allocation2 + $0x48] sm:$0xff] %v770
          %813 = vst [vmem:[#allocation2 + $0x50] sm:$0xff] %v775
          %814 = vst [vmem:[#allocation2 + $0x58] sm:$0xff] %v780
          %815 = vst [vmem:[#allocation2 + $0x60] sm:$0xff] %v785
          %816 = vst [vmem:[#allocation2 + $0x68] sm:$0xff] %v790
          %817 = vst [vmem:[#allocation2 + $0x70] sm:$0xff] %v795
          %818 = vst [vmem:[#allocation2 + $0x78] sm:$0xff] %v800
          %v819 = vld [vmem:[#allocation12] sm:$0xff]
          %v820 = vld [vmem:[#allocation12 + $0x8] sm:$0xff]
          %v821 = vld [vmem:[#allocation12 + $0x10] sm:$0xff]
          %v822 = vld [vmem:[#allocation12 + $0x18] sm:$0xff]
          %v823 = vld [vmem:[#allocation12 + $0x20] sm:$0xff]
          %v824 = vld [vmem:[#allocation12 + $0x28] sm:$0xff]
          %v825 = vld [vmem:[#allocation12 + $0x30] sm:$0xff]
          %v826 = vld [vmem:[#allocation12 + $0x38] sm:$0xff]
          %v827 = vld [vmem:[#allocation12 + $0x40] sm:$0xff]
          %v828 = vld [vmem:[#allocation12 + $0x48] sm:$0xff]
          %v829 = vld [vmem:[#allocation12 + $0x50] sm:$0xff]
          %v830 = vld [vmem:[#allocation12 + $0x58] sm:$0xff]
          %v831 = vld [vmem:[#allocation12 + $0x60] sm:$0xff]
          %v832 = vld [vmem:[#allocation12 + $0x68] sm:$0xff]
          %v833 = vld [vmem:[#allocation12 + $0x70] sm:$0xff]
          %v834 = vld [vmem:[#allocation12 + $0x78] sm:$0xff]
          %835 = vmatprep.subr.mxu0 0.0
          %836 = vmatpush1.msra.mxu0 %v834
          %837 = vmatprep.subr.mxu0 0.0
          %838 = vmatpush1.msra.mxu0 %v833
          %839 = vmatprep.subr.mxu0 0.0
          %840 = vmatpush1.msra.mxu0 %v832
          %841 = vmatprep.subr.mxu0 0.0
          %842 = vmatpush1.msra.mxu0 %v831
          %843 = vmatprep.subr.mxu0 0.0
          %844 = vmatpush1.msra.mxu0 %v830
          %845 = vmatprep.subr.mxu0 0.0
          %846 = vmatpush1.msra.mxu0 %v829
          %847 = vmatprep.subr.mxu0 0.0
          %848 = vmatpush1.msra.mxu0 %v828
          %849 = vmatprep.subr.mxu0 0.0
          %850 = vmatpush1.msra.mxu0 %v827
          %851 = vmatprep.subr.mxu0 0.0
          %852 = vmatpush1.msra.mxu0 %v826
          %853 = vmatprep.subr.mxu0 0.0
          %854 = vmatpush1.msra.mxu0 %v825
          %855 = vmatprep.subr.mxu0 0.0
          %856 = vmatpush1.msra.mxu0 %v824
          %857 = vmatprep.subr.mxu0 0.0
          %858 = vmatpush1.msra.mxu0 %v823
          %859 = vmatprep.subr.mxu0 0.0
          %860 = vmatpush1.msra.mxu0 %v822
          %861 = vmatprep.subr.mxu0 0.0
          %862 = vmatpush1.msra.mxu0 %v821
          %863 = vmatprep.subr.mxu0 0.0
          %864 = vmatpush1.msra.mxu0 %v820
          %865 = vmatprep.subr.mxu0 0.0
          %866 = vmatpush1.msra.mxu0 %v819
          %867 = vmatprep.subr.mxu0 0.0
          %868 = vmatpush2.msra.mxu0 0.0
          %869 = vmatprep.subr.mxu0 0.0
          %870 = vmatpush2.msra.mxu0 0.0
          %871 = vmatprep.subr.mxu0 0.0
          %872 = vmatpush2.msra.mxu0 0.0
          %873 = vmatprep.subr.mxu0 0.0
          %874 = vmatpush2.msra.mxu0 0.0
          %875 = vmatprep.subr.mxu0 0.0
          %876 = vmatpush2.msra.mxu0 0.0
          %877 = vmatprep.subr.mxu0 0.0
          %878 = vmatpush2.msra.mxu0 0.0
          %879 = vmatprep.subr.mxu0 0.0
          %880 = vmatpush2.msra.mxu0 0.0
          %881 = vmatprep.subr.mxu0 0.0
          %882 = vmatpush2.msra.mxu0 0.0
          %883 = vmatprep.subr.mxu0 0.0
          %884 = vmatpush2.msra.mxu0 0.0
          %885 = vmatprep.subr.mxu0 0.0
          %886 = vmatpush2.msra.mxu0 0.0
          %887 = vmatprep.subr.mxu0 0.0
          %888 = vmatpush2.msra.mxu0 0.0
          %889 = vmatprep.subr.mxu0 0.0
          %890 = vmatpush2.msra.mxu0 0.0
          %891 = vmatprep.subr.mxu0 0.0
          %892 = vmatpush2.msra.mxu0 0.0
          %893 = vmatprep.subr.mxu0 0.0
          %894 = vmatpush2.msra.mxu0 0.0
          %895 = vmatprep.subr.mxu0 0.0
          %896 = vmatpush2.msra.mxu0 0.0
          %897 = vmatprep.subr.mxu0 0.0
          %898 = vmatpush2.msra.mxu0 0.0
          %899 = vmatprep.mubr.f32.mxu0 0.0
          %900 = vmatmul.mubr.f32.gmra.mxu0 %v626
          %v901 = vpop.f32.mrf.mxu0
          %v902 = vadd.f32 0.0, %v901
          %v903 = vpop.f32.mrf.mxu0
          %904 = vmatprep.mubr.f32.mxu0 0.0
          %905 = vmatmul.mubr.f32.gmra.mxu0 %v627
          %v906 = vpop.f32.mrf.mxu0
          %v907 = vadd.f32 0.0, %v906
          %v908 = vpop.f32.mrf.mxu0
          %909 = vmatprep.mubr.f32.mxu0 0.0
          %910 = vmatmul.mubr.f32.gmra.mxu0 %v628
          %v911 = vpop.f32.mrf.mxu0
          %v912 = vadd.f32 0.0, %v911
          %v913 = vpop.f32.mrf.mxu0
          %914 = vmatprep.mubr.f32.mxu0 0.0
          %915 = vmatmul.mubr.f32.gmra.mxu0 %v629
          %v916 = vpop.f32.mrf.mxu0
          %v917 = vadd.f32 0.0, %v916
          %v918 = vpop.f32.mrf.mxu0
          %919 = vmatprep.mubr.f32.mxu0 0.0
          %920 = vmatmul.mubr.f32.gmra.mxu0 %v630
          %v921 = vpop.f32.mrf.mxu0
          %v922 = vadd.f32 0.0, %v921
          %v923 = vpop.f32.mrf.mxu0
          %924 = vmatprep.mubr.f32.mxu0 0.0
          %925 = vmatmul.mubr.f32.gmra.mxu0 %v631
          %v926 = vpop.f32.mrf.mxu0
          %v927 = vadd.f32 0.0, %v926
          %v928 = vpop.f32.mrf.mxu0
          %929 = vmatprep.mubr.f32.mxu0 0.0
          %930 = vmatmul.mubr.f32.gmra.mxu0 %v632
          %v931 = vpop.f32.mrf.mxu0
          %v932 = vadd.f32 0.0, %v931
          %v933 = vpop.f32.mrf.mxu0
          %934 = vmatprep.mubr.f32.mxu0 0.0
          %935 = vmatmul.mubr.f32.gmra.mxu0 %v633
          %v936 = vpop.f32.mrf.mxu0
          %v937 = vadd.f32 0.0, %v936
          %v938 = vpop.f32.mrf.mxu0
          %939 = vmatprep.mubr.f32.mxu0 0.0
          %940 = vmatmul.mubr.f32.gmra.mxu0 %v634
          %v941 = vpop.f32.mrf.mxu0
          %v942 = vadd.f32 0.0, %v941
          %v943 = vpop.f32.mrf.mxu0
          %944 = vmatprep.mubr.f32.mxu0 0.0
          %945 = vmatmul.mubr.f32.gmra.mxu0 %v635
          %v946 = vpop.f32.mrf.mxu0
          %v947 = vadd.f32 0.0, %v946
          %v948 = vpop.f32.mrf.mxu0
          %949 = vmatprep.mubr.f32.mxu0 0.0
          %950 = vmatmul.mubr.f32.gmra.mxu0 %v636
          %v951 = vpop.f32.mrf.mxu0
          %v952 = vadd.f32 0.0, %v951
          %v953 = vpop.f32.mrf.mxu0
          %954 = vmatprep.mubr.f32.mxu0 0.0
          %955 = vmatmul.mubr.f32.gmra.mxu0 %v637
          %v956 = vpop.f32.mrf.mxu0
          %v957 = vadd.f32 0.0, %v956
          %v958 = vpop.f32.mrf.mxu0
          %959 = vmatprep.mubr.f32.mxu0 0.0
          %960 = vmatmul.mubr.f32.gmra.mxu0 %v638
          %v961 = vpop.f32.mrf.mxu0
          %v962 = vadd.f32 0.0, %v961
          %v963 = vpop.f32.mrf.mxu0
          %964 = vmatprep.mubr.f32.mxu0 0.0
          %965 = vmatmul.mubr.f32.gmra.mxu0 %v639
          %v966 = vpop.f32.mrf.mxu0
          %v967 = vadd.f32 0.0, %v966
          %v968 = vpop.f32.mrf.mxu0
          %969 = vmatprep.mubr.f32.mxu0 0.0
          %970 = vmatmul.mubr.f32.gmra.mxu0 %v640
          %v971 = vpop.f32.mrf.mxu0
          %v972 = vadd.f32 0.0, %v971
          %v973 = vpop.f32.mrf.mxu0
          %974 = vmatprep.mubr.f32.mxu0 0.0
          %975 = vmatmul.mubr.f32.gmra.mxu0 %v641
          %v976 = vpop.f32.mrf.mxu0
          %v977 = vadd.f32 0.0, %v976
          %v978 = vpop.f32.mrf.mxu0
          %979 = vdwg.mxu0
          %980 = vst [vmem:[#allocation3] sm:$0xff] %v902
          %981 = vst [vmem:[#allocation3 + $0x8] sm:$0xff] %v907
          %982 = vst [vmem:[#allocation3 + $0x10] sm:$0xff] %v912
          %983 = vst [vmem:[#allocation3 + $0x18] sm:$0xff] %v917
          %984 = vst [vmem:[#allocation3 + $0x20] sm:$0xff] %v922
          %985 = vst [vmem:[#allocation3 + $0x28] sm:$0xff] %v927
          %986 = vst [vmem:[#allocation3 + $0x30] sm:$0xff] %v932
          %987 = vst [vmem:[#allocation3 + $0x38] sm:$0xff] %v937
          %988 = vst [vmem:[#allocation3 + $0x40] sm:$0xff] %v942
          %989 = vst [vmem:[#allocation3 + $0x48] sm:$0xff] %v947
          %990 = vst [vmem:[#allocation3 + $0x50] sm:$0xff] %v952
          %991 = vst [vmem:[#allocation3 + $0x58] sm:$0xff] %v957
          %992 = vst [vmem:[#allocation3 + $0x60] sm:$0xff] %v962
          %993 = vst [vmem:[#allocation3 + $0x68] sm:$0xff] %v967
          %994 = vst [vmem:[#allocation3 + $0x70] sm:$0xff] %v972
          %995 = vst [vmem:[#allocation3 + $0x78] sm:$0xff] %v977
        $region112: #{tpu_custom_call.1} parent=75 // pred_fallthru
          _
        %s996 = smul.u32 %s42, 64
        %s997 = scalar_lea.vmem %s540, %s996 [#allocation4]
        %v998 = vld [vmem:[%s997] sm:$0xff]
        %v999 = vld [vmem:[%s997 + $0x8] sm:$0xff]
        %v1000 = vld [vmem:[%s997 + $0x10] sm:$0xff]
        %v1001 = vld [vmem:[%s997 + $0x18] sm:$0xff]
        %v1002 = vld [vmem:[%s997 + $0x20] sm:$0xff]
        %v1003 = vld [vmem:[%s997 + $0x28] sm:$0xff]
        %v1004 = vld [vmem:[%s997 + $0x30] sm:$0xff]
        %v1005 = vld [vmem:[%s997 + $0x38] sm:$0xff]
        %v1006 = vld [vmem:[#allocation9] sm:$0xff]
        %v1007 = vld [vmem:[#allocation9 + $0x8] sm:$0xff]
        %v1008 = vld [vmem:[#allocation9 + $0x10] sm:$0xff]
        %v1009 = vld [vmem:[#allocation9 + $0x18] sm:$0xff]
        %v1010 = vld [vmem:[#allocation9 + $0x20] sm:$0xff]
        %v1011 = vld [vmem:[#allocation9 + $0x28] sm:$0xff]
        %v1012 = vld [vmem:[#allocation9 + $0x30] sm:$0xff]
        %v1013 = vld [vmem:[#allocation9 + $0x38] sm:$0xff]
        %v1014 = vld [vmem:[#allocation9 + $0x40] sm:$0xff]
        %v1015 = vld [vmem:[#allocation9 + $0x48] sm:$0xff]
        %v1016 = vld [vmem:[#allocation9 + $0x50] sm:$0xff]
        %v1017 = vld [vmem:[#allocation9 + $0x58] sm:$0xff]
        %v1018 = vld [vmem:[#allocation9 + $0x60] sm:$0xff]
        %v1019 = vld [vmem:[#allocation9 + $0x68] sm:$0xff]
        %v1020 = vld [vmem:[#allocation9 + $0x70] sm:$0xff]
        %v1021 = vld [vmem:[#allocation9 + $0x78] sm:$0xff]
        %1022 = vmatprep.subr.mxu0 0.0
        %1023 = vmatpush1.msra.mxu0 %v1021
        %1024 = vmatprep.subr.mxu0 0.0
        %1025 = vmatpush1.msra.mxu0 %v1020
        %1026 = vmatprep.subr.mxu0 0.0
        %1027 = vmatpush1.msra.mxu0 %v1019
        %1028 = vmatprep.subr.mxu0 0.0
        %1029 = vmatpush1.msra.mxu0 %v1018
        %1030 = vmatprep.subr.mxu0 0.0
        %1031 = vmatpush1.msra.mxu0 %v1017
        %1032 = vmatprep.subr.mxu0 0.0
        %1033 = vmatpush1.msra.mxu0 %v1016
        %1034 = vmatprep.subr.mxu0 0.0
        %1035 = vmatpush1.msra.mxu0 %v1015
        %1036 = vmatprep.subr.mxu0 0.0
        %1037 = vmatpush1.msra.mxu0 %v1014
        %1038 = vmatprep.subr.mxu0 0.0
        %1039 = vmatpush1.msra.mxu0 %v1013
        %1040 = vmatprep.subr.mxu0 0.0
        %1041 = vmatpush1.msra.mxu0 %v1012
        %1042 = vmatprep.subr.mxu0 0.0
        %1043 = vmatpush1.msra.mxu0 %v1011
        %1044 = vmatprep.subr.mxu0 0.0
        %1045 = vmatpush1.msra.mxu0 %v1010
        %1046 = vmatprep.subr.mxu0 0.0
        %1047 = vmatpush1.msra.mxu0 %v1009
        %1048 = vmatprep.subr.mxu0 0.0
        %1049 = vmatpush1.msra.mxu0 %v1008
        %1050 = vmatprep.subr.mxu0 0.0
        %1051 = vmatpush1.msra.mxu0 %v1007
        %1052 = vmatprep.subr.mxu0 0.0
        %1053 = vmatpush1.msra.mxu0 %v1006
        %1054 = vmatprep.subr.mxu0 0.0
        %1055 = vmatpush2.msra.mxu0 0.0
        %1056 = vmatprep.subr.mxu0 0.0
        %1057 = vmatpush2.msra.mxu0 0.0
        %1058 = vmatprep.subr.mxu0 0.0
        %1059 = vmatpush2.msra.mxu0 0.0
        %1060 = vmatprep.subr.mxu0 0.0
        %1061 = vmatpush2.msra.mxu0 0.0
        %1062 = vmatprep.subr.mxu0 0.0
        %1063 = vmatpush2.msra.mxu0 0.0
        %1064 = vmatprep.subr.mxu0 0.0
        %1065 = vmatpush2.msra.mxu0 0.0
        %1066 = vmatprep.subr.mxu0 0.0
        %1067 = vmatpush2.msra.mxu0 0.0
        %1068 = vmatprep.subr.mxu0 0.0
        %1069 = vmatpush2.msra.mxu0 0.0
        %1070 = vmatprep.subr.mxu0 0.0
        %1071 = vmatpush2.msra.mxu0 0.0
        %1072 = vmatprep.subr.mxu0 0.0
        %1073 = vmatpush2.msra.mxu0 0.0
        %1074 = vmatprep.subr.mxu0 0.0
        %1075 = vmatpush2.msra.mxu0 0.0
        %1076 = vmatprep.subr.mxu0 0.0
        %1077 = vmatpush2.msra.mxu0 0.0
        %1078 = vmatprep.subr.mxu0 0.0
        %1079 = vmatpush2.msra.mxu0 0.0
        %1080 = vmatprep.subr.mxu0 0.0
        %1081 = vmatpush2.msra.mxu0 0.0
        %1082 = vmatprep.subr.mxu0 0.0
        %1083 = vmatpush2.msra.mxu0 0.0
        %1084 = vmatprep.subr.mxu0 0.0
        %1085 = vmatpush2.msra.mxu0 0.0
        %1086 = vmatprep.mubr.f32.mxu0 0.0
        %1087 = vmatmul.mubr.f32.gmra.mxu0 %v998
        %v1088 = vpop.f32.mrf.mxu0
        %v1089 = vadd.f32 0.0, %v1088
        %v1090 = vpop.f32.mrf.mxu0
        %1091 = vmatprep.mubr.f32.mxu0 0.0
        %1092 = vmatmul.mubr.f32.gmra.mxu0 %v999
        %v1093 = vpop.f32.mrf.mxu0
        %v1094 = vadd.f32 0.0, %v1093
        %v1095 = vpop.f32.mrf.mxu0
        %1096 = vmatprep.mubr.f32.mxu0 0.0
        %1097 = vmatmul.mubr.f32.gmra.mxu0 %v1000
        %v1098 = vpop.f32.mrf.mxu0
        %v1099 = vadd.f32 0.0, %v1098
        %v1100 = vpop.f32.mrf.mxu0
        %1101 = vmatprep.mubr.f32.mxu0 0.0
        %1102 = vmatmul.mubr.f32.gmra.mxu0 %v1001
        %v1103 = vpop.f32.mrf.mxu0
        %v1104 = vadd.f32 0.0, %v1103
        %v1105 = vpop.f32.mrf.mxu0
        %1106 = vmatprep.mubr.f32.mxu0 0.0
        %1107 = vmatmul.mubr.f32.gmra.mxu0 %v1002
        %v1108 = vpop.f32.mrf.mxu0
        %v1109 = vadd.f32 0.0, %v1108
        %v1110 = vpop.f32.mrf.mxu0
        %1111 = vmatprep.mubr.f32.mxu0 0.0
        %1112 = vmatmul.mubr.f32.gmra.mxu0 %v1003
        %v1113 = vpop.f32.mrf.mxu0
        %v1114 = vadd.f32 0.0, %v1113
        %v1115 = vpop.f32.mrf.mxu0
        %1116 = vmatprep.mubr.f32.mxu0 0.0
        %1117 = vmatmul.mubr.f32.gmra.mxu0 %v1004
        %v1118 = vpop.f32.mrf.mxu0
        %v1119 = vadd.f32 0.0, %v1118
        %v1120 = vpop.f32.mrf.mxu0
        %1121 = vmatprep.mubr.f32.mxu0 0.0
        %1122 = vmatmul.mubr.f32.gmra.mxu0 %v1005
        %v1123 = vpop.f32.mrf.mxu0
        %v1124 = vadd.f32 0.0, %v1123
        %v1125 = vpop.f32.mrf.mxu0
        %1126 = vdwg.mxu0
        %v1127 = vmul.f32 %v1089, 0.17677669
        %v1128 = vmul.f32 %v1094, 0.17677669
        %v1129 = vmul.f32 %v1099, 0.17677669
        %v1130 = vmul.f32 %v1104, 0.17677669
        %v1131 = vmul.f32 %v1109, 0.17677669
        %v1132 = vmul.f32 %v1114, 0.17677669
        %v1133 = vmul.f32 %v1119, 0.17677669
        %v1134 = vmul.f32 %v1124, 0.17677669
        %v1135 = vld [vmem:[#allocation2] sm:$0xff]
        %v1136 = vld [vmem:[#allocation2 + $0x8] sm:$0xff]
        %v1137 = vld [vmem:[#allocation2 + $0x10] sm:$0xff]
        %v1138 = vld [vmem:[#allocation2 + $0x18] sm:$0xff]
        %v1139 = vld [vmem:[#allocation2 + $0x20] sm:$0xff]
        %v1140 = vld [vmem:[#allocation2 + $0x28] sm:$0xff]
        %v1141 = vld [vmem:[#allocation2 + $0x30] sm:$0xff]
        %v1142 = vld [vmem:[#allocation2 + $0x38] sm:$0xff]
        %v1143 = vld [vmem:[#allocation2 + $0x40] sm:$0xff]
        %v1144 = vld [vmem:[#allocation2 + $0x48] sm:$0xff]
        %v1145 = vld [vmem:[#allocation2 + $0x50] sm:$0xff]
        %v1146 = vld [vmem:[#allocation2 + $0x58] sm:$0xff]
        %v1147 = vld [vmem:[#allocation2 + $0x60] sm:$0xff]
        %v1148 = vld [vmem:[#allocation2 + $0x68] sm:$0xff]
        %v1149 = vld [vmem:[#allocation2 + $0x70] sm:$0xff]
        %v1150 = vld [vmem:[#allocation2 + $0x78] sm:$0xff]
        %v1151 = vld [vmem:[#allocation3] sm:$0xff]
        %v1152 = vld [vmem:[#allocation3 + $0x8] sm:$0xff]
        %v1153 = vld [vmem:[#allocation3 + $0x10] sm:$0xff]
        %v1154 = vld [vmem:[#allocation3 + $0x18] sm:$0xff]
        %v1155 = vld [vmem:[#allocation3 + $0x20] sm:$0xff]
        %v1156 = vld [vmem:[#allocation3 + $0x28] sm:$0xff]
        %v1157 = vld [vmem:[#allocation3 + $0x30] sm:$0xff]
        %v1158 = vld [vmem:[#allocation3 + $0x38] sm:$0xff]
        %v1159 = vld [vmem:[#allocation3 + $0x40] sm:$0xff]
        %v1160 = vld [vmem:[#allocation3 + $0x48] sm:$0xff]
        %v1161 = vld [vmem:[#allocation3 + $0x50] sm:$0xff]
        %v1162 = vld [vmem:[#allocation3 + $0x58] sm:$0xff]
        %v1163 = vld [vmem:[#allocation3 + $0x60] sm:$0xff]
        %v1164 = vld [vmem:[#allocation3 + $0x68] sm:$0xff]
        %v1165 = vld [vmem:[#allocation3 + $0x70] sm:$0xff]
        %v1166 = vld [vmem:[#allocation3 + $0x78] sm:$0xff]
        %v1167 = vld [vmem:[%s548] sm:$0x1]
        %vm1168 = vcmp.gt.f32.partialorder %v1167, 0.0
        %v1169 = vsel %vm1168, 0.0, -1e+30
        %v1170 = vld [vmem:[#allocation13] sm:$0xff]
        %v1171 = vld [vmem:[#allocation13 + $0x8] sm:$0xff]
        %v1172 = vld [vmem:[#allocation13 + $0x10] sm:$0xff]
        %v1173 = vld [vmem:[#allocation13 + $0x18] sm:$0xff]
        %v1174 = vld [vmem:[#allocation13 + $0x20] sm:$0xff]
        %v1175 = vld [vmem:[#allocation13 + $0x28] sm:$0xff]
        %v1176 = vld [vmem:[#allocation13 + $0x30] sm:$0xff]
        %v1177 = vld [vmem:[#allocation13 + $0x38] sm:$0xff]
        %v1178 = vld [vmem:[#allocation13 + $0x40] sm:$0xff]
        %v1179 = vld [vmem:[#allocation13 + $0x48] sm:$0xff]
        %v1180 = vld [vmem:[#allocation13 + $0x50] sm:$0xff]
        %v1181 = vld [vmem:[#allocation13 + $0x58] sm:$0xff]
        %v1182 = vld [vmem:[#allocation13 + $0x60] sm:$0xff]
        %v1183 = vld [vmem:[#allocation13 + $0x68] sm:$0xff]
        %v1184 = vld [vmem:[#allocation13 + $0x70] sm:$0xff]
        %v1185 = vld [vmem:[#allocation13 + $0x78] sm:$0xff]
        %v1187 = vlaneseq
        %v1188 = vshrl.u32 %v1187, 7
        %v1189 = vsub.s32 0, %v1188
        %v1190 = vrot.slane %v1169, %v1189
        %vm1192 = vcmask 261120
        %v1194 = vsel %vm1192, %v1127, 0
        %v1197 = vsel %vm1192, %v1128, 0
        %v1200 = vsel %vm1192, %v1129, 0
        %v1203 = vsel %vm1192, %v1130, 0
        %v1206 = vsel %vm1192, %v1131, 0
        %v1209 = vsel %vm1192, %v1132, 0
        %v1212 = vsel %vm1192, %v1133, 0
        %v1215 = vsel %vm1192, %v1134, 0
        %v1218 = vsel %vm1192, %v1135, 0
        %v1221 = vsel %vm1192, %v1136, 0
        %v1224 = vsel %vm1192, %v1137, 0
        %v1227 = vsel %vm1192, %v1138, 0
        %v1230 = vsel %vm1192, %v1139, 0
        %v1233 = vsel %vm1192, %v1140, 0
        %v1236 = vsel %vm1192, %v1141, 0
        %v1239 = vsel %vm1192, %v1142, 0
        %v1242 = vsel %vm1192, %v1143, 0
        %v1245 = vsel %vm1192, %v1144, 0
        %v1248 = vsel %vm1192, %v1145, 0
        %v1251 = vsel %vm1192, %v1146, 0
        %v1254 = vsel %vm1192, %v1147, 0
        %v1257 = vsel %vm1192, %v1148, 0
        %v1260 = vsel %vm1192, %v1149, 0
        %v1263 = vsel %vm1192, %v1150, 0
        %1265 = vmatprep.subr.mxu0 0.0
        %1266 = vmatpush1.xpose.msra.mxu0 %v1263
        %1267 = vmatprep.subr.mxu0 0.0
        %1268 = vmatpush1.xpose.msra.mxu0 %v1260
        %1269 = vmatprep.subr.mxu0 0.0
        %1270 = vmatpush1.xpose.msra.mxu0 %v1257
        %1271 = vmatprep.subr.mxu0 0.0
        %1272 = vmatpush1.xpose.msra.mxu0 %v1254
        %1273 = vmatprep.subr.mxu0 0.0
        %1274 = vmatpush1.xpose.msra.mxu0 %v1251
        %1275 = vmatprep.subr.mxu0 0.0
        %1276 = vmatpush1.xpose.msra.mxu0 %v1248
        %1277 = vmatprep.subr.mxu0 0.0
        %1278 = vmatpush1.xpose.msra.mxu0 %v1245
        %1279 = vmatprep.subr.mxu0 0.0
        %1280 = vmatpush1.xpose.msra.mxu0 %v1242
        %1281 = vmatprep.subr.mxu0 0.0
        %1282 = vmatpush1.xpose.msra.mxu0 %v1239
        %1283 = vmatprep.subr.mxu0 0.0
        %1284 = vmatpush1.xpose.msra.mxu0 %v1236
        %1285 = vmatprep.subr.mxu0 0.0
        %1286 = vmatpush1.xpose.msra.mxu0 %v1233
        %1287 = vmatprep.subr.mxu0 0.0
        %1288 = vmatpush1.xpose.msra.mxu0 %v1230
        %1289 = vmatprep.subr.mxu0 0.0
        %1290 = vmatpush1.xpose.msra.mxu0 %v1227
        %1291 = vmatprep.subr.mxu0 0.0
        %1292 = vmatpush1.xpose.msra.mxu0 %v1224
        %1293 = vmatprep.subr.mxu0 0.0
        %1294 = vmatpush1.xpose.msra.mxu0 %v1221
        %1295 = vmatprep.subr.mxu0 0.0
        %1296 = vmatpush1.xpose.msra.mxu0 %v1218
        %1297 = vmatprep.subr.mxu0 0.0
        %1298 = vmatpush2.xpose.msra.mxu0 0.0
        %1299 = vmatprep.subr.mxu0 0.0
        %1300 = vmatpush2.xpose.msra.mxu0 0.0
        %1301 = vmatprep.subr.mxu0 0.0
        %1302 = vmatpush2.xpose.msra.mxu0 0.0
        %1303 = vmatprep.subr.mxu0 0.0
        %1304 = vmatpush2.xpose.msra.mxu0 0.0
        %1305 = vmatprep.subr.mxu0 0.0
        %1306 = vmatpush2.xpose.msra.mxu0 0.0
        %1307 = vmatprep.subr.mxu0 0.0
        %1308 = vmatpush2.xpose.msra.mxu0 0.0
        %1309 = vmatprep.subr.mxu0 0.0
        %1310 = vmatpush2.xpose.msra.mxu0 0.0
        %1311 = vmatprep.subr.mxu0 0.0
        %1312 = vmatpush2.xpose.msra.mxu0 0.0
        %1313 = vmatprep.subr.mxu0 0.0
        %1314 = vmatpush2.xpose.msra.mxu0 0.0
        %1315 = vmatprep.subr.mxu0 0.0
        %1316 = vmatpush2.xpose.msra.mxu0 0.0
        %1317 = vmatprep.subr.mxu0 0.0
        %1318 = vmatpush2.xpose.msra.mxu0 0.0
        %1319 = vmatprep.subr.mxu0 0.0
        %1320 = vmatpush2.xpose.msra.mxu0 0.0
        %1321 = vmatprep.subr.mxu0 0.0
        %1322 = vmatpush2.xpose.msra.mxu0 0.0
        %1323 = vmatprep.subr.mxu0 0.0
        %1324 = vmatpush2.xpose.msra.mxu0 0.0
        %1325 = vmatprep.subr.mxu0 0.0
        %1326 = vmatpush2.xpose.msra.mxu0 0.0
        %1327 = vmatprep.subr.mxu0 0.0
        %1328 = vmatpush2.xpose.msra.mxu0 0.0
        %1329 = vmatprep.mubr.f32.mxu0 0.0
        %1330 = vmatmul.mubr.f32.gmra.mxu0 %v1194
        %v1331 = vpop.f32.mrf.mxu0
        %v1332 = vadd.f32 %v1190, %v1331
        %v1333 = vpop.f32.mrf.mxu0
        %1334 = vmatprep.mubr.f32.mxu0 0.0
        %1335 = vmatmul.mubr.f32.gmra.mxu0 %v1197
        %v1336 = vpop.f32.mrf.mxu0
        %v1337 = vadd.f32 %v1190, %v1336
        %v1338 = vpop.f32.mrf.mxu0
        %1339 = vmatprep.mubr.f32.mxu0 0.0
        %1340 = vmatmul.mubr.f32.gmra.mxu0 %v1200
        %v1341 = vpop.f32.mrf.mxu0
        %v1342 = vadd.f32 %v1190, %v1341
        %v1343 = vpop.f32.mrf.mxu0
        %1344 = vmatprep.mubr.f32.mxu0 0.0
        %1345 = vmatmul.mubr.f32.gmra.mxu0 %v1203
        %v1346 = vpop.f32.mrf.mxu0
        %v1347 = vadd.f32 %v1190, %v1346
        %v1348 = vpop.f32.mrf.mxu0
        %1349 = vmatprep.mubr.f32.mxu0 0.0
        %1350 = vmatmul.mubr.f32.gmra.mxu0 %v1206
        %v1351 = vpop.f32.mrf.mxu0
        %v1352 = vadd.f32 %v1190, %v1351
        %v1353 = vpop.f32.mrf.mxu0
        %1354 = vmatprep.mubr.f32.mxu0 0.0
        %1355 = vmatmul.mubr.f32.gmra.mxu0 %v1209
        %v1356 = vpop.f32.mrf.mxu0
        %v1357 = vadd.f32 %v1190, %v1356
        %v1358 = vpop.f32.mrf.mxu0
        %1359 = vmatprep.mubr.f32.mxu0 0.0
        %1360 = vmatmul.mubr.f32.gmra.mxu0 %v1212
        %v1361 = vpop.f32.mrf.mxu0
        %v1362 = vadd.f32 %v1190, %v1361
        %v1363 = vpop.f32.mrf.mxu0
        %1364 = vmatprep.mubr.f32.mxu0 0.0
        %1365 = vmatmul.mubr.f32.gmra.mxu0 %v1215
        %v1366 = vpop.f32.mrf.mxu0
        %v1367 = vadd.f32 %v1190, %v1366
        %v1368 = vpop.f32.mrf.mxu0
        %1369 = vdwg.mxu0
        %1370 = vmax.xlane.f32.xlu0 %v1332
        %v1371 = vpop.xlane.xlu0 %1370
        %1372 = vmax.xlane.f32.xlu0 %v1337
        %v1373 = vpop.xlane.xlu0 %1372
        %1374 = vmax.xlane.f32.xlu0 %v1342
        %v1375 = vpop.xlane.xlu0 %1374
        %1376 = vmax.xlane.f32.xlu0 %v1347
        %v1377 = vpop.xlane.xlu0 %1376
        %1378 = vmax.xlane.f32.xlu0 %v1352
        %v1379 = vpop.xlane.xlu0 %1378
        %1380 = vmax.xlane.f32.xlu0 %v1357
        %v1381 = vpop.xlane.xlu0 %1380
        %1382 = vmax.xlane.f32.xlu0 %v1362
        %v1383 = vpop.xlane.xlu0 %1382
        %1384 = vmax.xlane.f32.xlu0 %v1367
        %v1385 = vpop.xlane.xlu0 %1384
        %v1386 = vsub.f32 %v1332, %v1371
        %v1387 = vsub.f32 %v1337, %v1373
        %v1388 = vsub.f32 %v1342, %v1375
        %v1389 = vsub.f32 %v1347, %v1377
        %v1390 = vsub.f32 %v1352, %v1379
        %v1391 = vsub.f32 %v1357, %v1381
        %v1392 = vsub.f32 %v1362, %v1383
        %v1393 = vsub.f32 %v1367, %v1385
        %v1394 = vmul.f32 %v1386, 1.442695
        %v1395 = vpow.pop %v1394
        %v1396 = vmul.f32 %v1387, 1.442695
        %v1397 = vpow.pop %v1396
        %v1398 = vmul.f32 %v1388, 1.442695
        %v1399 = vpow.pop %v1398
        %v1400 = vmul.f32 %v1389, 1.442695
        %v1401 = vpow.pop %v1400
        %v1402 = vmul.f32 %v1390, 1.442695
        %v1403 = vpow.pop %v1402
        %v1404 = vmul.f32 %v1391, 1.442695
        %v1405 = vpow.pop %v1404
        %v1406 = vmul.f32 %v1392, 1.442695
        %v1407 = vpow.pop %v1406
        %v1408 = vmul.f32 %v1393, 1.442695
        %v1409 = vpow.pop %v1408
        %1410 = vadd.xlane.f32.xlu0 %v1395
        %v1411 = vpop.xlane.xlu0 %1410
        %1412 = vadd.xlane.f32.xlu0 %v1397
        %v1413 = vpop.xlane.xlu0 %1412
        %1414 = vadd.xlane.f32.xlu0 %v1399
        %v1415 = vpop.xlane.xlu0 %1414
        %1416 = vadd.xlane.f32.xlu0 %v1401
        %v1417 = vpop.xlane.xlu0 %1416
        %1418 = vadd.xlane.f32.xlu0 %v1403
        %v1419 = vpop.xlane.xlu0 %1418
        %1420 = vadd.xlane.f32.xlu0 %v1405
        %v1421 = vpop.xlane.xlu0 %1420
        %1422 = vadd.xlane.f32.xlu0 %v1407
        %v1423 = vpop.xlane.xlu0 %1422
        %1424 = vadd.xlane.f32.xlu0 %v1409
        %v1425 = vpop.xlane.xlu0 %1424
        %v1426 = vrcp.pop %v1411
        %v1427 = vrcp.pop %v1413
        %v1428 = vrcp.pop %v1415
        %v1429 = vrcp.pop %v1417
        %v1430 = vrcp.pop %v1419
        %v1431 = vrcp.pop %v1421
        %v1432 = vrcp.pop %v1423
        %v1433 = vrcp.pop %v1425
        %v1434 = vmul.f32 %v1395, %v1426
        %v1435 = vmul.f32 %v1397, %v1427
        %v1436 = vmul.f32 %v1399, %v1428
        %v1437 = vmul.f32 %v1401, %v1429
        %v1438 = vmul.f32 %v1403, %v1430
        %v1439 = vmul.f32 %v1405, %v1431
        %v1440 = vmul.f32 %v1407, %v1432
        %v1441 = vmul.f32 %v1409, %v1433
        %1442 = vmatprep.subr.mxu0 0.0
        %1443 = vmatpush1.msra.mxu0 %v1166
        %1444 = vmatprep.subr.mxu0 0.0
        %1445 = vmatpush1.msra.mxu0 %v1165
        %1446 = vmatprep.subr.mxu0 0.0
        %1447 = vmatpush1.msra.mxu0 %v1164
        %1448 = vmatprep.subr.mxu0 0.0
        %1449 = vmatpush1.msra.mxu0 %v1163
        %1450 = vmatprep.subr.mxu0 0.0
        %1451 = vmatpush1.msra.mxu0 %v1162
        %1452 = vmatprep.subr.mxu0 0.0
        %1453 = vmatpush1.msra.mxu0 %v1161
        %1454 = vmatprep.subr.mxu0 0.0
        %1455 = vmatpush1.msra.mxu0 %v1160
        %1456 = vmatprep.subr.mxu0 0.0
        %1457 = vmatpush1.msra.mxu0 %v1159
        %1458 = vmatprep.subr.mxu0 0.0
        %1459 = vmatpush1.msra.mxu0 %v1158
        %1460 = vmatprep.subr.mxu0 0.0
        %1461 = vmatpush1.msra.mxu0 %v1157
        %1462 = vmatprep.subr.mxu0 0.0
        %1463 = vmatpush1.msra.mxu0 %v1156
        %1464 = vmatprep.subr.mxu0 0.0
        %1465 = vmatpush1.msra.mxu0 %v1155
        %1466 = vmatprep.subr.mxu0 0.0
        %1467 = vmatpush1.msra.mxu0 %v1154
        %1468 = vmatprep.subr.mxu0 0.0
        %1469 = vmatpush1.msra.mxu0 %v1153
        %1470 = vmatprep.subr.mxu0 0.0
        %1471 = vmatpush1.msra.mxu0 %v1152
        %1472 = vmatprep.subr.mxu0 0.0
        %1473 = vmatpush1.msra.mxu0 %v1151
        %1474 = vmatprep.subr.mxu0 0.0
        %1475 = vmatpush2.msra.mxu0 0.0
        %1476 = vmatprep.subr.mxu0 0.0
        %1477 = vmatpush2.msra.mxu0 0.0
        %1478 = vmatprep.subr.mxu0 0.0
        %1479 = vmatpush2.msra.mxu0 0.0
        %1480 = vmatprep.subr.mxu0 0.0
        %1481 = vmatpush2.msra.mxu0 0.0
        %1482 = vmatprep.subr.mxu0 0.0
        %1483 = vmatpush2.msra.mxu0 0.0
        %1484 = vmatprep.subr.mxu0 0.0
        %1485 = vmatpush2.msra.mxu0 0.0
        %1486 = vmatprep.subr.mxu0 0.0
        %1487 = vmatpush2.msra.mxu0 0.0
        %1488 = vmatprep.subr.mxu0 0.0
        %1489 = vmatpush2.msra.mxu0 0.0
        %1490 = vmatprep.subr.mxu0 0.0
        %1491 = vmatpush2.msra.mxu0 0.0
        %1492 = vmatprep.subr.mxu0 0.0
        %1493 = vmatpush2.msra.mxu0 0.0
        %1494 = vmatprep.subr.mxu0 0.0
        %1495 = vmatpush2.msra.mxu0 0.0
        %1496 = vmatprep.subr.mxu0 0.0
        %1497 = vmatpush2.msra.mxu0 0.0
        %1498 = vmatprep.subr.mxu0 0.0
        %1499 = vmatpush2.msra.mxu0 0.0
        %1500 = vmatprep.subr.mxu0 0.0
        %1501 = vmatpush2.msra.mxu0 0.0
        %1502 = vmatprep.subr.mxu0 0.0
        %1503 = vmatpush2.msra.mxu0 0.0
        %1504 = vmatprep.subr.mxu0 0.0
        %1505 = vmatpush2.msra.mxu0 0.0
        %1506 = vmatprep.mubr.f32.mxu0 0.0
        %1507 = vmatmul.mubr.f32.gmra.mxu0 %v1434
        %v1508 = vpop.f32.mrf.mxu0
        %v1509 = vadd.f32 0.0, %v1508
        %v1510 = vpop.f32.mrf.mxu0
        %1511 = vmatprep.mubr.f32.mxu0 0.0
        %1512 = vmatmul.mubr.f32.gmra.mxu0 %v1435
        %v1513 = vpop.f32.mrf.mxu0
        %v1514 = vadd.f32 0.0, %v1513
        %v1515 = vpop.f32.mrf.mxu0
        %1516 = vmatprep.mubr.f32.mxu0 0.0
        %1517 = vmatmul.mubr.f32.gmra.mxu0 %v1436
        %v1518 = vpop.f32.mrf.mxu0
        %v1519 = vadd.f32 0.0, %v1518
        %v1520 = vpop.f32.mrf.mxu0
        %1521 = vmatprep.mubr.f32.mxu0 0.0
        %1522 = vmatmul.mubr.f32.gmra.mxu0 %v1437
        %v1523 = vpop.f32.mrf.mxu0
        %v1524 = vadd.f32 0.0, %v1523
        %v1525 = vpop.f32.mrf.mxu0
        %1526 = vmatprep.mubr.f32.mxu0 0.0
        %1527 = vmatmul.mubr.f32.gmra.mxu0 %v1438
        %v1528 = vpop.f32.mrf.mxu0
        %v1529 = vadd.f32 0.0, %v1528
        %v1530 = vpop.f32.mrf.mxu0
        %1531 = vmatprep.mubr.f32.mxu0 0.0
        %1532 = vmatmul.mubr.f32.gmra.mxu0 %v1439
        %v1533 = vpop.f32.mrf.mxu0
        %v1534 = vadd.f32 0.0, %v1533
        %v1535 = vpop.f32.mrf.mxu0
        %1536 = vmatprep.mubr.f32.mxu0 0.0
        %1537 = vmatmul.mubr.f32.gmra.mxu0 %v1440
        %v1538 = vpop.f32.mrf.mxu0
        %v1539 = vadd.f32 0.0, %v1538
        %v1540 = vpop.f32.mrf.mxu0
        %1541 = vmatprep.mubr.f32.mxu0 0.0
        %1542 = vmatmul.mubr.f32.gmra.mxu0 %v1441
        %v1543 = vpop.f32.mrf.mxu0
        %v1544 = vadd.f32 0.0, %v1543
        %v1545 = vpop.f32.mrf.mxu0
        %1546 = vdwg.mxu0
        %1547 = vrot.lane.b32.xlu0 %v1127, 96
        %v1548 = vpop.permute.xlu0 %1547
        %1549 = vrot.lane.b32.xlu0 %v1128, 96
        %v1550 = vpop.permute.xlu0 %1549
        %1551 = vrot.lane.b32.xlu0 %v1129, 96
        %v1552 = vpop.permute.xlu0 %1551
        %1553 = vrot.lane.b32.xlu0 %v1130, 96
        %v1554 = vpop.permute.xlu0 %1553
        %1555 = vrot.lane.b32.xlu0 %v1131, 96
        %v1556 = vpop.permute.xlu0 %1555
        %1557 = vrot.lane.b32.xlu0 %v1132, 96
        %v1558 = vpop.permute.xlu0 %1557
        %1559 = vrot.lane.b32.xlu0 %v1133, 96
        %v1560 = vpop.permute.xlu0 %1559
        %1561 = vrot.lane.b32.xlu0 %v1134, 96
        %v1562 = vpop.permute.xlu0 %1561
        %1563 = vrot.lane.b32.xlu0 %v1135, 96
        %v1564 = vpop.permute.xlu0 %1563
        %1565 = vrot.lane.b32.xlu0 %v1136, 96
        %v1566 = vpop.permute.xlu0 %1565
        %1567 = vrot.lane.b32.xlu0 %v1137, 96
        %v1568 = vpop.permute.xlu0 %1567
        %1569 = vrot.lane.b32.xlu0 %v1138, 96
        %v1570 = vpop.permute.xlu0 %1569
        %1571 = vrot.lane.b32.xlu0 %v1139, 96
        %v1572 = vpop.permute.xlu0 %1571
        %1573 = vrot.lane.b32.xlu0 %v1140, 96
        %v1574 = vpop.permute.xlu0 %1573
        %1575 = vrot.lane.b32.xlu0 %v1141, 96
        %v1576 = vpop.permute.xlu0 %1575
        %1577 = vrot.lane.b32.xlu0 %v1142, 96
        %v1578 = vpop.permute.xlu0 %1577
        %1579 = vrot.lane.b32.xlu0 %v1143, 96
        %v1580 = vpop.permute.xlu0 %1579
        %1581 = vrot.lane.b32.xlu0 %v1144, 96
        %v1582 = vpop.permute.xlu0 %1581
        %1583 = vrot.lane.b32.xlu0 %v1145, 96
        %v1584 = vpop.permute.xlu0 %1583
        %1585 = vrot.lane.b32.xlu0 %v1146, 96
        %v1586 = vpop.permute.xlu0 %1585
        %1587 = vrot.lane.b32.xlu0 %v1147, 96
        %v1588 = vpop.permute.xlu0 %1587
        %1589 = vrot.lane.b32.xlu0 %v1148, 96
        %v1590 = vpop.permute.xlu0 %1589
        %1591 = vrot.lane.b32.xlu0 %v1149, 96
        %v1592 = vpop.permute.xlu0 %1591
        %1593 = vrot.lane.b32.xlu0 %v1150, 96
        %v1594 = vpop.permute.xlu0 %1593
        %v1595 = vsel %vm1192, %v1548, 0
        %v1597 = vsel %vm1192, %v1550, 0
        %v1599 = vsel %vm1192, %v1552, 0
        %v1601 = vsel %vm1192, %v1554, 0
        %v1603 = vsel %vm1192, %v1556, 0
        %v1605 = vsel %vm1192, %v1558, 0
        %v1607 = vsel %vm1192, %v1560, 0
        %v1609 = vsel %vm1192, %v1562, 0
        %v1611 = vsel %vm1192, %v1564, 0
        %v1613 = vsel %vm1192, %v1566, 0
        %v1615 = vsel %vm1192, %v1568, 0
        %v1617 = vsel %vm1192, %v1570, 0
        %v1619 = vsel %vm1192, %v1572, 0
        %v1621 = vsel %vm1192, %v1574, 0
        %v1623 = vsel %vm1192, %v1576, 0
        %v1625 = vsel %vm1192, %v1578, 0
        %v1627 = vsel %vm1192, %v1580, 0
        %v1629 = vsel %vm1192, %v1582, 0
        %v1631 = vsel %vm1192, %v1584, 0
        %v1633 = vsel %vm1192, %v1586, 0
        %v1635 = vsel %vm1192, %v1588, 0
        %v1637 = vsel %vm1192, %v1590, 0
        %v1639 = vsel %vm1192, %v1592, 0
        %v1641 = vsel %vm1192, %v1594, 0
        %1643 = vmatprep.subr.mxu0 0.0
        %1644 = vmatpush1.xpose.msra.mxu0 %v1641
        %1645 = vmatprep.subr.mxu0 0.0
        %1646 = vmatpush1.xpose.msra.mxu0 %v1639
        %1647 = vmatprep.subr.mxu0 0.0
        %1648 = vmatpush1.xpose.msra.mxu0 %v1637
        %1649 = vmatprep.subr.mxu0 0.0
        %1650 = vmatpush1.xpose.msra.mxu0 %v1635
        %1651 = vmatprep.subr.mxu0 0.0
        %1652 = vmatpush1.xpose.msra.mxu0 %v1633
        %1653 = vmatprep.subr.mxu0 0.0
        %1654 = vmatpush1.xpose.msra.mxu0 %v1631
        %1655 = vmatprep.subr.mxu0 0.0
        %1656 = vmatpush1.xpose.msra.mxu0 %v1629
        %1657 = vmatprep.subr.mxu0 0.0
        %1658 = vmatpush1.xpose.msra.mxu0 %v1627
        %1659 = vmatprep.subr.mxu0 0.0
        %1660 = vmatpush1.xpose.msra.mxu0 %v1625
        %1661 = vmatprep.subr.mxu0 0.0
        %1662 = vmatpush1.xpose.msra.mxu0 %v1623
        %1663 = vmatprep.subr.mxu0 0.0
        %1664 = vmatpush1.xpose.msra.mxu0 %v1621
        %1665 = vmatprep.subr.mxu0 0.0
        %1666 = vmatpush1.xpose.msra.mxu0 %v1619
        %1667 = vmatprep.subr.mxu0 0.0
        %1668 = vmatpush1.xpose.msra.mxu0 %v1617
        %1669 = vmatprep.subr.mxu0 0.0
        %1670 = vmatpush1.xpose.msra.mxu0 %v1615
        %1671 = vmatprep.subr.mxu0 0.0
        %1672 = vmatpush1.xpose.msra.mxu0 %v1613
        %1673 = vmatprep.subr.mxu0 0.0
        %1674 = vmatpush1.xpose.msra.mxu0 %v1611
        %1675 = vmatprep.subr.mxu0 0.0
        %1676 = vmatpush2.xpose.msra.mxu0 0.0
        %1677 = vmatprep.subr.mxu0 0.0
        %1678 = vmatpush2.xpose.msra.mxu0 0.0
        %1679 = vmatprep.subr.mxu0 0.0
        %1680 = vmatpush2.xpose.msra.mxu0 0.0
        %1681 = vmatprep.subr.mxu0 0.0
        %1682 = vmatpush2.xpose.msra.mxu0 0.0
        %1683 = vmatprep.subr.mxu0 0.0
        %1684 = vmatpush2.xpose.msra.mxu0 0.0
        %1685 = vmatprep.subr.mxu0 0.0
        %1686 = vmatpush2.xpose.msra.mxu0 0.0
        %1687 = vmatprep.subr.mxu0 0.0
        %1688 = vmatpush2.xpose.msra.mxu0 0.0
        %1689 = vmatprep.subr.mxu0 0.0
        %1690 = vmatpush2.xpose.msra.mxu0 0.0
        %1691 = vmatprep.subr.mxu0 0.0
        %1692 = vmatpush2.xpose.msra.mxu0 0.0
        %1693 = vmatprep.subr.mxu0 0.0
        %1694 = vmatpush2.xpose.msra.mxu0 0.0
        %1695 = vmatprep.subr.mxu0 0.0
        %1696 = vmatpush2.xpose.msra.mxu0 0.0
        %1697 = vmatprep.subr.mxu0 0.0
        %1698 = vmatpush2.xpose.msra.mxu0 0.0
        %1699 = vmatprep.subr.mxu0 0.0
        %1700 = vmatpush2.xpose.msra.mxu0 0.0
        %1701 = vmatprep.subr.mxu0 0.0
        %1702 = vmatpush2.xpose.msra.mxu0 0.0
        %1703 = vmatprep.subr.mxu0 0.0
        %1704 = vmatpush2.xpose.msra.mxu0 0.0
        %1705 = vmatprep.subr.mxu0 0.0
        %1706 = vmatpush2.xpose.msra.mxu0 0.0
        %1707 = vmatprep.mubr.f32.mxu0 0.0
        %1708 = vmatmul.mubr.f32.gmra.mxu0 %v1595
        %v1709 = vpop.f32.mrf.mxu0
        %v1710 = vadd.f32 %v1190, %v1709
        %v1711 = vpop.f32.mrf.mxu0
        %1712 = vmatprep.mubr.f32.mxu0 0.0
        %1713 = vmatmul.mubr.f32.gmra.mxu0 %v1597
        %v1714 = vpop.f32.mrf.mxu0
        %v1715 = vadd.f32 %v1190, %v1714
        %v1716 = vpop.f32.mrf.mxu0
        %1717 = vmatprep.mubr.f32.mxu0 0.0
        %1718 = vmatmul.mubr.f32.gmra.mxu0 %v1599
        %v1719 = vpop.f32.mrf.mxu0
        %v1720 = vadd.f32 %v1190, %v1719
        %v1721 = vpop.f32.mrf.mxu0
        %1722 = vmatprep.mubr.f32.mxu0 0.0
        %1723 = vmatmul.mubr.f32.gmra.mxu0 %v1601
        %v1724 = vpop.f32.mrf.mxu0
        %v1725 = vadd.f32 %v1190, %v1724
        %v1726 = vpop.f32.mrf.mxu0
        %1727 = vmatprep.mubr.f32.mxu0 0.0
        %1728 = vmatmul.mubr.f32.gmra.mxu0 %v1603
        %v1729 = vpop.f32.mrf.mxu0
        %v1730 = vadd.f32 %v1190, %v1729
        %v1731 = vpop.f32.mrf.mxu0
        %1732 = vmatprep.mubr.f32.mxu0 0.0
        %1733 = vmatmul.mubr.f32.gmra.mxu0 %v1605
        %v1734 = vpop.f32.mrf.mxu0
        %v1735 = vadd.f32 %v1190, %v1734
        %v1736 = vpop.f32.mrf.mxu0
        %1737 = vmatprep.mubr.f32.mxu0 0.0
        %1738 = vmatmul.mubr.f32.gmra.mxu0 %v1607
        %v1739 = vpop.f32.mrf.mxu0
        %v1740 = vadd.f32 %v1190, %v1739
        %v1741 = vpop.f32.mrf.mxu0
        %1742 = vmatprep.mubr.f32.mxu0 0.0
        %1743 = vmatmul.mubr.f32.gmra.mxu0 %v1609
        %v1744 = vpop.f32.mrf.mxu0
        %v1745 = vadd.f32 %v1190, %v1744
        %v1746 = vpop.f32.mrf.mxu0
        %1747 = vdwg.mxu0
        %1748 = vmax.xlane.f32.xlu0 %v1710
        %v1749 = vpop.xlane.xlu0 %1748
        %1750 = vmax.xlane.f32.xlu0 %v1715
        %v1751 = vpop.xlane.xlu0 %1750
        %1752 = vmax.xlane.f32.xlu0 %v1720
        %v1753 = vpop.xlane.xlu0 %1752
        %1754 = vmax.xlane.f32.xlu0 %v1725
        %v1755 = vpop.xlane.xlu0 %1754
        %1756 = vmax.xlane.f32.xlu0 %v1730
        %v1757 = vpop.xlane.xlu0 %1756
        %1758 = vmax.xlane.f32.xlu0 %v1735
        %v1759 = vpop.xlane.xlu0 %1758
        %1760 = vmax.xlane.f32.xlu0 %v1740
        %v1761 = vpop.xlane.xlu0 %1760
        %1762 = vmax.xlane.f32.xlu0 %v1745
        %v1763 = vpop.xlane.xlu0 %1762
        %v1764 = vsub.f32 %v1710, %v1749
        %v1765 = vsub.f32 %v1715, %v1751
        %v1766 = vsub.f32 %v1720, %v1753
        %v1767 = vsub.f32 %v1725, %v1755
        %v1768 = vsub.f32 %v1730, %v1757
        %v1769 = vsub.f32 %v1735, %v1759
        %v1770 = vsub.f32 %v1740, %v1761
        %v1771 = vsub.f32 %v1745, %v1763
        %v1772 = vmul.f32 %v1764, 1.442695
        %v1773 = vpow.pop %v1772
        %v1774 = vmul.f32 %v1765, 1.442695
        %v1775 = vpow.pop %v1774
        %v1776 = vmul.f32 %v1766, 1.442695
        %v1777 = vpow.pop %v1776
        %v1778 = vmul.f32 %v1767, 1.442695
        %v1779 = vpow.pop %v1778
        %v1780 = vmul.f32 %v1768, 1.442695
        %v1781 = vpow.pop %v1780
        %v1782 = vmul.f32 %v1769, 1.442695
        %v1783 = vpow.pop %v1782
        %v1784 = vmul.f32 %v1770, 1.442695
        %v1785 = vpow.pop %v1784
        %v1786 = vmul.f32 %v1771, 1.442695
        %v1787 = vpow.pop %v1786
        %1788 = vadd.xlane.f32.xlu0 %v1773
        %v1789 = vpop.xlane.xlu0 %1788
        %1790 = vadd.xlane.f32.xlu0 %v1775
        %v1791 = vpop.xlane.xlu0 %1790
        %1792 = vadd.xlane.f32.xlu0 %v1777
        %v1793 = vpop.xlane.xlu0 %1792
        %1794 = vadd.xlane.f32.xlu0 %v1779
        %v1795 = vpop.xlane.xlu0 %1794
        %1796 = vadd.xlane.f32.xlu0 %v1781
        %v1797 = vpop.xlane.xlu0 %1796
        %1798 = vadd.xlane.f32.xlu0 %v1783
        %v1799 = vpop.xlane.xlu0 %1798
        %1800 = vadd.xlane.f32.xlu0 %v1785
        %v1801 = vpop.xlane.xlu0 %1800
        %1802 = vadd.xlane.f32.xlu0 %v1787
        %v1803 = vpop.xlane.xlu0 %1802
        %v1804 = vrcp.pop %v1789
        %v1805 = vrcp.pop %v1791
        %v1806 = vrcp.pop %v1793
        %v1807 = vrcp.pop %v1795
        %v1808 = vrcp.pop %v1797
        %v1809 = vrcp.pop %v1799
        %v1810 = vrcp.pop %v1801
        %v1811 = vrcp.pop %v1803
        %v1812 = vmul.f32 %v1773, %v1804
        %v1813 = vmul.f32 %v1775, %v1805
        %v1814 = vmul.f32 %v1777, %v1806
        %v1815 = vmul.f32 %v1779, %v1807
        %v1816 = vmul.f32 %v1781, %v1808
        %v1817 = vmul.f32 %v1783, %v1809
        %v1818 = vmul.f32 %v1785, %v1810
        %v1819 = vmul.f32 %v1787, %v1811
        %1836 = vrot.lane.b32.xlu0 %v1151, 96
        %v1837 = vpop.permute.xlu0 %1836
        %1838 = vrot.lane.b32.xlu0 %v1152, 96
        %v1839 = vpop.permute.xlu0 %1838
        %1840 = vrot.lane.b32.xlu0 %v1153, 96
        %v1841 = vpop.permute.xlu0 %1840
        %1842 = vrot.lane.b32.xlu0 %v1154, 96
        %v1843 = vpop.permute.xlu0 %1842
        %1844 = vrot.lane.b32.xlu0 %v1155, 96
        %v1845 = vpop.permute.xlu0 %1844
        %1846 = vrot.lane.b32.xlu0 %v1156, 96
        %v1847 = vpop.permute.xlu0 %1846
        %1848 = vrot.lane.b32.xlu0 %v1157, 96
        %v1849 = vpop.permute.xlu0 %1848
        %1850 = vrot.lane.b32.xlu0 %v1158, 96
        %v1851 = vpop.permute.xlu0 %1850
        %1852 = vrot.lane.b32.xlu0 %v1159, 96
        %v1853 = vpop.permute.xlu0 %1852
        %1854 = vrot.lane.b32.xlu0 %v1160, 96
        %v1855 = vpop.permute.xlu0 %1854
        %1856 = vrot.lane.b32.xlu0 %v1161, 96
        %v1857 = vpop.permute.xlu0 %1856
        %1858 = vrot.lane.b32.xlu0 %v1162, 96
        %v1859 = vpop.permute.xlu0 %1858
        %1860 = vrot.lane.b32.xlu0 %v1163, 96
        %v1861 = vpop.permute.xlu0 %1860
        %1862 = vrot.lane.b32.xlu0 %v1164, 96
        %v1863 = vpop.permute.xlu0 %1862
        %1864 = vrot.lane.b32.xlu0 %v1165, 96
        %v1865 = vpop.permute.xlu0 %1864
        %1866 = vrot.lane.b32.xlu0 %v1166, 96
        %v1867 = vpop.permute.xlu0 %1866
        %1884 = vmatprep.subr.mxu0 0.0
        %1885 = vmatpush1.msra.mxu0 %v1867
        %1886 = vmatprep.subr.mxu0 0.0
        %1887 = vmatpush1.msra.mxu0 %v1865
        %1888 = vmatprep.subr.mxu0 0.0
        %1889 = vmatpush1.msra.mxu0 %v1863
        %1890 = vmatprep.subr.mxu0 0.0
        %1891 = vmatpush1.msra.mxu0 %v1861
        %1892 = vmatprep.subr.mxu0 0.0
        %1893 = vmatpush1.msra.mxu0 %v1859
        %1894 = vmatprep.subr.mxu0 0.0
        %1895 = vmatpush1.msra.mxu0 %v1857
        %1896 = vmatprep.subr.mxu0 0.0
        %1897 = vmatpush1.msra.mxu0 %v1855
        %1898 = vmatprep.subr.mxu0 0.0
        %1899 = vmatpush1.msra.mxu0 %v1853
        %1900 = vmatprep.subr.mxu0 0.0
        %1901 = vmatpush1.msra.mxu0 %v1851
        %1902 = vmatprep.subr.mxu0 0.0
        %1903 = vmatpush1.msra.mxu0 %v1849
        %1904 = vmatprep.subr.mxu0 0.0
        %1905 = vmatpush1.msra.mxu0 %v1847
        %1906 = vmatprep.subr.mxu0 0.0
        %1907 = vmatpush1.msra.mxu0 %v1845
        %1908 = vmatprep.subr.mxu0 0.0
        %1909 = vmatpush1.msra.mxu0 %v1843
        %1910 = vmatprep.subr.mxu0 0.0
        %1911 = vmatpush1.msra.mxu0 %v1841
        %1912 = vmatprep.subr.mxu0 0.0
        %1913 = vmatpush1.msra.mxu0 %v1839
        %1914 = vmatprep.subr.mxu0 0.0
        %1915 = vmatpush1.msra.mxu0 %v1837
        %1916 = vmatprep.subr.mxu0 0.0
        %1917 = vmatpush2.msra.mxu0 0.0
        %1918 = vmatprep.subr.mxu0 0.0
        %1919 = vmatpush2.msra.mxu0 0.0
        %1920 = vmatprep.subr.mxu0 0.0
        %1921 = vmatpush2.msra.mxu0 0.0
        %1922 = vmatprep.subr.mxu0 0.0
        %1923 = vmatpush2.msra.mxu0 0.0
        %1924 = vmatprep.subr.mxu0 0.0
        %1925 = vmatpush2.msra.mxu0 0.0
        %1926 = vmatprep.subr.mxu0 0.0
        %1927 = vmatpush2.msra.mxu0 0.0
        %1928 = vmatprep.subr.mxu0 0.0
        %1929 = vmatpush2.msra.mxu0 0.0
        %1930 = vmatprep.subr.mxu0 0.0
        %1931 = vmatpush2.msra.mxu0 0.0
        %1932 = vmatprep.subr.mxu0 0.0
        %1933 = vmatpush2.msra.mxu0 0.0
        %1934 = vmatprep.subr.mxu0 0.0
        %1935 = vmatpush2.msra.mxu0 0.0
        %1936 = vmatprep.subr.mxu0 0.0
        %1937 = vmatpush2.msra.mxu0 0.0
        %1938 = vmatprep.subr.mxu0 0.0
        %1939 = vmatpush2.msra.mxu0 0.0
        %1940 = vmatprep.subr.mxu0 0.0
        %1941 = vmatpush2.msra.mxu0 0.0
        %1942 = vmatprep.subr.mxu0 0.0
        %1943 = vmatpush2.msra.mxu0 0.0
        %1944 = vmatprep.subr.mxu0 0.0
        %1945 = vmatpush2.msra.mxu0 0.0
        %1946 = vmatprep.subr.mxu0 0.0
        %1947 = vmatpush2.msra.mxu0 0.0
        %1948 = vmatprep.mubr.f32.mxu0 0.0
        %1949 = vmatmul.mubr.f32.gmra.mxu0 %v1812
        %v1950 = vpop.f32.mrf.mxu0
        %v1951 = vadd.f32 0.0, %v1950
        %v1952 = vpop.f32.mrf.mxu0
        %1953 = vmatprep.mubr.f32.mxu0 0.0
        %1954 = vmatmul.mubr.f32.gmra.mxu0 %v1813
        %v1955 = vpop.f32.mrf.mxu0
        %v1956 = vadd.f32 0.0, %v1955
        %v1957 = vpop.f32.mrf.mxu0
        %1958 = vmatprep.mubr.f32.mxu0 0.0
        %1959 = vmatmul.mubr.f32.gmra.mxu0 %v1814
        %v1960 = vpop.f32.mrf.mxu0
        %v1961 = vadd.f32 0.0, %v1960
        %v1962 = vpop.f32.mrf.mxu0
        %1963 = vmatprep.mubr.f32.mxu0 0.0
        %1964 = vmatmul.mubr.f32.gmra.mxu0 %v1815
        %v1965 = vpop.f32.mrf.mxu0
        %v1966 = vadd.f32 0.0, %v1965
        %v1967 = vpop.f32.mrf.mxu0
        %1968 = vmatprep.mubr.f32.mxu0 0.0
        %1969 = vmatmul.mubr.f32.gmra.mxu0 %v1816
        %v1970 = vpop.f32.mrf.mxu0
        %v1971 = vadd.f32 0.0, %v1970
        %v1972 = vpop.f32.mrf.mxu0
        %1973 = vmatprep.mubr.f32.mxu0 0.0
        %1974 = vmatmul.mubr.f32.gmra.mxu0 %v1817
        %v1975 = vpop.f32.mrf.mxu0
        %v1976 = vadd.f32 0.0, %v1975
        %v1977 = vpop.f32.mrf.mxu0
        %1978 = vmatprep.mubr.f32.mxu0 0.0
        %1979 = vmatmul.mubr.f32.gmra.mxu0 %v1818
        %v1980 = vpop.f32.mrf.mxu0
        %v1981 = vadd.f32 0.0, %v1980
        %v1982 = vpop.f32.mrf.mxu0
        %1983 = vmatprep.mubr.f32.mxu0 0.0
        %1984 = vmatmul.mubr.f32.gmra.mxu0 %v1819
        %v1985 = vpop.f32.mrf.mxu0
        %v1986 = vadd.f32 0.0, %v1985
        %v1987 = vpop.f32.mrf.mxu0
        %1988 = vdwg.mxu0
        %v1990 = vsel %vm1192, %v1951, 0
        %v1993 = vsel %vm1192, %v1956, 0
        %v1996 = vsel %vm1192, %v1961, 0
        %v1999 = vsel %vm1192, %v1966, 0
        %v2002 = vsel %vm1192, %v1971, 0
        %v2005 = vsel %vm1192, %v1976, 0
        %v2008 = vsel %vm1192, %v1981, 0
        %v2011 = vsel %vm1192, %v1986, 0
        %2013 = vmatprep.subr.mxu0 0.0
        %2014 = vmatpush1.msra.mxu0 0.0
        %2015 = vmatprep.subr.mxu0 0.0
        %2016 = vmatpush1.msra.mxu0 0.0
        %2017 = vmatprep.subr.mxu0 0.0
        %2018 = vmatpush1.msra.mxu0 0.0
        %2019 = vmatprep.subr.mxu0 0.0
        %2020 = vmatpush1.msra.mxu0 0.0
        %2021 = vmatprep.subr.mxu0 0.0
        %2022 = vmatpush1.msra.mxu0 0.0
        %2023 = vmatprep.subr.mxu0 0.0
        %2024 = vmatpush1.msra.mxu0 0.0
        %2025 = vmatprep.subr.mxu0 0.0
        %2026 = vmatpush1.msra.mxu0 0.0
        %2027 = vmatprep.subr.mxu0 0.0
        %2028 = vmatpush1.msra.mxu0 0.0
        %2029 = vmatprep.subr.mxu0 0.0
        %2030 = vmatpush1.msra.mxu0 0.0
        %2031 = vmatprep.subr.mxu0 0.0
        %2032 = vmatpush1.msra.mxu0 0.0
        %2033 = vmatprep.subr.mxu0 0.0
        %2034 = vmatpush1.msra.mxu0 0.0
        %2035 = vmatprep.subr.mxu0 0.0
        %2036 = vmatpush1.msra.mxu0 0.0
        %2037 = vmatprep.subr.mxu0 0.0
        %2038 = vmatpush1.msra.mxu0 %v1177
        %2039 = vmatprep.subr.mxu0 0.0
        %2040 = vmatpush1.msra.mxu0 %v1176
        %2041 = vmatprep.subr.mxu0 0.0
        %2042 = vmatpush1.msra.mxu0 %v1175
        %2043 = vmatprep.subr.mxu0 0.0
        %2044 = vmatpush1.msra.mxu0 %v1174
        %2045 = vmatprep.subr.mxu0 0.0
        %2046 = vmatpush2.msra.mxu0 0.0
        %2047 = vmatprep.subr.mxu0 0.0
        %2048 = vmatpush2.msra.mxu0 0.0
        %2049 = vmatprep.subr.mxu0 0.0
        %2050 = vmatpush2.msra.mxu0 0.0
        %2051 = vmatprep.subr.mxu0 0.0
        %2052 = vmatpush2.msra.mxu0 0.0
        %2053 = vmatprep.subr.mxu0 0.0
        %2054 = vmatpush2.msra.mxu0 0.0
        %2055 = vmatprep.subr.mxu0 0.0
        %2056 = vmatpush2.msra.mxu0 0.0
        %2057 = vmatprep.subr.mxu0 0.0
        %2058 = vmatpush2.msra.mxu0 0.0
        %2059 = vmatprep.subr.mxu0 0.0
        %2060 = vmatpush2.msra.mxu0 0.0
        %2061 = vmatprep.subr.mxu0 0.0
        %2062 = vmatpush2.msra.mxu0 0.0
        %2063 = vmatprep.subr.mxu0 0.0
        %2064 = vmatpush2.msra.mxu0 0.0
        %2065 = vmatprep.subr.mxu0 0.0
        %2066 = vmatpush2.msra.mxu0 0.0
        %2067 = vmatprep.subr.mxu0 0.0
        %2068 = vmatpush2.msra.mxu0 0.0
        %2069 = vmatprep.subr.mxu0 0.0
        %2070 = vmatpush2.msra.mxu0 0.0
        %2071 = vmatprep.subr.mxu0 0.0
        %2072 = vmatpush2.msra.mxu0 0.0
        %2073 = vmatprep.subr.mxu0 0.0
        %2074 = vmatpush2.msra.mxu0 0.0
        %2075 = vmatprep.subr.mxu0 0.0
        %2076 = vmatpush2.msra.mxu0 0.0
        %2077 = vmatprep.mubr.f32.mxu0 0.0
        %2078 = vmatmul.mubr.f32.gmra.mxu0 %v1990
        %v2079 = vpop.f32.mrf.mxu0
        %v2080 = vadd.f32 0.0, %v2079
        %v2081 = vpop.f32.mrf.mxu0
        %2082 = vmatprep.mubr.f32.mxu0 0.0
        %2083 = vmatmul.mubr.f32.gmra.mxu0 %v1993
        %v2084 = vpop.f32.mrf.mxu0
        %v2085 = vadd.f32 0.0, %v2084
        %v2086 = vpop.f32.mrf.mxu0
        %2087 = vmatprep.mubr.f32.mxu0 0.0
        %2088 = vmatmul.mubr.f32.gmra.mxu0 %v1996
        %v2089 = vpop.f32.mrf.mxu0
        %v2090 = vadd.f32 0.0, %v2089
        %v2091 = vpop.f32.mrf.mxu0
        %2092 = vmatprep.mubr.f32.mxu0 0.0
        %2093 = vmatmul.mubr.f32.gmra.mxu0 %v1999
        %v2094 = vpop.f32.mrf.mxu0
        %v2095 = vadd.f32 0.0, %v2094
        %v2096 = vpop.f32.mrf.mxu0
        %2097 = vmatprep.mubr.f32.mxu0 0.0
        %2098 = vmatmul.mubr.f32.gmra.mxu0 %v2002
        %v2099 = vpop.f32.mrf.mxu0
        %v2100 = vadd.f32 0.0, %v2099
        %v2101 = vpop.f32.mrf.mxu0
        %2102 = vmatprep.mubr.f32.mxu0 0.0
        %2103 = vmatmul.mubr.f32.gmra.mxu0 %v2005
        %v2104 = vpop.f32.mrf.mxu0
        %v2105 = vadd.f32 0.0, %v2104
        %v2106 = vpop.f32.mrf.mxu0
        %2107 = vmatprep.mubr.f32.mxu0 0.0
        %2108 = vmatmul.mubr.f32.gmra.mxu0 %v2008
        %v2109 = vpop.f32.mrf.mxu0
        %v2110 = vadd.f32 0.0, %v2109
        %v2111 = vpop.f32.mrf.mxu0
        %2112 = vmatprep.mubr.f32.mxu0 0.0
        %2113 = vmatmul.mubr.f32.gmra.mxu0 %v2011
        %v2114 = vpop.f32.mrf.mxu0
        %v2115 = vadd.f32 0.0, %v2114
        %v2116 = vpop.f32.mrf.mxu0
        %2117 = vdwg.mxu0
        %v2119 = vsel %vm1192, %v1509, 0
        %v2122 = vsel %vm1192, %v1514, 0
        %v2125 = vsel %vm1192, %v1519, 0
        %v2128 = vsel %vm1192, %v1524, 0
        %v2131 = vsel %vm1192, %v1529, 0
        %v2134 = vsel %vm1192, %v1534, 0
        %v2137 = vsel %vm1192, %v1539, 0
        %v2140 = vsel %vm1192, %v1544, 0
        %2142 = vmatprep.subr.mxu0 0.0
        %2143 = vmatpush1.msra.mxu0 0.0
        %2144 = vmatprep.subr.mxu0 0.0
        %2145 = vmatpush1.msra.mxu0 0.0
        %2146 = vmatprep.subr.mxu0 0.0
        %2147 = vmatpush1.msra.mxu0 0.0
        %2148 = vmatprep.subr.mxu0 0.0
        %2149 = vmatpush1.msra.mxu0 0.0
        %2150 = vmatprep.subr.mxu0 0.0
        %2151 = vmatpush1.msra.mxu0 0.0
        %2152 = vmatprep.subr.mxu0 0.0
        %2153 = vmatpush1.msra.mxu0 0.0
        %2154 = vmatprep.subr.mxu0 0.0
        %2155 = vmatpush1.msra.mxu0 0.0
        %2156 = vmatprep.subr.mxu0 0.0
        %2157 = vmatpush1.msra.mxu0 0.0
        %2158 = vmatprep.subr.mxu0 0.0
        %2159 = vmatpush1.msra.mxu0 0.0
        %2160 = vmatprep.subr.mxu0 0.0
        %2161 = vmatpush1.msra.mxu0 0.0
        %2162 = vmatprep.subr.mxu0 0.0
        %2163 = vmatpush1.msra.mxu0 0.0
        %2164 = vmatprep.subr.mxu0 0.0
        %2165 = vmatpush1.msra.mxu0 0.0
        %2166 = vmatprep.subr.mxu0 0.0
        %2167 = vmatpush1.msra.mxu0 %v1173
        %2168 = vmatprep.subr.mxu0 0.0
        %2169 = vmatpush1.msra.mxu0 %v1172
        %2170 = vmatprep.subr.mxu0 0.0
        %2171 = vmatpush1.msra.mxu0 %v1171
        %2172 = vmatprep.subr.mxu0 0.0
        %2173 = vmatpush1.msra.mxu0 %v1170
        %2174 = vmatprep.subr.mxu0 0.0
        %2175 = vmatpush2.msra.mxu0 0.0
        %2176 = vmatprep.subr.mxu0 0.0
        %2177 = vmatpush2.msra.mxu0 0.0
        %2178 = vmatprep.subr.mxu0 0.0
        %2179 = vmatpush2.msra.mxu0 0.0
        %2180 = vmatprep.subr.mxu0 0.0
        %2181 = vmatpush2.msra.mxu0 0.0
        %2182 = vmatprep.subr.mxu0 0.0
        %2183 = vmatpush2.msra.mxu0 0.0
        %2184 = vmatprep.subr.mxu0 0.0
        %2185 = vmatpush2.msra.mxu0 0.0
        %2186 = vmatprep.subr.mxu0 0.0
        %2187 = vmatpush2.msra.mxu0 0.0
        %2188 = vmatprep.subr.mxu0 0.0
        %2189 = vmatpush2.msra.mxu0 0.0
        %2190 = vmatprep.subr.mxu0 0.0
        %2191 = vmatpush2.msra.mxu0 0.0
        %2192 = vmatprep.subr.mxu0 0.0
        %2193 = vmatpush2.msra.mxu0 0.0
        %2194 = vmatprep.subr.mxu0 0.0
        %2195 = vmatpush2.msra.mxu0 0.0
        %2196 = vmatprep.subr.mxu0 0.0
        %2197 = vmatpush2.msra.mxu0 0.0
        %2198 = vmatprep.subr.mxu0 0.0
        %2199 = vmatpush2.msra.mxu0 0.0
        %2200 = vmatprep.subr.mxu0 0.0
        %2201 = vmatpush2.msra.mxu0 0.0
        %2202 = vmatprep.subr.mxu0 0.0
        %2203 = vmatpush2.msra.mxu0 0.0
        %2204 = vmatprep.subr.mxu0 0.0
        %2205 = vmatpush2.msra.mxu0 0.0
        %2206 = vmatprep.mubr.f32.mxu0 0.0
        %2207 = vmatmul.mubr.f32.gmra.mxu0 %v2119
        %v2208 = vpop.f32.mrf.mxu0
        %v2209 = vadd.f32 %v2080, %v2208
        %v2210 = vpop.f32.mrf.mxu0
        %2211 = vmatprep.mubr.f32.mxu0 0.0
        %2212 = vmatmul.mubr.f32.gmra.mxu0 %v2122
        %v2213 = vpop.f32.mrf.mxu0
        %v2214 = vadd.f32 %v2085, %v2213
        %v2215 = vpop.f32.mrf.mxu0
        %2216 = vmatprep.mubr.f32.mxu0 0.0
        %2217 = vmatmul.mubr.f32.gmra.mxu0 %v2125
        %v2218 = vpop.f32.mrf.mxu0
        %v2219 = vadd.f32 %v2090, %v2218
        %v2220 = vpop.f32.mrf.mxu0
        %2221 = vmatprep.mubr.f32.mxu0 0.0
        %2222 = vmatmul.mubr.f32.gmra.mxu0 %v2128
        %v2223 = vpop.f32.mrf.mxu0
        %v2224 = vadd.f32 %v2095, %v2223
        %v2225 = vpop.f32.mrf.mxu0
        %2226 = vmatprep.mubr.f32.mxu0 0.0
        %2227 = vmatmul.mubr.f32.gmra.mxu0 %v2131
        %v2228 = vpop.f32.mrf.mxu0
        %v2229 = vadd.f32 %v2100, %v2228
        %v2230 = vpop.f32.mrf.mxu0
        %2231 = vmatprep.mubr.f32.mxu0 0.0
        %2232 = vmatmul.mubr.f32.gmra.mxu0 %v2134
        %v2233 = vpop.f32.mrf.mxu0
        %v2234 = vadd.f32 %v2105, %v2233
        %v2235 = vpop.f32.mrf.mxu0
        %2236 = vmatprep.mubr.f32.mxu0 0.0
        %2237 = vmatmul.mubr.f32.gmra.mxu0 %v2137
        %v2238 = vpop.f32.mrf.mxu0
        %v2239 = vadd.f32 %v2110, %v2238
        %v2240 = vpop.f32.mrf.mxu0
        %2241 = vmatprep.mubr.f32.mxu0 0.0
        %2242 = vmatmul.mubr.f32.gmra.mxu0 %v2140
        %v2243 = vpop.f32.mrf.mxu0
        %v2244 = vadd.f32 %v2115, %v2243
        %v2245 = vpop.f32.mrf.mxu0
        %2246 = vdwg.mxu0
        %2247 = vrot.lane.b32.xlu0 %v1127, 64
        %v2248 = vpop.permute.xlu0 %2247
        %2249 = vrot.lane.b32.xlu0 %v1128, 64
        %v2250 = vpop.permute.xlu0 %2249
        %2251 = vrot.lane.b32.xlu0 %v1129, 64
        %v2252 = vpop.permute.xlu0 %2251
        %2253 = vrot.lane.b32.xlu0 %v1130, 64
        %v2254 = vpop.permute.xlu0 %2253
        %2255 = vrot.lane.b32.xlu0 %v1131, 64
        %v2256 = vpop.permute.xlu0 %2255
        %2257 = vrot.lane.b32.xlu0 %v1132, 64
        %v2258 = vpop.permute.xlu0 %2257
        %2259 = vrot.lane.b32.xlu0 %v1133, 64
        %v2260 = vpop.permute.xlu0 %2259
        %2261 = vrot.lane.b32.xlu0 %v1134, 64
        %v2262 = vpop.permute.xlu0 %2261
        %2263 = vrot.lane.b32.xlu0 %v1135, 64
        %v2264 = vpop.permute.xlu0 %2263
        %2265 = vrot.lane.b32.xlu0 %v1136, 64
        %v2266 = vpop.permute.xlu0 %2265
        %2267 = vrot.lane.b32.xlu0 %v1137, 64
        %v2268 = vpop.permute.xlu0 %2267
        %2269 = vrot.lane.b32.xlu0 %v1138, 64
        %v2270 = vpop.permute.xlu0 %2269
        %2271 = vrot.lane.b32.xlu0 %v1139, 64
        %v2272 = vpop.permute.xlu0 %2271
        %2273 = vrot.lane.b32.xlu0 %v1140, 64
        %v2274 = vpop.permute.xlu0 %2273
        %2275 = vrot.lane.b32.xlu0 %v1141, 64
        %v2276 = vpop.permute.xlu0 %2275
        %2277 = vrot.lane.b32.xlu0 %v1142, 64
        %v2278 = vpop.permute.xlu0 %2277
        %2279 = vrot.lane.b32.xlu0 %v1143, 64
        %v2280 = vpop.permute.xlu0 %2279
        %2281 = vrot.lane.b32.xlu0 %v1144, 64
        %v2282 = vpop.permute.xlu0 %2281
        %2283 = vrot.lane.b32.xlu0 %v1145, 64
        %v2284 = vpop.permute.xlu0 %2283
        %2285 = vrot.lane.b32.xlu0 %v1146, 64
        %v2286 = vpop.permute.xlu0 %2285
        %2287 = vrot.lane.b32.xlu0 %v1147, 64
        %v2288 = vpop.permute.xlu0 %2287
        %2289 = vrot.lane.b32.xlu0 %v1148, 64
        %v2290 = vpop.permute.xlu0 %2289
        %2291 = vrot.lane.b32.xlu0 %v1149, 64
        %v2292 = vpop.permute.xlu0 %2291
        %2293 = vrot.lane.b32.xlu0 %v1150, 64
        %v2294 = vpop.permute.xlu0 %2293
        %v2295 = vsel %vm1192, %v2248, 0
        %v2297 = vsel %vm1192, %v2250, 0
        %v2299 = vsel %vm1192, %v2252, 0
        %v2301 = vsel %vm1192, %v2254, 0
        %v2303 = vsel %vm1192, %v2256, 0
        %v2305 = vsel %vm1192, %v2258, 0
        %v2307 = vsel %vm1192, %v2260, 0
        %v2309 = vsel %vm1192, %v2262, 0
        %v2311 = vsel %vm1192, %v2264, 0
        %v2313 = vsel %vm1192, %v2266, 0
        %v2315 = vsel %vm1192, %v2268, 0
        %v2317 = vsel %vm1192, %v2270, 0
        %v2319 = vsel %vm1192, %v2272, 0
        %v2321 = vsel %vm1192, %v2274, 0
        %v2323 = vsel %vm1192, %v2276, 0
        %v2325 = vsel %vm1192, %v2278, 0
        %v2327 = vsel %vm1192, %v2280, 0
        %v2329 = vsel %vm1192, %v2282, 0
        %v2331 = vsel %vm1192, %v2284, 0
        %v2333 = vsel %vm1192, %v2286, 0
        %v2335 = vsel %vm1192, %v2288, 0
        %v2337 = vsel %vm1192, %v2290, 0
        %v2339 = vsel %vm1192, %v2292, 0
        %v2341 = vsel %vm1192, %v2294, 0
        %2343 = vmatprep.subr.mxu0 0.0
        %2344 = vmatpush1.xpose.msra.mxu0 %v2341
        %2345 = vmatprep.subr.mxu0 0.0
        %2346 = vmatpush1.xpose.msra.mxu0 %v2339
        %2347 = vmatprep.subr.mxu0 0.0
        %2348 = vmatpush1.xpose.msra.mxu0 %v2337
        %2349 = vmatprep.subr.mxu0 0.0
        %2350 = vmatpush1.xpose.msra.mxu0 %v2335
        %2351 = vmatprep.subr.mxu0 0.0
        %2352 = vmatpush1.xpose.msra.mxu0 %v2333
        %2353 = vmatprep.subr.mxu0 0.0
        %2354 = vmatpush1.xpose.msra.mxu0 %v2331
        %2355 = vmatprep.subr.mxu0 0.0
        %2356 = vmatpush1.xpose.msra.mxu0 %v2329
        %2357 = vmatprep.subr.mxu0 0.0
        %2358 = vmatpush1.xpose.msra.mxu0 %v2327
        %2359 = vmatprep.subr.mxu0 0.0
        %2360 = vmatpush1.xpose.msra.mxu0 %v2325
        %2361 = vmatprep.subr.mxu0 0.0
        %2362 = vmatpush1.xpose.msra.mxu0 %v2323
        %2363 = vmatprep.subr.mxu0 0.0
        %2364 = vmatpush1.xpose.msra.mxu0 %v2321
        %2365 = vmatprep.subr.mxu0 0.0
        %2366 = vmatpush1.xpose.msra.mxu0 %v2319
        %2367 = vmatprep.subr.mxu0 0.0
        %2368 = vmatpush1.xpose.msra.mxu0 %v2317
        %2369 = vmatprep.subr.mxu0 0.0
        %2370 = vmatpush1.xpose.msra.mxu0 %v2315
        %2371 = vmatprep.subr.mxu0 0.0
        %2372 = vmatpush1.xpose.msra.mxu0 %v2313
        %2373 = vmatprep.subr.mxu0 0.0
        %2374 = vmatpush1.xpose.msra.mxu0 %v2311
        %2375 = vmatprep.subr.mxu0 0.0
        %2376 = vmatpush2.xpose.msra.mxu0 0.0
        %2377 = vmatprep.subr.mxu0 0.0
        %2378 = vmatpush2.xpose.msra.mxu0 0.0
        %2379 = vmatprep.subr.mxu0 0.0
        %2380 = vmatpush2.xpose.msra.mxu0 0.0
        %2381 = vmatprep.subr.mxu0 0.0
        %2382 = vmatpush2.xpose.msra.mxu0 0.0
        %2383 = vmatprep.subr.mxu0 0.0
        %2384 = vmatpush2.xpose.msra.mxu0 0.0
        %2385 = vmatprep.subr.mxu0 0.0
        %2386 = vmatpush2.xpose.msra.mxu0 0.0
        %2387 = vmatprep.subr.mxu0 0.0
        %2388 = vmatpush2.xpose.msra.mxu0 0.0
        %2389 = vmatprep.subr.mxu0 0.0
        %2390 = vmatpush2.xpose.msra.mxu0 0.0
        %2391 = vmatprep.subr.mxu0 0.0
        %2392 = vmatpush2.xpose.msra.mxu0 0.0
        %2393 = vmatprep.subr.mxu0 0.0
        %2394 = vmatpush2.xpose.msra.mxu0 0.0
        %2395 = vmatprep.subr.mxu0 0.0
        %2396 = vmatpush2.xpose.msra.mxu0 0.0
        %2397 = vmatprep.subr.mxu0 0.0
        %2398 = vmatpush2.xpose.msra.mxu0 0.0
        %2399 = vmatprep.subr.mxu0 0.0
        %2400 = vmatpush2.xpose.msra.mxu0 0.0
        %2401 = vmatprep.subr.mxu0 0.0
        %2402 = vmatpush2.xpose.msra.mxu0 0.0
        %2403 = vmatprep.subr.mxu0 0.0
        %2404 = vmatpush2.xpose.msra.mxu0 0.0
        %2405 = vmatprep.subr.mxu0 0.0
        %2406 = vmatpush2.xpose.msra.mxu0 0.0
        %2407 = vmatprep.mubr.f32.mxu0 0.0
        %2408 = vmatmul.mubr.f32.gmra.mxu0 %v2295
        %v2409 = vpop.f32.mrf.mxu0
        %v2410 = vadd.f32 %v1190, %v2409
        %v2411 = vpop.f32.mrf.mxu0
        %2412 = vmatprep.mubr.f32.mxu0 0.0
        %2413 = vmatmul.mubr.f32.gmra.mxu0 %v2297
        %v2414 = vpop.f32.mrf.mxu0
        %v2415 = vadd.f32 %v1190, %v2414
        %v2416 = vpop.f32.mrf.mxu0
        %2417 = vmatprep.mubr.f32.mxu0 0.0
        %2418 = vmatmul.mubr.f32.gmra.mxu0 %v2299
        %v2419 = vpop.f32.mrf.mxu0
        %v2420 = vadd.f32 %v1190, %v2419
        %v2421 = vpop.f32.mrf.mxu0
        %2422 = vmatprep.mubr.f32.mxu0 0.0
        %2423 = vmatmul.mubr.f32.gmra.mxu0 %v2301
        %v2424 = vpop.f32.mrf.mxu0
        %v2425 = vadd.f32 %v1190, %v2424
        %v2426 = vpop.f32.mrf.mxu0
        %2427 = vmatprep.mubr.f32.mxu0 0.0
        %2428 = vmatmul.mubr.f32.gmra.mxu0 %v2303
        %v2429 = vpop.f32.mrf.mxu0
        %v2430 = vadd.f32 %v1190, %v2429
        %v2431 = vpop.f32.mrf.mxu0
        %2432 = vmatprep.mubr.f32.mxu0 0.0
        %2433 = vmatmul.mubr.f32.gmra.mxu0 %v2305
        %v2434 = vpop.f32.mrf.mxu0
        %v2435 = vadd.f32 %v1190, %v2434
        %v2436 = vpop.f32.mrf.mxu0
        %2437 = vmatprep.mubr.f32.mxu0 0.0
        %2438 = vmatmul.mubr.f32.gmra.mxu0 %v2307
        %v2439 = vpop.f32.mrf.mxu0
        %v2440 = vadd.f32 %v1190, %v2439
        %v2441 = vpop.f32.mrf.mxu0
        %2442 = vmatprep.mubr.f32.mxu0 0.0
        %2443 = vmatmul.mubr.f32.gmra.mxu0 %v2309
        %v2444 = vpop.f32.mrf.mxu0
        %v2445 = vadd.f32 %v1190, %v2444
        %v2446 = vpop.f32.mrf.mxu0
        %2447 = vdwg.mxu0
        %2448 = vmax.xlane.f32.xlu0 %v2410
        %v2449 = vpop.xlane.xlu0 %2448
        %2450 = vmax.xlane.f32.xlu0 %v2415
        %v2451 = vpop.xlane.xlu0 %2450
        %2452 = vmax.xlane.f32.xlu0 %v2420
        %v2453 = vpop.xlane.xlu0 %2452
        %2454 = vmax.xlane.f32.xlu0 %v2425
        %v2455 = vpop.xlane.xlu0 %2454
        %2456 = vmax.xlane.f32.xlu0 %v2430
        %v2457 = vpop.xlane.xlu0 %2456
        %2458 = vmax.xlane.f32.xlu0 %v2435
        %v2459 = vpop.xlane.xlu0 %2458
        %2460 = vmax.xlane.f32.xlu0 %v2440
        %v2461 = vpop.xlane.xlu0 %2460
        %2462 = vmax.xlane.f32.xlu0 %v2445
        %v2463 = vpop.xlane.xlu0 %2462
        %v2464 = vsub.f32 %v2410, %v2449
        %v2465 = vsub.f32 %v2415, %v2451
        %v2466 = vsub.f32 %v2420, %v2453
        %v2467 = vsub.f32 %v2425, %v2455
        %v2468 = vsub.f32 %v2430, %v2457
        %v2469 = vsub.f32 %v2435, %v2459
        %v2470 = vsub.f32 %v2440, %v2461
        %v2471 = vsub.f32 %v2445, %v2463
        %v2472 = vmul.f32 %v2464, 1.442695
        %v2473 = vpow.pop %v2472
        %v2474 = vmul.f32 %v2465, 1.442695
        %v2475 = vpow.pop %v2474
        %v2476 = vmul.f32 %v2466, 1.442695
        %v2477 = vpow.pop %v2476
        %v2478 = vmul.f32 %v2467, 1.442695
        %v2479 = vpow.pop %v2478
        %v2480 = vmul.f32 %v2468, 1.442695
        %v2481 = vpow.pop %v2480
        %v2482 = vmul.f32 %v2469, 1.442695
        %v2483 = vpow.pop %v2482
        %v2484 = vmul.f32 %v2470, 1.442695
        %v2485 = vpow.pop %v2484
        %v2486 = vmul.f32 %v2471, 1.442695
        %v2487 = vpow.pop %v2486
        %2488 = vadd.xlane.f32.xlu0 %v2473
        %v2489 = vpop.xlane.xlu0 %2488
        %2490 = vadd.xlane.f32.xlu0 %v2475
        %v2491 = vpop.xlane.xlu0 %2490
        %2492 = vadd.xlane.f32.xlu0 %v2477
        %v2493 = vpop.xlane.xlu0 %2492
        %2494 = vadd.xlane.f32.xlu0 %v2479
        %v2495 = vpop.xlane.xlu0 %2494
        %2496 = vadd.xlane.f32.xlu0 %v2481
        %v2497 = vpop.xlane.xlu0 %2496
        %2498 = vadd.xlane.f32.xlu0 %v2483
        %v2499 = vpop.xlane.xlu0 %2498
        %2500 = vadd.xlane.f32.xlu0 %v2485
        %v2501 = vpop.xlane.xlu0 %2500
        %2502 = vadd.xlane.f32.xlu0 %v2487
        %v2503 = vpop.xlane.xlu0 %2502
        %v2504 = vrcp.pop %v2489
        %v2505 = vrcp.pop %v2491
        %v2506 = vrcp.pop %v2493
        %v2507 = vrcp.pop %v2495
        %v2508 = vrcp.pop %v2497
        %v2509 = vrcp.pop %v2499
        %v2510 = vrcp.pop %v2501
        %v2511 = vrcp.pop %v2503
        %v2512 = vmul.f32 %v2473, %v2504
        %v2513 = vmul.f32 %v2475, %v2505
        %v2514 = vmul.f32 %v2477, %v2506
        %v2515 = vmul.f32 %v2479, %v2507
        %v2516 = vmul.f32 %v2481, %v2508
        %v2517 = vmul.f32 %v2483, %v2509
        %v2518 = vmul.f32 %v2485, %v2510
        %v2519 = vmul.f32 %v2487, %v2511
        %2520 = vrot.lane.b32.xlu0 %v1151, 64
        %v2521 = vpop.permute.xlu0 %2520
        %2522 = vrot.lane.b32.xlu0 %v1152, 64
        %v2523 = vpop.permute.xlu0 %2522
        %2524 = vrot.lane.b32.xlu0 %v1153, 64
        %v2525 = vpop.permute.xlu0 %2524
        %2526 = vrot.lane.b32.xlu0 %v1154, 64
        %v2527 = vpop.permute.xlu0 %2526
        %2528 = vrot.lane.b32.xlu0 %v1155, 64
        %v2529 = vpop.permute.xlu0 %2528
        %2530 = vrot.lane.b32.xlu0 %v1156, 64
        %v2531 = vpop.permute.xlu0 %2530
        %2532 = vrot.lane.b32.xlu0 %v1157, 64
        %v2533 = vpop.permute.xlu0 %2532
        %2534 = vrot.lane.b32.xlu0 %v1158, 64
        %v2535 = vpop.permute.xlu0 %2534
        %2536 = vrot.lane.b32.xlu0 %v1159, 64
        %v2537 = vpop.permute.xlu0 %2536
        %2538 = vrot.lane.b32.xlu0 %v1160, 64
        %v2539 = vpop.permute.xlu0 %2538
        %2540 = vrot.lane.b32.xlu0 %v1161, 64
        %v2541 = vpop.permute.xlu0 %2540
        %2542 = vrot.lane.b32.xlu0 %v1162, 64
        %v2543 = vpop.permute.xlu0 %2542
        %2544 = vrot.lane.b32.xlu0 %v1163, 64
        %v2545 = vpop.permute.xlu0 %2544
        %2546 = vrot.lane.b32.xlu0 %v1164, 64
        %v2547 = vpop.permute.xlu0 %2546
        %2548 = vrot.lane.b32.xlu0 %v1165, 64
        %v2549 = vpop.permute.xlu0 %2548
        %2550 = vrot.lane.b32.xlu0 %v1166, 64
        %v2551 = vpop.permute.xlu0 %2550
        %2568 = vmatprep.subr.mxu0 0.0
        %2569 = vmatpush1.msra.mxu0 %v2551
        %2570 = vmatprep.subr.mxu0 0.0
        %2571 = vmatpush1.msra.mxu0 %v2549
        %2572 = vmatprep.subr.mxu0 0.0
        %2573 = vmatpush1.msra.mxu0 %v2547
        %2574 = vmatprep.subr.mxu0 0.0
        %2575 = vmatpush1.msra.mxu0 %v2545
        %2576 = vmatprep.subr.mxu0 0.0
        %2577 = vmatpush1.msra.mxu0 %v2543
        %2578 = vmatprep.subr.mxu0 0.0
        %2579 = vmatpush1.msra.mxu0 %v2541
        %2580 = vmatprep.subr.mxu0 0.0
        %2581 = vmatpush1.msra.mxu0 %v2539
        %2582 = vmatprep.subr.mxu0 0.0
        %2583 = vmatpush1.msra.mxu0 %v2537
        %2584 = vmatprep.subr.mxu0 0.0
        %2585 = vmatpush1.msra.mxu0 %v2535
        %2586 = vmatprep.subr.mxu0 0.0
        %2587 = vmatpush1.msra.mxu0 %v2533
        %2588 = vmatprep.subr.mxu0 0.0
        %2589 = vmatpush1.msra.mxu0 %v2531
        %2590 = vmatprep.subr.mxu0 0.0
        %2591 = vmatpush1.msra.mxu0 %v2529
        %2592 = vmatprep.subr.mxu0 0.0
        %2593 = vmatpush1.msra.mxu0 %v2527
        %2594 = vmatprep.subr.mxu0 0.0
        %2595 = vmatpush1.msra.mxu0 %v2525
        %2596 = vmatprep.subr.mxu0 0.0
        %2597 = vmatpush1.msra.mxu0 %v2523
        %2598 = vmatprep.subr.mxu0 0.0
        %2599 = vmatpush1.msra.mxu0 %v2521
        %2600 = vmatprep.subr.mxu0 0.0
        %2601 = vmatpush2.msra.mxu0 0.0
        %2602 = vmatprep.subr.mxu0 0.0
        %2603 = vmatpush2.msra.mxu0 0.0
        %2604 = vmatprep.subr.mxu0 0.0
        %2605 = vmatpush2.msra.mxu0 0.0
        %2606 = vmatprep.subr.mxu0 0.0
        %2607 = vmatpush2.msra.mxu0 0.0
        %2608 = vmatprep.subr.mxu0 0.0
        %2609 = vmatpush2.msra.mxu0 0.0
        %2610 = vmatprep.subr.mxu0 0.0
        %2611 = vmatpush2.msra.mxu0 0.0
        %2612 = vmatprep.subr.mxu0 0.0
        %2613 = vmatpush2.msra.mxu0 0.0
        %2614 = vmatprep.subr.mxu0 0.0
        %2615 = vmatpush2.msra.mxu0 0.0
        %2616 = vmatprep.subr.mxu0 0.0
        %2617 = vmatpush2.msra.mxu0 0.0
        %2618 = vmatprep.subr.mxu0 0.0
        %2619 = vmatpush2.msra.mxu0 0.0
        %2620 = vmatprep.subr.mxu0 0.0
        %2621 = vmatpush2.msra.mxu0 0.0
        %2622 = vmatprep.subr.mxu0 0.0
        %2623 = vmatpush2.msra.mxu0 0.0
        %2624 = vmatprep.subr.mxu0 0.0
        %2625 = vmatpush2.msra.mxu0 0.0
        %2626 = vmatprep.subr.mxu0 0.0
        %2627 = vmatpush2.msra.mxu0 0.0
        %2628 = vmatprep.subr.mxu0 0.0
        %2629 = vmatpush2.msra.mxu0 0.0
        %2630 = vmatprep.subr.mxu0 0.0
        %2631 = vmatpush2.msra.mxu0 0.0
        %2632 = vmatprep.mubr.f32.mxu0 0.0
        %2633 = vmatmul.mubr.f32.gmra.mxu0 %v2512
        %v2634 = vpop.f32.mrf.mxu0
        %v2635 = vadd.f32 0.0, %v2634
        %v2636 = vpop.f32.mrf.mxu0
        %2637 = vmatprep.mubr.f32.mxu0 0.0
        %2638 = vmatmul.mubr.f32.gmra.mxu0 %v2513
        %v2639 = vpop.f32.mrf.mxu0
        %v2640 = vadd.f32 0.0, %v2639
        %v2641 = vpop.f32.mrf.mxu0
        %2642 = vmatprep.mubr.f32.mxu0 0.0
        %2643 = vmatmul.mubr.f32.gmra.mxu0 %v2514
        %v2644 = vpop.f32.mrf.mxu0
        %v2645 = vadd.f32 0.0, %v2644
        %v2646 = vpop.f32.mrf.mxu0
        %2647 = vmatprep.mubr.f32.mxu0 0.0
        %2648 = vmatmul.mubr.f32.gmra.mxu0 %v2515
        %v2649 = vpop.f32.mrf.mxu0
        %v2650 = vadd.f32 0.0, %v2649
        %v2651 = vpop.f32.mrf.mxu0
        %2652 = vmatprep.mubr.f32.mxu0 0.0
        %2653 = vmatmul.mubr.f32.gmra.mxu0 %v2516
        %v2654 = vpop.f32.mrf.mxu0
        %v2655 = vadd.f32 0.0, %v2654
        %v2656 = vpop.f32.mrf.mxu0
        %2657 = vmatprep.mubr.f32.mxu0 0.0
        %2658 = vmatmul.mubr.f32.gmra.mxu0 %v2517
        %v2659 = vpop.f32.mrf.mxu0
        %v2660 = vadd.f32 0.0, %v2659
        %v2661 = vpop.f32.mrf.mxu0
        %2662 = vmatprep.mubr.f32.mxu0 0.0
        %2663 = vmatmul.mubr.f32.gmra.mxu0 %v2518
        %v2664 = vpop.f32.mrf.mxu0
        %v2665 = vadd.f32 0.0, %v2664
        %v2666 = vpop.f32.mrf.mxu0
        %2667 = vmatprep.mubr.f32.mxu0 0.0
        %2668 = vmatmul.mubr.f32.gmra.mxu0 %v2519
        %v2669 = vpop.f32.mrf.mxu0
        %v2670 = vadd.f32 0.0, %v2669
        %v2671 = vpop.f32.mrf.mxu0
        %2672 = vdwg.mxu0
        %v2674 = vsel %vm1192, %v2635, 0
        %v2677 = vsel %vm1192, %v2640, 0
        %v2680 = vsel %vm1192, %v2645, 0
        %v2683 = vsel %vm1192, %v2650, 0
        %v2686 = vsel %vm1192, %v2655, 0
        %v2689 = vsel %vm1192, %v2660, 0
        %v2692 = vsel %vm1192, %v2665, 0
        %v2695 = vsel %vm1192, %v2670, 0
        %2697 = vmatprep.subr.mxu0 0.0
        %2698 = vmatpush1.msra.mxu0 0.0
        %2699 = vmatprep.subr.mxu0 0.0
        %2700 = vmatpush1.msra.mxu0 0.0
        %2701 = vmatprep.subr.mxu0 0.0
        %2702 = vmatpush1.msra.mxu0 0.0
        %2703 = vmatprep.subr.mxu0 0.0
        %2704 = vmatpush1.msra.mxu0 0.0
        %2705 = vmatprep.subr.mxu0 0.0
        %2706 = vmatpush1.msra.mxu0 0.0
        %2707 = vmatprep.subr.mxu0 0.0
        %2708 = vmatpush1.msra.mxu0 0.0
        %2709 = vmatprep.subr.mxu0 0.0
        %2710 = vmatpush1.msra.mxu0 0.0
        %2711 = vmatprep.subr.mxu0 0.0
        %2712 = vmatpush1.msra.mxu0 0.0
        %2713 = vmatprep.subr.mxu0 0.0
        %2714 = vmatpush1.msra.mxu0 0.0
        %2715 = vmatprep.subr.mxu0 0.0
        %2716 = vmatpush1.msra.mxu0 0.0
        %2717 = vmatprep.subr.mxu0 0.0
        %2718 = vmatpush1.msra.mxu0 0.0
        %2719 = vmatprep.subr.mxu0 0.0
        %2720 = vmatpush1.msra.mxu0 0.0
        %2721 = vmatprep.subr.mxu0 0.0
        %2722 = vmatpush1.msra.mxu0 %v1181
        %2723 = vmatprep.subr.mxu0 0.0
        %2724 = vmatpush1.msra.mxu0 %v1180
        %2725 = vmatprep.subr.mxu0 0.0
        %2726 = vmatpush1.msra.mxu0 %v1179
        %2727 = vmatprep.subr.mxu0 0.0
        %2728 = vmatpush1.msra.mxu0 %v1178
        %2729 = vmatprep.subr.mxu0 0.0
        %2730 = vmatpush2.msra.mxu0 0.0
        %2731 = vmatprep.subr.mxu0 0.0
        %2732 = vmatpush2.msra.mxu0 0.0
        %2733 = vmatprep.subr.mxu0 0.0
        %2734 = vmatpush2.msra.mxu0 0.0
        %2735 = vmatprep.subr.mxu0 0.0
        %2736 = vmatpush2.msra.mxu0 0.0
        %2737 = vmatprep.subr.mxu0 0.0
        %2738 = vmatpush2.msra.mxu0 0.0
        %2739 = vmatprep.subr.mxu0 0.0
        %2740 = vmatpush2.msra.mxu0 0.0
        %2741 = vmatprep.subr.mxu0 0.0
        %2742 = vmatpush2.msra.mxu0 0.0
        %2743 = vmatprep.subr.mxu0 0.0
        %2744 = vmatpush2.msra.mxu0 0.0
        %2745 = vmatprep.subr.mxu0 0.0
        %2746 = vmatpush2.msra.mxu0 0.0
        %2747 = vmatprep.subr.mxu0 0.0
        %2748 = vmatpush2.msra.mxu0 0.0
        %2749 = vmatprep.subr.mxu0 0.0
        %2750 = vmatpush2.msra.mxu0 0.0
        %2751 = vmatprep.subr.mxu0 0.0
        %2752 = vmatpush2.msra.mxu0 0.0
        %2753 = vmatprep.subr.mxu0 0.0
        %2754 = vmatpush2.msra.mxu0 0.0
        %2755 = vmatprep.subr.mxu0 0.0
        %2756 = vmatpush2.msra.mxu0 0.0
        %2757 = vmatprep.subr.mxu0 0.0
        %2758 = vmatpush2.msra.mxu0 0.0
        %2759 = vmatprep.subr.mxu0 0.0
        %2760 = vmatpush2.msra.mxu0 0.0
        %2761 = vmatprep.mubr.f32.mxu0 0.0
        %2762 = vmatmul.mubr.f32.gmra.mxu0 %v2674
        %v2763 = vpop.f32.mrf.mxu0
        %v2764 = vadd.f32 0.0, %v2763
        %v2765 = vpop.f32.mrf.mxu0
        %2766 = vmatprep.mubr.f32.mxu0 0.0
        %2767 = vmatmul.mubr.f32.gmra.mxu0 %v2677
        %v2768 = vpop.f32.mrf.mxu0
        %v2769 = vadd.f32 0.0, %v2768
        %v2770 = vpop.f32.mrf.mxu0
        %2771 = vmatprep.mubr.f32.mxu0 0.0
        %2772 = vmatmul.mubr.f32.gmra.mxu0 %v2680
        %v2773 = vpop.f32.mrf.mxu0
        %v2774 = vadd.f32 0.0, %v2773
        %v2775 = vpop.f32.mrf.mxu0
        %2776 = vmatprep.mubr.f32.mxu0 0.0
        %2777 = vmatmul.mubr.f32.gmra.mxu0 %v2683
        %v2778 = vpop.f32.mrf.mxu0
        %v2779 = vadd.f32 0.0, %v2778
        %v2780 = vpop.f32.mrf.mxu0
        %2781 = vmatprep.mubr.f32.mxu0 0.0
        %2782 = vmatmul.mubr.f32.gmra.mxu0 %v2686
        %v2783 = vpop.f32.mrf.mxu0
        %v2784 = vadd.f32 0.0, %v2783
        %v2785 = vpop.f32.mrf.mxu0
        %2786 = vmatprep.mubr.f32.mxu0 0.0
        %2787 = vmatmul.mubr.f32.gmra.mxu0 %v2689
        %v2788 = vpop.f32.mrf.mxu0
        %v2789 = vadd.f32 0.0, %v2788
        %v2790 = vpop.f32.mrf.mxu0
        %2791 = vmatprep.mubr.f32.mxu0 0.0
        %2792 = vmatmul.mubr.f32.gmra.mxu0 %v2692
        %v2793 = vpop.f32.mrf.mxu0
        %v2794 = vadd.f32 0.0, %v2793
        %v2795 = vpop.f32.mrf.mxu0
        %2796 = vmatprep.mubr.f32.mxu0 0.0
        %2797 = vmatmul.mubr.f32.gmra.mxu0 %v2695
        %v2798 = vpop.f32.mrf.mxu0
        %v2799 = vadd.f32 0.0, %v2798
        %v2800 = vpop.f32.mrf.mxu0
        %2801 = vdwg.mxu0
        %v2802 = vadd.f32 %v2209, %v2764
        %v2803 = vadd.f32 %v2214, %v2769
        %v2804 = vadd.f32 %v2219, %v2774
        %v2805 = vadd.f32 %v2224, %v2779
        %v2806 = vadd.f32 %v2229, %v2784
        %v2807 = vadd.f32 %v2234, %v2789
        %v2808 = vadd.f32 %v2239, %v2794
        %v2809 = vadd.f32 %v2244, %v2799
        %2810 = vrot.lane.b32.xlu0 %v1127, 32
        %v2811 = vpop.permute.xlu0 %2810
        %2812 = vrot.lane.b32.xlu0 %v1128, 32
        %v2813 = vpop.permute.xlu0 %2812
        %2814 = vrot.lane.b32.xlu0 %v1129, 32
        %v2815 = vpop.permute.xlu0 %2814
        %2816 = vrot.lane.b32.xlu0 %v1130, 32
        %v2817 = vpop.permute.xlu0 %2816
        %2818 = vrot.lane.b32.xlu0 %v1131, 32
        %v2819 = vpop.permute.xlu0 %2818
        %2820 = vrot.lane.b32.xlu0 %v1132, 32
        %v2821 = vpop.permute.xlu0 %2820
        %2822 = vrot.lane.b32.xlu0 %v1133, 32
        %v2823 = vpop.permute.xlu0 %2822
        %2824 = vrot.lane.b32.xlu0 %v1134, 32
        %v2825 = vpop.permute.xlu0 %2824
        %2826 = vrot.lane.b32.xlu0 %v1135, 32
        %v2827 = vpop.permute.xlu0 %2826
        %2828 = vrot.lane.b32.xlu0 %v1136, 32
        %v2829 = vpop.permute.xlu0 %2828
        %2830 = vrot.lane.b32.xlu0 %v1137, 32
        %v2831 = vpop.permute.xlu0 %2830
        %2832 = vrot.lane.b32.xlu0 %v1138, 32
        %v2833 = vpop.permute.xlu0 %2832
        %2834 = vrot.lane.b32.xlu0 %v1139, 32
        %v2835 = vpop.permute.xlu0 %2834
        %2836 = vrot.lane.b32.xlu0 %v1140, 32
        %v2837 = vpop.permute.xlu0 %2836
        %2838 = vrot.lane.b32.xlu0 %v1141, 32
        %v2839 = vpop.permute.xlu0 %2838
        %2840 = vrot.lane.b32.xlu0 %v1142, 32
        %v2841 = vpop.permute.xlu0 %2840
        %2842 = vrot.lane.b32.xlu0 %v1143, 32
        %v2843 = vpop.permute.xlu0 %2842
        %2844 = vrot.lane.b32.xlu0 %v1144, 32
        %v2845 = vpop.permute.xlu0 %2844
        %2846 = vrot.lane.b32.xlu0 %v1145, 32
        %v2847 = vpop.permute.xlu0 %2846
        %2848 = vrot.lane.b32.xlu0 %v1146, 32
        %v2849 = vpop.permute.xlu0 %2848
        %2850 = vrot.lane.b32.xlu0 %v1147, 32
        %v2851 = vpop.permute.xlu0 %2850
        %2852 = vrot.lane.b32.xlu0 %v1148, 32
        %v2853 = vpop.permute.xlu0 %2852
        %2854 = vrot.lane.b32.xlu0 %v1149, 32
        %v2855 = vpop.permute.xlu0 %2854
        %2856 = vrot.lane.b32.xlu0 %v1150, 32
        %v2857 = vpop.permute.xlu0 %2856
        %v2858 = vsel %vm1192, %v2811, 0
        %v2860 = vsel %vm1192, %v2813, 0
        %v2862 = vsel %vm1192, %v2815, 0
        %v2864 = vsel %vm1192, %v2817, 0
        %v2866 = vsel %vm1192, %v2819, 0
        %v2868 = vsel %vm1192, %v2821, 0
        %v2870 = vsel %vm1192, %v2823, 0
        %v2872 = vsel %vm1192, %v2825, 0
        %v2874 = vsel %vm1192, %v2827, 0
        %v2876 = vsel %vm1192, %v2829, 0
        %v2878 = vsel %vm1192, %v2831, 0
        %v2880 = vsel %vm1192, %v2833, 0
        %v2882 = vsel %vm1192, %v2835, 0
        %v2884 = vsel %vm1192, %v2837, 0
        %v2886 = vsel %vm1192, %v2839, 0
        %v2888 = vsel %vm1192, %v2841, 0
        %v2890 = vsel %vm1192, %v2843, 0
        %v2892 = vsel %vm1192, %v2845, 0
        %v2894 = vsel %vm1192, %v2847, 0
        %v2896 = vsel %vm1192, %v2849, 0
        %v2898 = vsel %vm1192, %v2851, 0
        %v2900 = vsel %vm1192, %v2853, 0
        %v2902 = vsel %vm1192, %v2855, 0
        %v2904 = vsel %vm1192, %v2857, 0
        %2906 = vmatprep.subr.mxu0 0.0
        %2907 = vmatpush1.xpose.msra.mxu0 %v2904
        %2908 = vmatprep.subr.mxu0 0.0
        %2909 = vmatpush1.xpose.msra.mxu0 %v2902
        %2910 = vmatprep.subr.mxu0 0.0
        %2911 = vmatpush1.xpose.msra.mxu0 %v2900
        %2912 = vmatprep.subr.mxu0 0.0
        %2913 = vmatpush1.xpose.msra.mxu0 %v2898
        %2914 = vmatprep.subr.mxu0 0.0
        %2915 = vmatpush1.xpose.msra.mxu0 %v2896
        %2916 = vmatprep.subr.mxu0 0.0
        %2917 = vmatpush1.xpose.msra.mxu0 %v2894
        %2918 = vmatprep.subr.mxu0 0.0
        %2919 = vmatpush1.xpose.msra.mxu0 %v2892
        %2920 = vmatprep.subr.mxu0 0.0
        %2921 = vmatpush1.xpose.msra.mxu0 %v2890
        %2922 = vmatprep.subr.mxu0 0.0
        %2923 = vmatpush1.xpose.msra.mxu0 %v2888
        %2924 = vmatprep.subr.mxu0 0.0
        %2925 = vmatpush1.xpose.msra.mxu0 %v2886
        %2926 = vmatprep.subr.mxu0 0.0
        %2927 = vmatpush1.xpose.msra.mxu0 %v2884
        %2928 = vmatprep.subr.mxu0 0.0
        %2929 = vmatpush1.xpose.msra.mxu0 %v2882
        %2930 = vmatprep.subr.mxu0 0.0
        %2931 = vmatpush1.xpose.msra.mxu0 %v2880
        %2932 = vmatprep.subr.mxu0 0.0
        %2933 = vmatpush1.xpose.msra.mxu0 %v2878
        %2934 = vmatprep.subr.mxu0 0.0
        %2935 = vmatpush1.xpose.msra.mxu0 %v2876
        %2936 = vmatprep.subr.mxu0 0.0
        %2937 = vmatpush1.xpose.msra.mxu0 %v2874
        %2938 = vmatprep.subr.mxu0 0.0
        %2939 = vmatpush2.xpose.msra.mxu0 0.0
        %2940 = vmatprep.subr.mxu0 0.0
        %2941 = vmatpush2.xpose.msra.mxu0 0.0
        %2942 = vmatprep.subr.mxu0 0.0
        %2943 = vmatpush2.xpose.msra.mxu0 0.0
        %2944 = vmatprep.subr.mxu0 0.0
        %2945 = vmatpush2.xpose.msra.mxu0 0.0
        %2946 = vmatprep.subr.mxu0 0.0
        %2947 = vmatpush2.xpose.msra.mxu0 0.0
        %2948 = vmatprep.subr.mxu0 0.0
        %2949 = vmatpush2.xpose.msra.mxu0 0.0
        %2950 = vmatprep.subr.mxu0 0.0
        %2951 = vmatpush2.xpose.msra.mxu0 0.0
        %2952 = vmatprep.subr.mxu0 0.0
        %2953 = vmatpush2.xpose.msra.mxu0 0.0
        %2954 = vmatprep.subr.mxu0 0.0
        %2955 = vmatpush2.xpose.msra.mxu0 0.0
        %2956 = vmatprep.subr.mxu0 0.0
        %2957 = vmatpush2.xpose.msra.mxu0 0.0
        %2958 = vmatprep.subr.mxu0 0.0
        %2959 = vmatpush2.xpose.msra.mxu0 0.0
        %2960 = vmatprep.subr.mxu0 0.0
        %2961 = vmatpush2.xpose.msra.mxu0 0.0
        %2962 = vmatprep.subr.mxu0 0.0
        %2963 = vmatpush2.xpose.msra.mxu0 0.0
        %2964 = vmatprep.subr.mxu0 0.0
        %2965 = vmatpush2.xpose.msra.mxu0 0.0
        %2966 = vmatprep.subr.mxu0 0.0
        %2967 = vmatpush2.xpose.msra.mxu0 0.0
        %2968 = vmatprep.subr.mxu0 0.0
        %2969 = vmatpush2.xpose.msra.mxu0 0.0
        %2970 = vmatprep.mubr.f32.mxu0 0.0
        %2971 = vmatmul.mubr.f32.gmra.mxu0 %v2858
        %v2972 = vpop.f32.mrf.mxu0
        %v2973 = vadd.f32 %v1190, %v2972
        %v2974 = vpop.f32.mrf.mxu0
        %2975 = vmatprep.mubr.f32.mxu0 0.0
        %2976 = vmatmul.mubr.f32.gmra.mxu0 %v2860
        %v2977 = vpop.f32.mrf.mxu0
        %v2978 = vadd.f32 %v1190, %v2977
        %v2979 = vpop.f32.mrf.mxu0
        %2980 = vmatprep.mubr.f32.mxu0 0.0
        %2981 = vmatmul.mubr.f32.gmra.mxu0 %v2862
        %v2982 = vpop.f32.mrf.mxu0
        %v2983 = vadd.f32 %v1190, %v2982
        %v2984 = vpop.f32.mrf.mxu0
        %2985 = vmatprep.mubr.f32.mxu0 0.0
        %2986 = vmatmul.mubr.f32.gmra.mxu0 %v2864
        %v2987 = vpop.f32.mrf.mxu0
        %v2988 = vadd.f32 %v1190, %v2987
        %v2989 = vpop.f32.mrf.mxu0
        %2990 = vmatprep.mubr.f32.mxu0 0.0
        %2991 = vmatmul.mubr.f32.gmra.mxu0 %v2866
        %v2992 = vpop.f32.mrf.mxu0
        %v2993 = vadd.f32 %v1190, %v2992
        %v2994 = vpop.f32.mrf.mxu0
        %2995 = vmatprep.mubr.f32.mxu0 0.0
        %2996 = vmatmul.mubr.f32.gmra.mxu0 %v2868
        %v2997 = vpop.f32.mrf.mxu0
        %v2998 = vadd.f32 %v1190, %v2997
        %v2999 = vpop.f32.mrf.mxu0
        %3000 = vmatprep.mubr.f32.mxu0 0.0
        %3001 = vmatmul.mubr.f32.gmra.mxu0 %v2870
        %v3002 = vpop.f32.mrf.mxu0
        %v3003 = vadd.f32 %v1190, %v3002
        %v3004 = vpop.f32.mrf.mxu0
        %3005 = vmatprep.mubr.f32.mxu0 0.0
        %3006 = vmatmul.mubr.f32.gmra.mxu0 %v2872
        %v3007 = vpop.f32.mrf.mxu0
        %v3008 = vadd.f32 %v1190, %v3007
        %v3009 = vpop.f32.mrf.mxu0
        %3010 = vdwg.mxu0
        %3011 = vmax.xlane.f32.xlu0 %v2973
        %v3012 = vpop.xlane.xlu0 %3011
        %3013 = vmax.xlane.f32.xlu0 %v2978
        %v3014 = vpop.xlane.xlu0 %3013
        %3015 = vmax.xlane.f32.xlu0 %v2983
        %v3016 = vpop.xlane.xlu0 %3015
        %3017 = vmax.xlane.f32.xlu0 %v2988
        %v3018 = vpop.xlane.xlu0 %3017
        %3019 = vmax.xlane.f32.xlu0 %v2993
        %v3020 = vpop.xlane.xlu0 %3019
        %3021 = vmax.xlane.f32.xlu0 %v2998
        %v3022 = vpop.xlane.xlu0 %3021
        %3023 = vmax.xlane.f32.xlu0 %v3003
        %v3024 = vpop.xlane.xlu0 %3023
        %3025 = vmax.xlane.f32.xlu0 %v3008
        %v3026 = vpop.xlane.xlu0 %3025
        %v3027 = vsub.f32 %v2973, %v3012
        %v3028 = vsub.f32 %v2978, %v3014
        %v3029 = vsub.f32 %v2983, %v3016
        %v3030 = vsub.f32 %v2988, %v3018
        %v3031 = vsub.f32 %v2993, %v3020
        %v3032 = vsub.f32 %v2998, %v3022
        %v3033 = vsub.f32 %v3003, %v3024
        %v3034 = vsub.f32 %v3008, %v3026
        %v3035 = vmul.f32 %v3027, 1.442695
        %v3036 = vpow.pop %v3035
        %v3037 = vmul.f32 %v3028, 1.442695
        %v3038 = vpow.pop %v3037
        %v3039 = vmul.f32 %v3029, 1.442695
        %v3040 = vpow.pop %v3039
        %v3041 = vmul.f32 %v3030, 1.442695
        %v3042 = vpow.pop %v3041
        %v3043 = vmul.f32 %v3031, 1.442695
        %v3044 = vpow.pop %v3043
        %v3045 = vmul.f32 %v3032, 1.442695
        %v3046 = vpow.pop %v3045
        %v3047 = vmul.f32 %v3033, 1.442695
        %v3048 = vpow.pop %v3047
        %v3049 = vmul.f32 %v3034, 1.442695
        %v3050 = vpow.pop %v3049
        %3051 = vadd.xlane.f32.xlu0 %v3036
        %v3052 = vpop.xlane.xlu0 %3051
        %3053 = vadd.xlane.f32.xlu0 %v3038
        %v3054 = vpop.xlane.xlu0 %3053
        %3055 = vadd.xlane.f32.xlu0 %v3040
        %v3056 = vpop.xlane.xlu0 %3055
        %3057 = vadd.xlane.f32.xlu0 %v3042
        %v3058 = vpop.xlane.xlu0 %3057
        %3059 = vadd.xlane.f32.xlu0 %v3044
        %v3060 = vpop.xlane.xlu0 %3059
        %3061 = vadd.xlane.f32.xlu0 %v3046
        %v3062 = vpop.xlane.xlu0 %3061
        %3063 = vadd.xlane.f32.xlu0 %v3048
        %v3064 = vpop.xlane.xlu0 %3063
        %3065 = vadd.xlane.f32.xlu0 %v3050
        %v3066 = vpop.xlane.xlu0 %3065
        %v3067 = vrcp.pop %v3052
        %v3068 = vrcp.pop %v3054
        %v3069 = vrcp.pop %v3056
        %v3070 = vrcp.pop %v3058
        %v3071 = vrcp.pop %v3060
        %v3072 = vrcp.pop %v3062
        %v3073 = vrcp.pop %v3064
        %v3074 = vrcp.pop %v3066
        %v3075 = vmul.f32 %v3036, %v3067
        %v3076 = vmul.f32 %v3038, %v3068
        %v3077 = vmul.f32 %v3040, %v3069
        %v3078 = vmul.f32 %v3042, %v3070
        %v3079 = vmul.f32 %v3044, %v3071
        %v3080 = vmul.f32 %v3046, %v3072
        %v3081 = vmul.f32 %v3048, %v3073
        %v3082 = vmul.f32 %v3050, %v3074
        %3083 = vrot.lane.b32.xlu0 %v1151, 32
        %v3084 = vpop.permute.xlu0 %3083
        %3085 = vrot.lane.b32.xlu0 %v1152, 32
        %v3086 = vpop.permute.xlu0 %3085
        %3087 = vrot.lane.b32.xlu0 %v1153, 32
        %v3088 = vpop.permute.xlu0 %3087
        %3089 = vrot.lane.b32.xlu0 %v1154, 32
        %v3090 = vpop.permute.xlu0 %3089
        %3091 = vrot.lane.b32.xlu0 %v1155, 32
        %v3092 = vpop.permute.xlu0 %3091
        %3093 = vrot.lane.b32.xlu0 %v1156, 32
        %v3094 = vpop.permute.xlu0 %3093
        %3095 = vrot.lane.b32.xlu0 %v1157, 32
        %v3096 = vpop.permute.xlu0 %3095
        %3097 = vrot.lane.b32.xlu0 %v1158, 32
        %v3098 = vpop.permute.xlu0 %3097
        %3099 = vrot.lane.b32.xlu0 %v1159, 32
        %v3100 = vpop.permute.xlu0 %3099
        %3101 = vrot.lane.b32.xlu0 %v1160, 32
        %v3102 = vpop.permute.xlu0 %3101
        %3103 = vrot.lane.b32.xlu0 %v1161, 32
        %v3104 = vpop.permute.xlu0 %3103
        %3105 = vrot.lane.b32.xlu0 %v1162, 32
        %v3106 = vpop.permute.xlu0 %3105
        %3107 = vrot.lane.b32.xlu0 %v1163, 32
        %v3108 = vpop.permute.xlu0 %3107
        %3109 = vrot.lane.b32.xlu0 %v1164, 32
        %v3110 = vpop.permute.xlu0 %3109
        %3111 = vrot.lane.b32.xlu0 %v1165, 32
        %v3112 = vpop.permute.xlu0 %3111
        %3113 = vrot.lane.b32.xlu0 %v1166, 32
        %v3114 = vpop.permute.xlu0 %3113
        %3131 = vmatprep.subr.mxu0 0.0
        %3132 = vmatpush1.msra.mxu0 %v3114
        %3133 = vmatprep.subr.mxu0 0.0
        %3134 = vmatpush1.msra.mxu0 %v3112
        %3135 = vmatprep.subr.mxu0 0.0
        %3136 = vmatpush1.msra.mxu0 %v3110
        %3137 = vmatprep.subr.mxu0 0.0
        %3138 = vmatpush1.msra.mxu0 %v3108
        %3139 = vmatprep.subr.mxu0 0.0
        %3140 = vmatpush1.msra.mxu0 %v3106
        %3141 = vmatprep.subr.mxu0 0.0
        %3142 = vmatpush1.msra.mxu0 %v3104
        %3143 = vmatprep.subr.mxu0 0.0
        %3144 = vmatpush1.msra.mxu0 %v3102
        %3145 = vmatprep.subr.mxu0 0.0
        %3146 = vmatpush1.msra.mxu0 %v3100
        %3147 = vmatprep.subr.mxu0 0.0
        %3148 = vmatpush1.msra.mxu0 %v3098
        %3149 = vmatprep.subr.mxu0 0.0
        %3150 = vmatpush1.msra.mxu0 %v3096
        %3151 = vmatprep.subr.mxu0 0.0
        %3152 = vmatpush1.msra.mxu0 %v3094
        %3153 = vmatprep.subr.mxu0 0.0
        %3154 = vmatpush1.msra.mxu0 %v3092
        %3155 = vmatprep.subr.mxu0 0.0
        %3156 = vmatpush1.msra.mxu0 %v3090
        %3157 = vmatprep.subr.mxu0 0.0
        %3158 = vmatpush1.msra.mxu0 %v3088
        %3159 = vmatprep.subr.mxu0 0.0
        %3160 = vmatpush1.msra.mxu0 %v3086
        %3161 = vmatprep.subr.mxu0 0.0
        %3162 = vmatpush1.msra.mxu0 %v3084
        %3163 = vmatprep.subr.mxu0 0.0
        %3164 = vmatpush2.msra.mxu0 0.0
        %3165 = vmatprep.subr.mxu0 0.0
        %3166 = vmatpush2.msra.mxu0 0.0
        %3167 = vmatprep.subr.mxu0 0.0
        %3168 = vmatpush2.msra.mxu0 0.0
        %3169 = vmatprep.subr.mxu0 0.0
        %3170 = vmatpush2.msra.mxu0 0.0
        %3171 = vmatprep.subr.mxu0 0.0
        %3172 = vmatpush2.msra.mxu0 0.0
        %3173 = vmatprep.subr.mxu0 0.0
        %3174 = vmatpush2.msra.mxu0 0.0
        %3175 = vmatprep.subr.mxu0 0.0
        %3176 = vmatpush2.msra.mxu0 0.0
        %3177 = vmatprep.subr.mxu0 0.0
        %3178 = vmatpush2.msra.mxu0 0.0
        %3179 = vmatprep.subr.mxu0 0.0
        %3180 = vmatpush2.msra.mxu0 0.0
        %3181 = vmatprep.subr.mxu0 0.0
        %3182 = vmatpush2.msra.mxu0 0.0
        %3183 = vmatprep.subr.mxu0 0.0
        %3184 = vmatpush2.msra.mxu0 0.0
        %3185 = vmatprep.subr.mxu0 0.0
        %3186 = vmatpush2.msra.mxu0 0.0
        %3187 = vmatprep.subr.mxu0 0.0
        %3188 = vmatpush2.msra.mxu0 0.0
        %3189 = vmatprep.subr.mxu0 0.0
        %3190 = vmatpush2.msra.mxu0 0.0
        %3191 = vmatprep.subr.mxu0 0.0
        %3192 = vmatpush2.msra.mxu0 0.0
        %3193 = vmatprep.subr.mxu0 0.0
        %3194 = vmatpush2.msra.mxu0 0.0
        %3195 = vmatprep.mubr.f32.mxu0 0.0
        %3196 = vmatmul.mubr.f32.gmra.mxu0 %v3075
        %v3197 = vpop.f32.mrf.mxu0
        %v3198 = vadd.f32 0.0, %v3197
        %v3199 = vpop.f32.mrf.mxu0
        %3200 = vmatprep.mubr.f32.mxu0 0.0
        %3201 = vmatmul.mubr.f32.gmra.mxu0 %v3076
        %v3202 = vpop.f32.mrf.mxu0
        %v3203 = vadd.f32 0.0, %v3202
        %v3204 = vpop.f32.mrf.mxu0
        %3205 = vmatprep.mubr.f32.mxu0 0.0
        %3206 = vmatmul.mubr.f32.gmra.mxu0 %v3077
        %v3207 = vpop.f32.mrf.mxu0
        %v3208 = vadd.f32 0.0, %v3207
        %v3209 = vpop.f32.mrf.mxu0
        %3210 = vmatprep.mubr.f32.mxu0 0.0
        %3211 = vmatmul.mubr.f32.gmra.mxu0 %v3078
        %v3212 = vpop.f32.mrf.mxu0
        %v3213 = vadd.f32 0.0, %v3212
        %v3214 = vpop.f32.mrf.mxu0
        %3215 = vmatprep.mubr.f32.mxu0 0.0
        %3216 = vmatmul.mubr.f32.gmra.mxu0 %v3079
        %v3217 = vpop.f32.mrf.mxu0
        %v3218 = vadd.f32 0.0, %v3217
        %v3219 = vpop.f32.mrf.mxu0
        %3220 = vmatprep.mubr.f32.mxu0 0.0
        %3221 = vmatmul.mubr.f32.gmra.mxu0 %v3080
        %v3222 = vpop.f32.mrf.mxu0
        %v3223 = vadd.f32 0.0, %v3222
        %v3224 = vpop.f32.mrf.mxu0
        %3225 = vmatprep.mubr.f32.mxu0 0.0
        %3226 = vmatmul.mubr.f32.gmra.mxu0 %v3081
        %v3227 = vpop.f32.mrf.mxu0
        %v3228 = vadd.f32 0.0, %v3227
        %v3229 = vpop.f32.mrf.mxu0
        %3230 = vmatprep.mubr.f32.mxu0 0.0
        %3231 = vmatmul.mubr.f32.gmra.mxu0 %v3082
        %v3232 = vpop.f32.mrf.mxu0
        %v3233 = vadd.f32 0.0, %v3232
        %v3234 = vpop.f32.mrf.mxu0
        %3235 = vdwg.mxu0
        %v3237 = vsel %vm1192, %v3198, 0
        %v3240 = vsel %vm1192, %v3203, 0
        %v3243 = vsel %vm1192, %v3208, 0
        %v3246 = vsel %vm1192, %v3213, 0
        %v3249 = vsel %vm1192, %v3218, 0
        %v3252 = vsel %vm1192, %v3223, 0
        %v3255 = vsel %vm1192, %v3228, 0
        %v3258 = vsel %vm1192, %v3233, 0
        %3260 = vmatprep.subr.mxu0 0.0
        %3261 = vmatpush1.msra.mxu0 0.0
        %3262 = vmatprep.subr.mxu0 0.0
        %3263 = vmatpush1.msra.mxu0 0.0
        %3264 = vmatprep.subr.mxu0 0.0
        %3265 = vmatpush1.msra.mxu0 0.0
        %3266 = vmatprep.subr.mxu0 0.0
        %3267 = vmatpush1.msra.mxu0 0.0
        %3268 = vmatprep.subr.mxu0 0.0
        %3269 = vmatpush1.msra.mxu0 0.0
        %3270 = vmatprep.subr.mxu0 0.0
        %3271 = vmatpush1.msra.mxu0 0.0
        %3272 = vmatprep.subr.mxu0 0.0
        %3273 = vmatpush1.msra.mxu0 0.0
        %3274 = vmatprep.subr.mxu0 0.0
        %3275 = vmatpush1.msra.mxu0 0.0
        %3276 = vmatprep.subr.mxu0 0.0
        %3277 = vmatpush1.msra.mxu0 0.0
        %3278 = vmatprep.subr.mxu0 0.0
        %3279 = vmatpush1.msra.mxu0 0.0
        %3280 = vmatprep.subr.mxu0 0.0
        %3281 = vmatpush1.msra.mxu0 0.0
        %3282 = vmatprep.subr.mxu0 0.0
        %3283 = vmatpush1.msra.mxu0 0.0
        %3284 = vmatprep.subr.mxu0 0.0
        %3285 = vmatpush1.msra.mxu0 %v1185
        %3286 = vmatprep.subr.mxu0 0.0
        %3287 = vmatpush1.msra.mxu0 %v1184
        %3288 = vmatprep.subr.mxu0 0.0
        %3289 = vmatpush1.msra.mxu0 %v1183
        %3290 = vmatprep.subr.mxu0 0.0
        %3291 = vmatpush1.msra.mxu0 %v1182
        %3292 = vmatprep.subr.mxu0 0.0
        %3293 = vmatpush2.msra.mxu0 0.0
        %3294 = vmatprep.subr.mxu0 0.0
        %3295 = vmatpush2.msra.mxu0 0.0
        %3296 = vmatprep.subr.mxu0 0.0
        %3297 = vmatpush2.msra.mxu0 0.0
        %3298 = vmatprep.subr.mxu0 0.0
        %3299 = vmatpush2.msra.mxu0 0.0
        %3300 = vmatprep.subr.mxu0 0.0
        %3301 = vmatpush2.msra.mxu0 0.0
        %3302 = vmatprep.subr.mxu0 0.0
        %3303 = vmatpush2.msra.mxu0 0.0
        %3304 = vmatprep.subr.mxu0 0.0
        %3305 = vmatpush2.msra.mxu0 0.0
        %3306 = vmatprep.subr.mxu0 0.0
        %3307 = vmatpush2.msra.mxu0 0.0
        %3308 = vmatprep.subr.mxu0 0.0
        %3309 = vmatpush2.msra.mxu0 0.0
        %3310 = vmatprep.subr.mxu0 0.0
        %3311 = vmatpush2.msra.mxu0 0.0
        %3312 = vmatprep.subr.mxu0 0.0
        %3313 = vmatpush2.msra.mxu0 0.0
        %3314 = vmatprep.subr.mxu0 0.0
        %3315 = vmatpush2.msra.mxu0 0.0
        %3316 = vmatprep.subr.mxu0 0.0
        %3317 = vmatpush2.msra.mxu0 0.0
        %3318 = vmatprep.subr.mxu0 0.0
        %3319 = vmatpush2.msra.mxu0 0.0
        %3320 = vmatprep.subr.mxu0 0.0
        %3321 = vmatpush2.msra.mxu0 0.0
        %3322 = vmatprep.subr.mxu0 0.0
        %3323 = vmatpush2.msra.mxu0 0.0
        %3324 = vmatprep.mubr.f32.mxu0 0.0
        %3325 = vmatmul.mubr.f32.gmra.mxu0 %v3237
        %v3326 = vpop.f32.mrf.mxu0
        %v3327 = vadd.f32 0.0, %v3326
        %v3328 = vpop.f32.mrf.mxu0
        %3329 = vmatprep.mubr.f32.mxu0 0.0
        %3330 = vmatmul.mubr.f32.gmra.mxu0 %v3240
        %v3331 = vpop.f32.mrf.mxu0
        %v3332 = vadd.f32 0.0, %v3331
        %v3333 = vpop.f32.mrf.mxu0
        %3334 = vmatprep.mubr.f32.mxu0 0.0
        %3335 = vmatmul.mubr.f32.gmra.mxu0 %v3243
        %v3336 = vpop.f32.mrf.mxu0
        %v3337 = vadd.f32 0.0, %v3336
        %v3338 = vpop.f32.mrf.mxu0
        %3339 = vmatprep.mubr.f32.mxu0 0.0
        %3340 = vmatmul.mubr.f32.gmra.mxu0 %v3246
        %v3341 = vpop.f32.mrf.mxu0
        %v3342 = vadd.f32 0.0, %v3341
        %v3343 = vpop.f32.mrf.mxu0
        %3344 = vmatprep.mubr.f32.mxu0 0.0
        %3345 = vmatmul.mubr.f32.gmra.mxu0 %v3249
        %v3346 = vpop.f32.mrf.mxu0
        %v3347 = vadd.f32 0.0, %v3346
        %v3348 = vpop.f32.mrf.mxu0
        %3349 = vmatprep.mubr.f32.mxu0 0.0
        %3350 = vmatmul.mubr.f32.gmra.mxu0 %v3252
        %v3351 = vpop.f32.mrf.mxu0
        %v3352 = vadd.f32 0.0, %v3351
        %v3353 = vpop.f32.mrf.mxu0
        %3354 = vmatprep.mubr.f32.mxu0 0.0
        %3355 = vmatmul.mubr.f32.gmra.mxu0 %v3255
        %v3356 = vpop.f32.mrf.mxu0
        %v3357 = vadd.f32 0.0, %v3356
        %v3358 = vpop.f32.mrf.mxu0
        %3359 = vmatprep.mubr.f32.mxu0 0.0
        %3360 = vmatmul.mubr.f32.gmra.mxu0 %v3258
        %v3361 = vpop.f32.mrf.mxu0
        %v3362 = vadd.f32 0.0, %v3361
        %v3363 = vpop.f32.mrf.mxu0
        %3364 = vdwg.mxu0
        %v3365 = vadd.f32 %v2802, %v3327
        %v3366 = vadd.f32 %v2803, %v3332
        %v3367 = vadd.f32 %v2804, %v3337
        %v3368 = vadd.f32 %v2805, %v3342
        %v3369 = vadd.f32 %v2806, %v3347
        %v3370 = vadd.f32 %v2807, %v3352
        %v3371 = vadd.f32 %v2808, %v3357
        %v3372 = vadd.f32 %v2809, %v3362
        %v3373 = vadd.f32 %v998, %v3365
        %v3374 = vadd.f32 %v999, %v3366
        %v3375 = vadd.f32 %v1000, %v3367
        %v3376 = vadd.f32 %v1001, %v3368
        %v3377 = vadd.f32 %v1002, %v3369
        %v3378 = vadd.f32 %v1003, %v3370
        %v3379 = vadd.f32 %v1004, %v3371
        %v3380 = vadd.f32 %v1005, %v3372
        %3381 = vadd.xlane.f32.xlu0 %v3373
        %v3382 = vpop.xlane.xlu0 %3381
        %3383 = vadd.xlane.f32.xlu0 %v3374
        %v3384 = vpop.xlane.xlu0 %3383
        %3385 = vadd.xlane.f32.xlu0 %v3375
        %v3386 = vpop.xlane.xlu0 %3385
        %3387 = vadd.xlane.f32.xlu0 %v3376
        %v3388 = vpop.xlane.xlu0 %3387
        %3389 = vadd.xlane.f32.xlu0 %v3377
        %v3390 = vpop.xlane.xlu0 %3389
        %3391 = vadd.xlane.f32.xlu0 %v3378
        %v3392 = vpop.xlane.xlu0 %3391
        %3393 = vadd.xlane.f32.xlu0 %v3379
        %v3394 = vpop.xlane.xlu0 %3393
        %3395 = vadd.xlane.f32.xlu0 %v3380
        %v3396 = vpop.xlane.xlu0 %3395
        %v3397 = vrcp.pop 128.0
        %v3398 = vmul.f32 %v3382, %v3397
        %v3399 = vmul.f32 %v3384, %v3397
        %v3400 = vmul.f32 %v3386, %v3397
        %v3401 = vmul.f32 %v3388, %v3397
        %v3402 = vmul.f32 %v3390, %v3397
        %v3403 = vmul.f32 %v3392, %v3397
        %v3404 = vmul.f32 %v3394, %v3397
        %v3405 = vmul.f32 %v3396, %v3397
        %v3406 = vsub.f32 %v3373, %v3398
        %v3407 = vsub.f32 %v3374, %v3399
        %v3408 = vsub.f32 %v3375, %v3400
        %v3409 = vsub.f32 %v3376, %v3401
        %v3410 = vsub.f32 %v3377, %v3402
        %v3411 = vsub.f32 %v3378, %v3403
        %v3412 = vsub.f32 %v3379, %v3404
        %v3413 = vsub.f32 %v3380, %v3405
        %v3414 = vmul.f32 %v3406, %v3406
        %v3415 = vmul.f32 %v3407, %v3407
        %v3416 = vmul.f32 %v3408, %v3408
        %v3417 = vmul.f32 %v3409, %v3409
        %v3418 = vmul.f32 %v3410, %v3410
        %v3419 = vmul.f32 %v3411, %v3411
        %v3420 = vmul.f32 %v3412, %v3412
        %v3421 = vmul.f32 %v3413, %v3413
        %3422 = vadd.xlane.f32.xlu0 %v3414
        %v3423 = vpop.xlane.xlu0 %3422
        %3424 = vadd.xlane.f32.xlu0 %v3415
        %v3425 = vpop.xlane.xlu0 %3424
        %3426 = vadd.xlane.f32.xlu0 %v3416
        %v3427 = vpop.xlane.xlu0 %3426
        %3428 = vadd.xlane.f32.xlu0 %v3417
        %v3429 = vpop.xlane.xlu0 %3428
        %3430 = vadd.xlane.f32.xlu0 %v3418
        %v3431 = vpop.xlane.xlu0 %3430
        %3432 = vadd.xlane.f32.xlu0 %v3419
        %v3433 = vpop.xlane.xlu0 %3432
        %3434 = vadd.xlane.f32.xlu0 %v3420
        %v3435 = vpop.xlane.xlu0 %3434
        %3436 = vadd.xlane.f32.xlu0 %v3421
        %v3437 = vpop.xlane.xlu0 %3436
        %v3438 = vmul.f32 %v3423, %v3397
        %v3439 = vmul.f32 %v3425, %v3397
        %v3440 = vmul.f32 %v3427, %v3397
        %v3441 = vmul.f32 %v3429, %v3397
        %v3442 = vmul.f32 %v3431, %v3397
        %v3443 = vmul.f32 %v3433, %v3397
        %v3444 = vmul.f32 %v3435, %v3397
        %v3445 = vmul.f32 %v3437, %v3397
        %v3446 = vadd.f32 %v3438, 1e-05
        %v3447 = vadd.f32 %v3439, 1e-05
        %v3448 = vadd.f32 %v3440, 1e-05
        %v3449 = vadd.f32 %v3441, 1e-05
        %v3450 = vadd.f32 %v3442, 1e-05
        %v3451 = vadd.f32 %v3443, 1e-05
        %v3452 = vadd.f32 %v3444, 1e-05
        %v3453 = vadd.f32 %v3445, 1e-05
        %v3454 = vrsqrt.pop %v3446
        %v3455 = vrsqrt.pop %v3447
        %v3456 = vrsqrt.pop %v3448
        %v3457 = vrsqrt.pop %v3449
        %v3458 = vrsqrt.pop %v3450
        %v3459 = vrsqrt.pop %v3451
        %v3460 = vrsqrt.pop %v3452
        %v3461 = vrsqrt.pop %v3453
        %v3462 = vmul.f32 %v3406, %v3454
        %v3463 = vmul.f32 %v3407, %v3455
        %v3464 = vmul.f32 %v3408, %v3456
        %v3465 = vmul.f32 %v3409, %v3457
        %v3466 = vmul.f32 %v3410, %v3458
        %v3467 = vmul.f32 %v3411, %v3459
        %v3468 = vmul.f32 %v3412, %v3460
        %v3469 = vmul.f32 %v3413, %v3461
        %v3470 = vld [vmem:[%s10] sm:$0x1]
        %v3472 = vlaneseq
        %v3473 = vshrl.u32 %v3472, 7
        %v3474 = vsub.s32 0, %v3473
        %v3475 = vrot.slane %v3470, %v3474
        %v3477 = vmul.f32 %v3462, %v3475
        %v3478 = vmul.f32 %v3463, %v3475
        %v3479 = vmul.f32 %v3464, %v3475
        %v3480 = vmul.f32 %v3465, %v3475
        %v3481 = vmul.f32 %v3466, %v3475
        %v3482 = vmul.f32 %v3467, %v3475
        %v3483 = vmul.f32 %v3468, %v3475
        %v3484 = vmul.f32 %v3469, %v3475
        %v3485 = vld [vmem:[%s11] sm:$0x1]
        %v3487 = vlaneseq
        %v3488 = vshrl.u32 %v3487, 7
        %v3489 = vsub.s32 0, %v3488
        %v3490 = vrot.slane %v3485, %v3489
        %v3492 = vadd.f32 %v3477, %v3490
        %v3493 = vadd.f32 %v3478, %v3490
        %v3494 = vadd.f32 %v3479, %v3490
        %v3495 = vadd.f32 %v3480, %v3490
        %v3496 = vadd.f32 %v3481, %v3490
        %v3497 = vadd.f32 %v3482, %v3490
        %v3498 = vadd.f32 %v3483, %v3490
        %v3499 = vadd.f32 %v3484, %v3490
        %v3500 = vld [vmem:[#allocation15] sm:$0xff]
        %v3501 = vld [vmem:[#allocation15 + $0x8] sm:$0xff]
        %v3502 = vld [vmem:[#allocation15 + $0x10] sm:$0xff]
        %v3503 = vld [vmem:[#allocation15 + $0x18] sm:$0xff]
        %v3504 = vld [vmem:[#allocation15 + $0x20] sm:$0xff]
        %v3505 = vld [vmem:[#allocation15 + $0x28] sm:$0xff]
        %v3506 = vld [vmem:[#allocation15 + $0x30] sm:$0xff]
        %v3507 = vld [vmem:[#allocation15 + $0x38] sm:$0xff]
        %v3508 = vld [vmem:[#allocation15 + $0x40] sm:$0xff]
        %v3509 = vld [vmem:[#allocation15 + $0x48] sm:$0xff]
        %v3510 = vld [vmem:[#allocation15 + $0x50] sm:$0xff]
        %v3511 = vld [vmem:[#allocation15 + $0x58] sm:$0xff]
        %v3512 = vld [vmem:[#allocation15 + $0x60] sm:$0xff]
        %v3513 = vld [vmem:[#allocation15 + $0x68] sm:$0xff]
        %v3514 = vld [vmem:[#allocation15 + $0x70] sm:$0xff]
        %v3515 = vld [vmem:[#allocation15 + $0x78] sm:$0xff]
        %v3516 = vld [vmem:[%s7] sm:$0x1]
        %v3518 = vlaneseq
        %v3519 = vshrl.u32 %v3518, 7
        %v3520 = vsub.s32 0, %v3519
        %v3521 = vrot.slane %v3516, %v3520
        %3523 = vmatprep.subr.mxu0 0.0
        %3524 = vmatpush1.msra.mxu0 %v3515
        %3525 = vmatprep.subr.mxu0 0.0
        %3526 = vmatpush1.msra.mxu0 %v3514
        %3527 = vmatprep.subr.mxu0 0.0
        %3528 = vmatpush1.msra.mxu0 %v3513
        %3529 = vmatprep.subr.mxu0 0.0
        %3530 = vmatpush1.msra.mxu0 %v3512
        %3531 = vmatprep.subr.mxu0 0.0
        %3532 = vmatpush1.msra.mxu0 %v3511
        %3533 = vmatprep.subr.mxu0 0.0
        %3534 = vmatpush1.msra.mxu0 %v3510
        %3535 = vmatprep.subr.mxu0 0.0
        %3536 = vmatpush1.msra.mxu0 %v3509
        %3537 = vmatprep.subr.mxu0 0.0
        %3538 = vmatpush1.msra.mxu0 %v3508
        %3539 = vmatprep.subr.mxu0 0.0
        %3540 = vmatpush1.msra.mxu0 %v3507
        %3541 = vmatprep.subr.mxu0 0.0
        %3542 = vmatpush1.msra.mxu0 %v3506
        %3543 = vmatprep.subr.mxu0 0.0
        %3544 = vmatpush1.msra.mxu0 %v3505
        %3545 = vmatprep.subr.mxu0 0.0
        %3546 = vmatpush1.msra.mxu0 %v3504
        %3547 = vmatprep.subr.mxu0 0.0
        %3548 = vmatpush1.msra.mxu0 %v3503
        %3549 = vmatprep.subr.mxu0 0.0
        %3550 = vmatpush1.msra.mxu0 %v3502
        %3551 = vmatprep.subr.mxu0 0.0
        %3552 = vmatpush1.msra.mxu0 %v3501
        %3553 = vmatprep.subr.mxu0 0.0
        %3554 = vmatpush1.msra.mxu0 %v3500
        %3555 = vmatprep.subr.mxu0 0.0
        %3556 = vmatpush2.msra.mxu0 0.0
        %3557 = vmatprep.subr.mxu0 0.0
        %3558 = vmatpush2.msra.mxu0 0.0
        %3559 = vmatprep.subr.mxu0 0.0
        %3560 = vmatpush2.msra.mxu0 0.0
        %3561 = vmatprep.subr.mxu0 0.0
        %3562 = vmatpush2.msra.mxu0 0.0
        %3563 = vmatprep.subr.mxu0 0.0
        %3564 = vmatpush2.msra.mxu0 0.0
        %3565 = vmatprep.subr.mxu0 0.0
        %3566 = vmatpush2.msra.mxu0 0.0
        %3567 = vmatprep.subr.mxu0 0.0
        %3568 = vmatpush2.msra.mxu0 0.0
        %3569 = vmatprep.subr.mxu0 0.0
        %3570 = vmatpush2.msra.mxu0 0.0
        %3571 = vmatprep.subr.mxu0 0.0
        %3572 = vmatpush2.msra.mxu0 0.0
        %3573 = vmatprep.subr.mxu0 0.0
        %3574 = vmatpush2.msra.mxu0 0.0
        %3575 = vmatprep.subr.mxu0 0.0
        %3576 = vmatpush2.msra.mxu0 0.0
        %3577 = vmatprep.subr.mxu0 0.0
        %3578 = vmatpush2.msra.mxu0 0.0
        %3579 = vmatprep.subr.mxu0 0.0
        %3580 = vmatpush2.msra.mxu0 0.0
        %3581 = vmatprep.subr.mxu0 0.0
        %3582 = vmatpush2.msra.mxu0 0.0
        %3583 = vmatprep.subr.mxu0 0.0
        %3584 = vmatpush2.msra.mxu0 0.0
        %3585 = vmatprep.subr.mxu0 0.0
        %3586 = vmatpush2.msra.mxu0 0.0
        %3587 = vmatprep.mubr.f32.mxu0 0.0
        %3588 = vmatmul.mubr.f32.gmra.mxu0 %v3492
        %v3589 = vpop.f32.mrf.mxu0
        %v3590 = vadd.f32 %v3521, %v3589
        %v3591 = vpop.f32.mrf.mxu0
        %3592 = vmatprep.mubr.f32.mxu0 0.0
        %3593 = vmatmul.mubr.f32.gmra.mxu0 %v3493
        %v3594 = vpop.f32.mrf.mxu0
        %v3595 = vadd.f32 %v3521, %v3594
        %v3596 = vpop.f32.mrf.mxu0
        %3597 = vmatprep.mubr.f32.mxu0 0.0
        %3598 = vmatmul.mubr.f32.gmra.mxu0 %v3494
        %v3599 = vpop.f32.mrf.mxu0
        %v3600 = vadd.f32 %v3521, %v3599
        %v3601 = vpop.f32.mrf.mxu0
        %3602 = vmatprep.mubr.f32.mxu0 0.0
        %3603 = vmatmul.mubr.f32.gmra.mxu0 %v3495
        %v3604 = vpop.f32.mrf.mxu0
        %v3605 = vadd.f32 %v3521, %v3604
        %v3606 = vpop.f32.mrf.mxu0
        %3607 = vmatprep.mubr.f32.mxu0 0.0
        %3608 = vmatmul.mubr.f32.gmra.mxu0 %v3496
        %v3609 = vpop.f32.mrf.mxu0
        %v3610 = vadd.f32 %v3521, %v3609
        %v3611 = vpop.f32.mrf.mxu0
        %3612 = vmatprep.mubr.f32.mxu0 0.0
        %3613 = vmatmul.mubr.f32.gmra.mxu0 %v3497
        %v3614 = vpop.f32.mrf.mxu0
        %v3615 = vadd.f32 %v3521, %v3614
        %v3616 = vpop.f32.mrf.mxu0
        %3617 = vmatprep.mubr.f32.mxu0 0.0
        %3618 = vmatmul.mubr.f32.gmra.mxu0 %v3498
        %v3619 = vpop.f32.mrf.mxu0
        %v3620 = vadd.f32 %v3521, %v3619
        %v3621 = vpop.f32.mrf.mxu0
        %3622 = vmatprep.mubr.f32.mxu0 0.0
        %3623 = vmatmul.mubr.f32.gmra.mxu0 %v3499
        %v3624 = vpop.f32.mrf.mxu0
        %v3625 = vadd.f32 %v3521, %v3624
        %v3626 = vpop.f32.mrf.mxu0
        %3627 = vdwg.mxu0
        %v3628 = vmax.f32 %v3590, 0.0
        %v3629 = vmax.f32 %v3595, 0.0
        %v3630 = vmax.f32 %v3600, 0.0
        %v3631 = vmax.f32 %v3605, 0.0
        %v3632 = vmax.f32 %v3610, 0.0
        %v3633 = vmax.f32 %v3615, 0.0
        %v3634 = vmax.f32 %v3620, 0.0
        %v3635 = vmax.f32 %v3625, 0.0
        %v3636 = vld [vmem:[#allocation16] sm:$0xff]
        %v3637 = vld [vmem:[#allocation16 + $0x8] sm:$0xff]
        %v3638 = vld [vmem:[#allocation16 + $0x10] sm:$0xff]
        %v3639 = vld [vmem:[#allocation16 + $0x18] sm:$0xff]
        %v3640 = vld [vmem:[#allocation16 + $0x20] sm:$0xff]
        %v3641 = vld [vmem:[#allocation16 + $0x28] sm:$0xff]
        %v3642 = vld [vmem:[#allocation16 + $0x30] sm:$0xff]
        %v3643 = vld [vmem:[#allocation16 + $0x38] sm:$0xff]
        %v3644 = vld [vmem:[#allocation16 + $0x40] sm:$0xff]
        %v3645 = vld [vmem:[#allocation16 + $0x48] sm:$0xff]
        %v3646 = vld [vmem:[#allocation16 + $0x50] sm:$0xff]
        %v3647 = vld [vmem:[#allocation16 + $0x58] sm:$0xff]
        %v3648 = vld [vmem:[#allocation16 + $0x60] sm:$0xff]
        %v3649 = vld [vmem:[#allocation16 + $0x68] sm:$0xff]
        %v3650 = vld [vmem:[#allocation16 + $0x70] sm:$0xff]
        %v3651 = vld [vmem:[#allocation16 + $0x78] sm:$0xff]
        %s3652 = scalar_lea.vmem [#allocation15], 128
        %v3653 = vld [vmem:[%s3652] sm:$0xff]
        %v3654 = vld [vmem:[%s3652 + $0x8] sm:$0xff]
        %v3655 = vld [vmem:[%s3652 + $0x10] sm:$0xff]
        %v3656 = vld [vmem:[%s3652 + $0x18] sm:$0xff]
        %v3657 = vld [vmem:[%s3652 + $0x20] sm:$0xff]
        %v3658 = vld [vmem:[%s3652 + $0x28] sm:$0xff]
        %v3659 = vld [vmem:[%s3652 + $0x30] sm:$0xff]
        %v3660 = vld [vmem:[%s3652 + $0x38] sm:$0xff]
        %v3661 = vld [vmem:[%s3652 + $0x40] sm:$0xff]
        %v3662 = vld [vmem:[%s3652 + $0x48] sm:$0xff]
        %v3663 = vld [vmem:[%s3652 + $0x50] sm:$0xff]
        %v3664 = vld [vmem:[%s3652 + $0x58] sm:$0xff]
        %v3665 = vld [vmem:[%s3652 + $0x60] sm:$0xff]
        %v3666 = vld [vmem:[%s3652 + $0x68] sm:$0xff]
        %v3667 = vld [vmem:[%s3652 + $0x70] sm:$0xff]
        %v3668 = vld [vmem:[%s3652 + $0x78] sm:$0xff]
        %s3669 = scalar_lea.vmem %s7, 1
        %v3670 = vld [vmem:[%s3669] sm:$0x1]
        %v3672 = vlaneseq
        %v3673 = vshrl.u32 %v3672, 7
        %v3674 = vsub.s32 0, %v3673
        %v3675 = vrot.slane %v3670, %v3674
        %3677 = vmatprep.subr.mxu0 0.0
        %3678 = vmatpush1.msra.mxu0 %v3668
        %3679 = vmatprep.subr.mxu0 0.0
        %3680 = vmatpush1.msra.mxu0 %v3667
        %3681 = vmatprep.subr.mxu0 0.0
        %3682 = vmatpush1.msra.mxu0 %v3666
        %3683 = vmatprep.subr.mxu0 0.0
        %3684 = vmatpush1.msra.mxu0 %v3665
        %3685 = vmatprep.subr.mxu0 0.0
        %3686 = vmatpush1.msra.mxu0 %v3664
        %3687 = vmatprep.subr.mxu0 0.0
        %3688 = vmatpush1.msra.mxu0 %v3663
        %3689 = vmatprep.subr.mxu0 0.0
        %3690 = vmatpush1.msra.mxu0 %v3662
        %3691 = vmatprep.subr.mxu0 0.0
        %3692 = vmatpush1.msra.mxu0 %v3661
        %3693 = vmatprep.subr.mxu0 0.0
        %3694 = vmatpush1.msra.mxu0 %v3660
        %3695 = vmatprep.subr.mxu0 0.0
        %3696 = vmatpush1.msra.mxu0 %v3659
        %3697 = vmatprep.subr.mxu0 0.0
        %3698 = vmatpush1.msra.mxu0 %v3658
        %3699 = vmatprep.subr.mxu0 0.0
        %3700 = vmatpush1.msra.mxu0 %v3657
        %3701 = vmatprep.subr.mxu0 0.0
        %3702 = vmatpush1.msra.mxu0 %v3656
        %3703 = vmatprep.subr.mxu0 0.0
        %3704 = vmatpush1.msra.mxu0 %v3655
        %3705 = vmatprep.subr.mxu0 0.0
        %3706 = vmatpush1.msra.mxu0 %v3654
        %3707 = vmatprep.subr.mxu0 0.0
        %3708 = vmatpush1.msra.mxu0 %v3653
        %3709 = vmatprep.subr.mxu0 0.0
        %3710 = vmatpush2.msra.mxu0 0.0
        %3711 = vmatprep.subr.mxu0 0.0
        %3712 = vmatpush2.msra.mxu0 0.0
        %3713 = vmatprep.subr.mxu0 0.0
        %3714 = vmatpush2.msra.mxu0 0.0
        %3715 = vmatprep.subr.mxu0 0.0
        %3716 = vmatpush2.msra.mxu0 0.0
        %3717 = vmatprep.subr.mxu0 0.0
        %3718 = vmatpush2.msra.mxu0 0.0
        %3719 = vmatprep.subr.mxu0 0.0
        %3720 = vmatpush2.msra.mxu0 0.0
        %3721 = vmatprep.subr.mxu0 0.0
        %3722 = vmatpush2.msra.mxu0 0.0
        %3723 = vmatprep.subr.mxu0 0.0
        %3724 = vmatpush2.msra.mxu0 0.0
        %3725 = vmatprep.subr.mxu0 0.0
        %3726 = vmatpush2.msra.mxu0 0.0
        %3727 = vmatprep.subr.mxu0 0.0
        %3728 = vmatpush2.msra.mxu0 0.0
        %3729 = vmatprep.subr.mxu0 0.0
        %3730 = vmatpush2.msra.mxu0 0.0
        %3731 = vmatprep.subr.mxu0 0.0
        %3732 = vmatpush2.msra.mxu0 0.0
        %3733 = vmatprep.subr.mxu0 0.0
        %3734 = vmatpush2.msra.mxu0 0.0
        %3735 = vmatprep.subr.mxu0 0.0
        %3736 = vmatpush2.msra.mxu0 0.0
        %3737 = vmatprep.subr.mxu0 0.0
        %3738 = vmatpush2.msra.mxu0 0.0
        %3739 = vmatprep.subr.mxu0 0.0
        %3740 = vmatpush2.msra.mxu0 0.0
        %3741 = vmatprep.mubr.f32.mxu0 0.0
        %3742 = vmatmul.mubr.f32.gmra.mxu0 %v3492
        %v3743 = vpop.f32.mrf.mxu0
        %v3744 = vadd.f32 %v3675, %v3743
        %v3745 = vpop.f32.mrf.mxu0
        %3746 = vmatprep.mubr.f32.mxu0 0.0
        %3747 = vmatmul.mubr.f32.gmra.mxu0 %v3493
        %v3748 = vpop.f32.mrf.mxu0
        %v3749 = vadd.f32 %v3675, %v3748
        %v3750 = vpop.f32.mrf.mxu0
        %3751 = vmatprep.mubr.f32.mxu0 0.0
        %3752 = vmatmul.mubr.f32.gmra.mxu0 %v3494
        %v3753 = vpop.f32.mrf.mxu0
        %v3754 = vadd.f32 %v3675, %v3753
        %v3755 = vpop.f32.mrf.mxu0
        %3756 = vmatprep.mubr.f32.mxu0 0.0
        %3757 = vmatmul.mubr.f32.gmra.mxu0 %v3495
        %v3758 = vpop.f32.mrf.mxu0
        %v3759 = vadd.f32 %v3675, %v3758
        %v3760 = vpop.f32.mrf.mxu0
        %3761 = vmatprep.mubr.f32.mxu0 0.0
        %3762 = vmatmul.mubr.f32.gmra.mxu0 %v3496
        %v3763 = vpop.f32.mrf.mxu0
        %v3764 = vadd.f32 %v3675, %v3763
        %v3765 = vpop.f32.mrf.mxu0
        %3766 = vmatprep.mubr.f32.mxu0 0.0
        %3767 = vmatmul.mubr.f32.gmra.mxu0 %v3497
        %v3768 = vpop.f32.mrf.mxu0
        %v3769 = vadd.f32 %v3675, %v3768
        %v3770 = vpop.f32.mrf.mxu0
        %3771 = vmatprep.mubr.f32.mxu0 0.0
        %3772 = vmatmul.mubr.f32.gmra.mxu0 %v3498
        %v3773 = vpop.f32.mrf.mxu0
        %v3774 = vadd.f32 %v3675, %v3773
        %v3775 = vpop.f32.mrf.mxu0
        %3776 = vmatprep.mubr.f32.mxu0 0.0
        %3777 = vmatmul.mubr.f32.gmra.mxu0 %v3499
        %v3778 = vpop.f32.mrf.mxu0
        %v3779 = vadd.f32 %v3675, %v3778
        %v3780 = vpop.f32.mrf.mxu0
        %3781 = vdwg.mxu0
        %v3782 = vmax.f32 %v3744, 0.0
        %v3783 = vmax.f32 %v3749, 0.0
        %v3784 = vmax.f32 %v3754, 0.0
        %v3785 = vmax.f32 %v3759, 0.0
        %v3786 = vmax.f32 %v3764, 0.0
        %v3787 = vmax.f32 %v3769, 0.0
        %v3788 = vmax.f32 %v3774, 0.0
        %v3789 = vmax.f32 %v3779, 0.0
        %s3790 = scalar_lea.vmem [#allocation16], 128
        %v3791 = vld [vmem:[%s3790] sm:$0xff]
        %v3792 = vld [vmem:[%s3790 + $0x8] sm:$0xff]
        %v3793 = vld [vmem:[%s3790 + $0x10] sm:$0xff]
        %v3794 = vld [vmem:[%s3790 + $0x18] sm:$0xff]
        %v3795 = vld [vmem:[%s3790 + $0x20] sm:$0xff]
        %v3796 = vld [vmem:[%s3790 + $0x28] sm:$0xff]
        %v3797 = vld [vmem:[%s3790 + $0x30] sm:$0xff]
        %v3798 = vld [vmem:[%s3790 + $0x38] sm:$0xff]
        %v3799 = vld [vmem:[%s3790 + $0x40] sm:$0xff]
        %v3800 = vld [vmem:[%s3790 + $0x48] sm:$0xff]
        %v3801 = vld [vmem:[%s3790 + $0x50] sm:$0xff]
        %v3802 = vld [vmem:[%s3790 + $0x58] sm:$0xff]
        %v3803 = vld [vmem:[%s3790 + $0x60] sm:$0xff]
        %v3804 = vld [vmem:[%s3790 + $0x68] sm:$0xff]
        %v3805 = vld [vmem:[%s3790 + $0x70] sm:$0xff]
        %v3806 = vld [vmem:[%s3790 + $0x78] sm:$0xff]
        %3807 = vmatprep.subr.mxu0 0.0
        %3808 = vmatpush1.msra.mxu0 %v3806
        %3809 = vmatprep.subr.mxu0 0.0
        %3810 = vmatpush1.msra.mxu0 %v3805
        %3811 = vmatprep.subr.mxu0 0.0
        %3812 = vmatpush1.msra.mxu0 %v3804
        %3813 = vmatprep.subr.mxu0 0.0
        %3814 = vmatpush1.msra.mxu0 %v3803
        %3815 = vmatprep.subr.mxu0 0.0
        %3816 = vmatpush1.msra.mxu0 %v3802
        %3817 = vmatprep.subr.mxu0 0.0
        %3818 = vmatpush1.msra.mxu0 %v3801
        %3819 = vmatprep.subr.mxu0 0.0
        %3820 = vmatpush1.msra.mxu0 %v3800
        %3821 = vmatprep.subr.mxu0 0.0
        %3822 = vmatpush1.msra.mxu0 %v3799
        %3823 = vmatprep.subr.mxu0 0.0
        %3824 = vmatpush1.msra.mxu0 %v3798
        %3825 = vmatprep.subr.mxu0 0.0
        %3826 = vmatpush1.msra.mxu0 %v3797
        %3827 = vmatprep.subr.mxu0 0.0
        %3828 = vmatpush1.msra.mxu0 %v3796
        %3829 = vmatprep.subr.mxu0 0.0
        %3830 = vmatpush1.msra.mxu0 %v3795
        %3831 = vmatprep.subr.mxu0 0.0
        %3832 = vmatpush1.msra.mxu0 %v3794
        %3833 = vmatprep.subr.mxu0 0.0
        %3834 = vmatpush1.msra.mxu0 %v3793
        %3835 = vmatprep.subr.mxu0 0.0
        %3836 = vmatpush1.msra.mxu0 %v3792
        %3837 = vmatprep.subr.mxu0 0.0
        %3838 = vmatpush1.msra.mxu0 %v3791
        %3839 = vmatprep.subr.mxu0 0.0
        %3840 = vmatpush2.msra.mxu0 0.0
        %3841 = vmatprep.subr.mxu0 0.0
        %3842 = vmatpush2.msra.mxu0 0.0
        %3843 = vmatprep.subr.mxu0 0.0
        %3844 = vmatpush2.msra.mxu0 0.0
        %3845 = vmatprep.subr.mxu0 0.0
        %3846 = vmatpush2.msra.mxu0 0.0
        %3847 = vmatprep.subr.mxu0 0.0
        %3848 = vmatpush2.msra.mxu0 0.0
        %3849 = vmatprep.subr.mxu0 0.0
        %3850 = vmatpush2.msra.mxu0 0.0
        %3851 = vmatprep.subr.mxu0 0.0
        %3852 = vmatpush2.msra.mxu0 0.0
        %3853 = vmatprep.subr.mxu0 0.0
        %3854 = vmatpush2.msra.mxu0 0.0
        %3855 = vmatprep.subr.mxu0 0.0
        %3856 = vmatpush2.msra.mxu0 0.0
        %3857 = vmatprep.subr.mxu0 0.0
        %3858 = vmatpush2.msra.mxu0 0.0
        %3859 = vmatprep.subr.mxu0 0.0
        %3860 = vmatpush2.msra.mxu0 0.0
        %3861 = vmatprep.subr.mxu0 0.0
        %3862 = vmatpush2.msra.mxu0 0.0
        %3863 = vmatprep.subr.mxu0 0.0
        %3864 = vmatpush2.msra.mxu0 0.0
        %3865 = vmatprep.subr.mxu0 0.0
        %3866 = vmatpush2.msra.mxu0 0.0
        %3867 = vmatprep.subr.mxu0 0.0
        %3868 = vmatpush2.msra.mxu0 0.0
        %3869 = vmatprep.subr.mxu0 0.0
        %3870 = vmatpush2.msra.mxu0 0.0
        %3871 = vmatprep.mubr.f32.mxu0 0.0
        %3872 = vmatmul.mubr.f32.gmra.mxu0 %v3782
        %v3873 = vpop.f32.mrf.mxu0
        %v3874 = vadd.f32 0.0, %v3873
        %v3875 = vpop.f32.mrf.mxu0
        %3876 = vmatprep.mubr.f32.mxu0 0.0
        %3877 = vmatmul.mubr.f32.gmra.mxu0 %v3783
        %v3878 = vpop.f32.mrf.mxu0
        %v3879 = vadd.f32 0.0, %v3878
        %v3880 = vpop.f32.mrf.mxu0
        %3881 = vmatprep.mubr.f32.mxu0 0.0
        %3882 = vmatmul.mubr.f32.gmra.mxu0 %v3784
        %v3883 = vpop.f32.mrf.mxu0
        %v3884 = vadd.f32 0.0, %v3883
        %v3885 = vpop.f32.mrf.mxu0
        %3886 = vmatprep.mubr.f32.mxu0 0.0
        %3887 = vmatmul.mubr.f32.gmra.mxu0 %v3785
        %v3888 = vpop.f32.mrf.mxu0
        %v3889 = vadd.f32 0.0, %v3888
        %v3890 = vpop.f32.mrf.mxu0
        %3891 = vmatprep.mubr.f32.mxu0 0.0
        %3892 = vmatmul.mubr.f32.gmra.mxu0 %v3786
        %v3893 = vpop.f32.mrf.mxu0
        %v3894 = vadd.f32 0.0, %v3893
        %v3895 = vpop.f32.mrf.mxu0
        %3896 = vmatprep.mubr.f32.mxu0 0.0
        %3897 = vmatmul.mubr.f32.gmra.mxu0 %v3787
        %v3898 = vpop.f32.mrf.mxu0
        %v3899 = vadd.f32 0.0, %v3898
        %v3900 = vpop.f32.mrf.mxu0
        %3901 = vmatprep.mubr.f32.mxu0 0.0
        %3902 = vmatmul.mubr.f32.gmra.mxu0 %v3788
        %v3903 = vpop.f32.mrf.mxu0
        %v3904 = vadd.f32 0.0, %v3903
        %v3905 = vpop.f32.mrf.mxu0
        %3906 = vmatprep.mubr.f32.mxu0 0.0
        %3907 = vmatmul.mubr.f32.gmra.mxu0 %v3789
        %v3908 = vpop.f32.mrf.mxu0
        %v3909 = vadd.f32 0.0, %v3908
        %v3910 = vpop.f32.mrf.mxu0
        %3911 = vdwg.mxu0
        %3912 = vmatprep.subr.mxu0 0.0
        %3913 = vmatpush1.msra.mxu0 %v3651
        %3914 = vmatprep.subr.mxu0 0.0
        %3915 = vmatpush1.msra.mxu0 %v3650
        %3916 = vmatprep.subr.mxu0 0.0
        %3917 = vmatpush1.msra.mxu0 %v3649
        %3918 = vmatprep.subr.mxu0 0.0
        %3919 = vmatpush1.msra.mxu0 %v3648
        %3920 = vmatprep.subr.mxu0 0.0
        %3921 = vmatpush1.msra.mxu0 %v3647
        %3922 = vmatprep.subr.mxu0 0.0
        %3923 = vmatpush1.msra.mxu0 %v3646
        %3924 = vmatprep.subr.mxu0 0.0
        %3925 = vmatpush1.msra.mxu0 %v3645
        %3926 = vmatprep.subr.mxu0 0.0
        %3927 = vmatpush1.msra.mxu0 %v3644
        %3928 = vmatprep.subr.mxu0 0.0
        %3929 = vmatpush1.msra.mxu0 %v3643
        %3930 = vmatprep.subr.mxu0 0.0
        %3931 = vmatpush1.msra.mxu0 %v3642
        %3932 = vmatprep.subr.mxu0 0.0
        %3933 = vmatpush1.msra.mxu0 %v3641
        %3934 = vmatprep.subr.mxu0 0.0
        %3935 = vmatpush1.msra.mxu0 %v3640
        %3936 = vmatprep.subr.mxu0 0.0
        %3937 = vmatpush1.msra.mxu0 %v3639
        %3938 = vmatprep.subr.mxu0 0.0
        %3939 = vmatpush1.msra.mxu0 %v3638
        %3940 = vmatprep.subr.mxu0 0.0
        %3941 = vmatpush1.msra.mxu0 %v3637
        %3942 = vmatprep.subr.mxu0 0.0
        %3943 = vmatpush1.msra.mxu0 %v3636
        %3944 = vmatprep.subr.mxu0 0.0
        %3945 = vmatpush2.msra.mxu0 0.0
        %3946 = vmatprep.subr.mxu0 0.0
        %3947 = vmatpush2.msra.mxu0 0.0
        %3948 = vmatprep.subr.mxu0 0.0
        %3949 = vmatpush2.msra.mxu0 0.0
        %3950 = vmatprep.subr.mxu0 0.0
        %3951 = vmatpush2.msra.mxu0 0.0
        %3952 = vmatprep.subr.mxu0 0.0
        %3953 = vmatpush2.msra.mxu0 0.0
        %3954 = vmatprep.subr.mxu0 0.0
        %3955 = vmatpush2.msra.mxu0 0.0
        %3956 = vmatprep.subr.mxu0 0.0
        %3957 = vmatpush2.msra.mxu0 0.0
        %3958 = vmatprep.subr.mxu0 0.0
        %3959 = vmatpush2.msra.mxu0 0.0
        %3960 = vmatprep.subr.mxu0 0.0
        %3961 = vmatpush2.msra.mxu0 0.0
        %3962 = vmatprep.subr.mxu0 0.0
        %3963 = vmatpush2.msra.mxu0 0.0
        %3964 = vmatprep.subr.mxu0 0.0
        %3965 = vmatpush2.msra.mxu0 0.0
        %3966 = vmatprep.subr.mxu0 0.0
        %3967 = vmatpush2.msra.mxu0 0.0
        %3968 = vmatprep.subr.mxu0 0.0
        %3969 = vmatpush2.msra.mxu0 0.0
        %3970 = vmatprep.subr.mxu0 0.0
        %3971 = vmatpush2.msra.mxu0 0.0
        %3972 = vmatprep.subr.mxu0 0.0
        %3973 = vmatpush2.msra.mxu0 0.0
        %3974 = vmatprep.subr.mxu0 0.0
        %3975 = vmatpush2.msra.mxu0 0.0
        %3976 = vmatprep.mubr.f32.mxu0 0.0
        %3977 = vmatmul.mubr.f32.gmra.mxu0 %v3628
        %v3978 = vpop.f32.mrf.mxu0
        %v3979 = vadd.f32 %v3874, %v3978
        %v3980 = vpop.f32.mrf.mxu0
        %3981 = vmatprep.mubr.f32.mxu0 0.0
        %3982 = vmatmul.mubr.f32.gmra.mxu0 %v3629
        %v3983 = vpop.f32.mrf.mxu0
        %v3984 = vadd.f32 %v3879, %v3983
        %v3985 = vpop.f32.mrf.mxu0
        %3986 = vmatprep.mubr.f32.mxu0 0.0
        %3987 = vmatmul.mubr.f32.gmra.mxu0 %v3630
        %v3988 = vpop.f32.mrf.mxu0
        %v3989 = vadd.f32 %v3884, %v3988
        %v3990 = vpop.f32.mrf.mxu0
        %3991 = vmatprep.mubr.f32.mxu0 0.0
        %3992 = vmatmul.mubr.f32.gmra.mxu0 %v3631
        %v3993 = vpop.f32.mrf.mxu0
        %v3994 = vadd.f32 %v3889, %v3993
        %v3995 = vpop.f32.mrf.mxu0
        %3996 = vmatprep.mubr.f32.mxu0 0.0
        %3997 = vmatmul.mubr.f32.gmra.mxu0 %v3632
        %v3998 = vpop.f32.mrf.mxu0
        %v3999 = vadd.f32 %v3894, %v3998
        %v4000 = vpop.f32.mrf.mxu0
        %4001 = vmatprep.mubr.f32.mxu0 0.0
        %4002 = vmatmul.mubr.f32.gmra.mxu0 %v3633
        %v4003 = vpop.f32.mrf.mxu0
        %v4004 = vadd.f32 %v3899, %v4003
        %v4005 = vpop.f32.mrf.mxu0
        %4006 = vmatprep.mubr.f32.mxu0 0.0
        %4007 = vmatmul.mubr.f32.gmra.mxu0 %v3634
        %v4008 = vpop.f32.mrf.mxu0
        %v4009 = vadd.f32 %v3904, %v4008
        %v4010 = vpop.f32.mrf.mxu0
        %4011 = vmatprep.mubr.f32.mxu0 0.0
        %4012 = vmatmul.mubr.f32.gmra.mxu0 %v3635
        %v4013 = vpop.f32.mrf.mxu0
        %v4014 = vadd.f32 %v3909, %v4013
        %v4015 = vpop.f32.mrf.mxu0
        %4016 = vdwg.mxu0
        %v4017 = vld [vmem:[%s9] sm:$0x1]
        %v4019 = vlaneseq
        %v4020 = vshrl.u32 %v4019, 7
        %v4021 = vsub.s32 0, %v4020
        %v4022 = vrot.slane %v4017, %v4021
        %v4024 = vadd.f32 %v3979, %v4022
        %v4025 = vadd.f32 %v3984, %v4022
        %v4026 = vadd.f32 %v3989, %v4022
        %v4027 = vadd.f32 %v3994, %v4022
        %v4028 = vadd.f32 %v3999, %v4022
        %v4029 = vadd.f32 %v4004, %v4022
        %v4030 = vadd.f32 %v4009, %v4022
        %v4031 = vadd.f32 %v4014, %v4022
        %v4032 = vadd.f32 %v3492, %v4024
        %v4033 = vadd.f32 %v3493, %v4025
        %v4034 = vadd.f32 %v3494, %v4026
        %v4035 = vadd.f32 %v3495, %v4027
        %v4036 = vadd.f32 %v3496, %v4028
        %v4037 = vadd.f32 %v3497, %v4029
        %v4038 = vadd.f32 %v3498, %v4030
        %v4039 = vadd.f32 %v3499, %v4031
        %4040 = vadd.xlane.f32.xlu0 %v4032
        %v4041 = vpop.xlane.xlu0 %4040
        %4042 = vadd.xlane.f32.xlu0 %v4033
        %v4043 = vpop.xlane.xlu0 %4042
        %4044 = vadd.xlane.f32.xlu0 %v4034
        %v4045 = vpop.xlane.xlu0 %4044
        %4046 = vadd.xlane.f32.xlu0 %v4035
        %v4047 = vpop.xlane.xlu0 %4046
        %4048 = vadd.xlane.f32.xlu0 %v4036
        %v4049 = vpop.xlane.xlu0 %4048
        %4050 = vadd.xlane.f32.xlu0 %v4037
        %v4051 = vpop.xlane.xlu0 %4050
        %4052 = vadd.xlane.f32.xlu0 %v4038
        %v4053 = vpop.xlane.xlu0 %4052
        %4054 = vadd.xlane.f32.xlu0 %v4039
        %v4055 = vpop.xlane.xlu0 %4054
        %v4056 = vmul.f32 %v4041, %v3397
        %v4057 = vmul.f32 %v4043, %v3397
        %v4058 = vmul.f32 %v4045, %v3397
        %v4059 = vmul.f32 %v4047, %v3397
        %v4060 = vmul.f32 %v4049, %v3397
        %v4061 = vmul.f32 %v4051, %v3397
        %v4062 = vmul.f32 %v4053, %v3397
        %v4063 = vmul.f32 %v4055, %v3397
        %v4064 = vsub.f32 %v4032, %v4056
        %v4065 = vsub.f32 %v4033, %v4057
        %v4066 = vsub.f32 %v4034, %v4058
        %v4067 = vsub.f32 %v4035, %v4059
        %v4068 = vsub.f32 %v4036, %v4060
        %v4069 = vsub.f32 %v4037, %v4061
        %v4070 = vsub.f32 %v4038, %v4062
        %v4071 = vsub.f32 %v4039, %v4063
        %v4072 = vmul.f32 %v4064, %v4064
        %v4073 = vmul.f32 %v4065, %v4065
        %v4074 = vmul.f32 %v4066, %v4066
        %v4075 = vmul.f32 %v4067, %v4067
        %v4076 = vmul.f32 %v4068, %v4068
        %v4077 = vmul.f32 %v4069, %v4069
        %v4078 = vmul.f32 %v4070, %v4070
        %v4079 = vmul.f32 %v4071, %v4071
        %4080 = vadd.xlane.f32.xlu0 %v4072
        %v4081 = vpop.xlane.xlu0 %4080
        %4082 = vadd.xlane.f32.xlu0 %v4073
        %v4083 = vpop.xlane.xlu0 %4082
        %4084 = vadd.xlane.f32.xlu0 %v4074
        %v4085 = vpop.xlane.xlu0 %4084
        %4086 = vadd.xlane.f32.xlu0 %v4075
        %v4087 = vpop.xlane.xlu0 %4086
        %4088 = vadd.xlane.f32.xlu0 %v4076
        %v4089 = vpop.xlane.xlu0 %4088
        %4090 = vadd.xlane.f32.xlu0 %v4077
        %v4091 = vpop.xlane.xlu0 %4090
        %4092 = vadd.xlane.f32.xlu0 %v4078
        %v4093 = vpop.xlane.xlu0 %4092
        %4094 = vadd.xlane.f32.xlu0 %v4079
        %v4095 = vpop.xlane.xlu0 %4094
        %v4096 = vmul.f32 %v4081, %v3397
        %v4097 = vmul.f32 %v4083, %v3397
        %v4098 = vmul.f32 %v4085, %v3397
        %v4099 = vmul.f32 %v4087, %v3397
        %v4100 = vmul.f32 %v4089, %v3397
        %v4101 = vmul.f32 %v4091, %v3397
        %v4102 = vmul.f32 %v4093, %v3397
        %v4103 = vmul.f32 %v4095, %v3397
        %v4104 = vadd.f32 %v4096, 1e-05
        %v4105 = vadd.f32 %v4097, 1e-05
        %v4106 = vadd.f32 %v4098, 1e-05
        %v4107 = vadd.f32 %v4099, 1e-05
        %v4108 = vadd.f32 %v4100, 1e-05
        %v4109 = vadd.f32 %v4101, 1e-05
        %v4110 = vadd.f32 %v4102, 1e-05
        %v4111 = vadd.f32 %v4103, 1e-05
        %v4112 = vrsqrt.pop %v4104
        %v4113 = vrsqrt.pop %v4105
        %v4114 = vrsqrt.pop %v4106
        %v4115 = vrsqrt.pop %v4107
        %v4116 = vrsqrt.pop %v4108
        %v4117 = vrsqrt.pop %v4109
        %v4118 = vrsqrt.pop %v4110
        %v4119 = vrsqrt.pop %v4111
        %v4120 = vmul.f32 %v4064, %v4112
        %v4121 = vmul.f32 %v4065, %v4113
        %v4122 = vmul.f32 %v4066, %v4114
        %v4123 = vmul.f32 %v4067, %v4115
        %v4124 = vmul.f32 %v4068, %v4116
        %v4125 = vmul.f32 %v4069, %v4117
        %v4126 = vmul.f32 %v4070, %v4118
        %v4127 = vmul.f32 %v4071, %v4119
        %v4128 = vld [vmem:[%s12] sm:$0x1]
        %v4130 = vlaneseq
        %v4131 = vshrl.u32 %v4130, 7
        %v4132 = vsub.s32 0, %v4131
        %v4133 = vrot.slane %v4128, %v4132
        %v4135 = vmul.f32 %v4120, %v4133
        %v4136 = vmul.f32 %v4121, %v4133
        %v4137 = vmul.f32 %v4122, %v4133
        %v4138 = vmul.f32 %v4123, %v4133
        %v4139 = vmul.f32 %v4124, %v4133
        %v4140 = vmul.f32 %v4125, %v4133
        %v4141 = vmul.f32 %v4126, %v4133
        %v4142 = vmul.f32 %v4127, %v4133
        %v4143 = vld [vmem:[%s13] sm:$0x1]
        %v4145 = vlaneseq
        %v4146 = vshrl.u32 %v4145, 7
        %v4147 = vsub.s32 0, %v4146
        %v4148 = vrot.slane %v4143, %v4147
        %v4150 = vadd.f32 %v4135, %v4148
        %v4151 = vadd.f32 %v4136, %v4148
        %v4152 = vadd.f32 %v4137, %v4148
        %v4153 = vadd.f32 %v4138, %v4148
        %v4154 = vadd.f32 %v4139, %v4148
        %v4155 = vadd.f32 %v4140, %v4148
        %v4156 = vadd.f32 %v4141, %v4148
        %v4157 = vadd.f32 %v4142, %v4148
        %4158 = vst [vmem:[%s620] sm:$0xff] %v4150
        %4159 = vst [vmem:[%s620 + $0x8] sm:$0xff] %v4151
        %4160 = vst [vmem:[%s620 + $0x10] sm:$0xff] %v4152
        %4161 = vst [vmem:[%s620 + $0x18] sm:$0xff] %v4153
        %4162 = vst [vmem:[%s620 + $0x20] sm:$0xff] %v4154
        %4163 = vst [vmem:[%s620 + $0x28] sm:$0xff] %v4155
        %4164 = vst [vmem:[%s620 + $0x30] sm:$0xff] %v4156
        %4165 = vst [vmem:[%s620 + $0x38] sm:$0xff] %v4157
        %s4166 = sand.u32 %s363, 1
        %s4167 = scalar_lea.sflag [#allocation6], %s4166
        %s4168 = sand.u32 %s363, 1
        %s4169 = smul.addr %s4168, 64
        %s4170 = scalar_lea.vmem [#allocation18], %s4169
        // Predicated region
        $region113: #{tpu_custom_call.1} parent=75 // pred_check
          %p4171 = pneg %p373
        $region114: #{tpu_custom_call.1} parent=75 // pred_check_branch
          %4173 = sbr.rel (%p4171) target = $region116
        $region115: #{tpu_custom_call.1} parent=75 // pred_region
          %s4174 = smul.u32 8, %s42
          %s4176 = ssub.s32 1024, 1024
          %4177 = vsyncadd %s4167, %s4176
          %s4178 = smul.addr %s41, 16
          %s4179 = sadd.s32 %s4174, %s4178
          %s4180 = smul.addr %s4179, 128
          %s4181 = scalar_lea.hbm %s14, %s4180
          %s4182 = sshll.u32 %s4170, 4
          %s4183 = int_to_ptr.vmem [resolvable:$true] %s4182
          %4188 = dma.vmem_to_hbm [thread:$0]  %s4183, 1024, %s4181, %s4167, 128, 128, 8
        $region116: #{tpu_custom_call.1} parent=75 // pred_fallthru
          _
      $region76: #{tpu_custom_call.1} parent=5 // pred_fallthru
        _
      %p4189 = scmp.le.s32.totalorder 2, %s32
      // Predicated region
      $region117: #{tpu_custom_call.1} parent=5 // pred_check
        %p4190 = pneg %p4189
      $region118: #{tpu_custom_call.1} parent=5 // pred_check_branch
        %4192 = sbr.rel (%p4190) target = $region120
      $region119: #{tpu_custom_call.1} parent=5 // pred_region
        %s4193 = ssub.s32 %s32, 2
        // Predicated region
        $region121: #{tpu_custom_call.1} parent=119 // pred_check
          %p4194 = pneg %p379
        $region122: #{tpu_custom_call.1} parent=119 // pred_check_branch
          %4196 = sbr.rel (%p4194) target = $region124
        $region123: #{tpu_custom_call.1} parent=119 // pred_region
          %s4197 = sand.u32 %s364, 1
          %s4198 = scalar_lea.sflag [#allocation6], %s4197
          %s4199 = sand.u32 %s364, 1
          %s4200 = smul.addr %s4199, 64
          %s4201 = scalar_lea.vmem [#allocation18], %s4200
          %4202 = dma.done %s4198, 1024
        $region124: #{tpu_custom_call.1} parent=119 // pred_fallthru
          _
      $region120: #{tpu_custom_call.1} parent=5 // pred_fallthru
        _
    $region6: #{tpu_custom_call.1} parent=1 // loop_footer
      %s36 = sadd.s32 1, %s32
    $region7: #{tpu_custom_call.1} parent=1 // loop_footer_branch
      %31 = sbr.rel target = $region3
    $region8: #{tpu_custom_call.1} parent=1 // loop_exit
      _
    %4203 = vsyncpa [#allocation5], 1
    %s4204 = scalar_lea.sflag [#allocation5], 1
    %4205 = vsyncpa %s4204, 1
    %4206 = vsyncpa [#allocation8], 1
    %s4207 = scalar_lea.sflag [#allocation8], 1
    %4208 = vsyncpa %s4207, 1
    %4209 = vsyncpa [#allocation11], 1
    %4210 = vsyncpa [#allocation14], 1
    %4211 = vsyncpa [#allocation17], 1
    %4212 = vsyncpa [#allocation6], 1
    %s4213 = scalar_lea.sflag [#allocation6], 1
    %4214 = vsyncpa %s4213, 1

</llo_original>
